<compile_context>
chip_gen: v6e
topology: v6e:2x2x1
jax: 0.10.0
libtpu: 0.0.40
codegen_flags: <defaults>
</compile_context>

<pallas_src>
import functools

import jax
import jax.numpy as jnp
from jax.experimental import pallas as pl
from jax.experimental.pallas import tpu as pltpu


# ------------------------------ fused kernel -------------------------------

def _clip_fused_kernel(patch_ref, w_patch_ref, pos_ref,
                       ln_pre_g_ref, ln_pre_b_ref,
                       ln1_g_ref, ln1_b_ref, w_qkv_ref, b_qkv_ref,
                       w_out_ref, b_out_ref, ln2_g_ref, ln2_b_ref,
                       w_fc_ref, b_fc_ref, w_proj2_ref, b_proj2_ref,
                       ln_post_g_ref, ln_post_b_ref,
                       w_vproj_ref, w_pred_ref, b_pred_ref,
                       out_ref, *, layers, heads, eps):
    T, width = pos_ref.shape
    dh = width // heads
    scale = dh ** -0.5

    def ln(x, g, b):
        # f32 statistics
        mu = jnp.mean(x, axis=-1, keepdims=True)
        var = jnp.mean(jnp.square(x - mu), axis=-1, keepdims=True)
        y = (x - mu) * jax.lax.rsqrt(var + eps)
        return y * g.astype(jnp.float32) + b.astype(jnp.float32)

    def mm(x, w, b=None):
        # bf16 MXU inputs, f32 accumulation
        acc = jnp.dot(x.astype(w.dtype), w, preferred_element_type=jnp.float32)
        if b is not None:
            acc = acc + b.astype(jnp.float32)
        return acc

    # --- patch embedding (row 0 of patches is zero -> CLS slot) + cls/pos add ---
    patches = patch_ref[0]                                        # (T, C*p*p)
    h = mm(patches, w_patch_ref[...]) + pos_ref[...].astype(jnp.float32)

    # --- ln_pre ---
    h = ln(h, ln_pre_g_ref[...], ln_pre_b_ref[...])

    # --- transformer blocks (pre-LN) ---
    for l in range(layers):
        # multi-head self-attention
        y = ln(h, ln1_g_ref[l], ln1_b_ref[l])
        qkv = mm(y, w_qkv_ref[l], b_qkv_ref[l])                   # (T, 3*width) f32
        # single f32->bf16 cast (and q pre-scale) before the head loop
        q_all = (qkv[:, :width] * scale).astype(jnp.bfloat16)     # (T, width)
        k_all = qkv[:, width:2 * width].astype(jnp.bfloat16)      # (T, width)
        v_all = qkv[:, 2 * width:].astype(jnp.bfloat16)           # (T, width)
        w_out_l = w_out_ref[l]                                    # (width, width) bf16
        acc = jnp.zeros((T, width), jnp.float32)
        for hh in range(heads):
            lo = hh * dh
            qh = q_all[:, lo:lo + dh]
            kh = k_all[:, lo:lo + dh]
            vh = v_all[:, lo:lo + dh]
            s = jnp.einsum("qd,kd->qk", qh, kh,
                           preferred_element_type=jnp.float32)    # (T, T)
            s = s - jnp.max(s, axis=-1, keepdims=True)
            p = jnp.exp(s)
            p = p * pl.reciprocal(jnp.sum(p, axis=-1, keepdims=True), approx=True)
            oh = jnp.dot(p.astype(jnp.bfloat16), vh,
                         preferred_element_type=jnp.float32)      # (T, dh)
            # fold head output straight into the output projection (lane-dense)
            acc = acc + jnp.dot(oh.astype(jnp.bfloat16), w_out_l[lo:lo + dh, :],
                                preferred_element_type=jnp.float32)
        h = h + acc + b_out_ref[l].astype(jnp.float32)

        # MLP with QuickGELU
        y = ln(h, ln2_g_ref[l], ln2_b_ref[l])
        y = mm(y, w_fc_ref[l], b_fc_ref[l])
        y = y * jax.nn.sigmoid(1.702 * y)                         # QuickGELU
        y = mm(y, w_proj2_ref[l], b_proj2_ref[l])
        h = h + y

    # --- head: ln_post on CLS token -> visual proj (no bias) -> predictor ---
    cls_tok = ln(h[0:1, :], ln_post_g_ref[...], ln_post_b_ref[...])   # (1, width)
    rep = mm(cls_tok, w_vproj_ref[...])                               # (1, hid_dim)
    logits = mm(rep, w_pred_ref[...], b_pred_ref[...])                # (1, out_class)
    out_ref[0] = logits.astype(out_ref.dtype)

    # TODO(synk): the `apply_adapter=True` branch depends on an adapter module
    # that is not defined in the provided source; the encoder runs without it.


# --------------------------- parameters & forward ---------------------------

def init_params(key, *, in_ch=3, patch=8, img=16, width=64, heads=4, layers=2,
                hid_dim=512, out_class=10):
    n_patches = (img // patch) * (img // patch)
    T = n_patches + 1
    keys = iter(jax.random.split(key, 16))

    def nrm(shape, std, dtype=jnp.float32):
        return (jax.random.normal(next(keys), shape, jnp.float32) * std).astype(dtype)

    cfg = dict(patch=patch, width=width, heads=heads, layers=layers)
    params = {
        # matmul weights stored in bf16 (MXU-native), biases / LN / embeddings in f32
        "w_patch": nrm((in_ch * patch * patch, width), width ** -0.5, jnp.bfloat16),
        "cls": nrm((1, width), width ** -0.5),
        "pos": nrm((T, width), width ** -0.5),
        "ln_pre_g": jnp.ones((1, width), jnp.float32),
        "ln_pre_b": jnp.zeros((1, width), jnp.float32),
        "ln_post_g": jnp.ones((1, width), jnp.float32),
        "ln_post_b": jnp.zeros((1, width), jnp.float32),
        "w_vproj": nrm((width, hid_dim), width ** -0.5, jnp.bfloat16),   # no bias
        # predictor = nn.Linear(hid_dim, out_class); initialize_parameters(): std=hid_dim**-0.5
        "w_pred": nrm((hid_dim, out_class), hid_dim ** -0.5, jnp.bfloat16),
        "b_pred": jnp.zeros((1, out_class), jnp.float32),
        # per-layer params stacked along a leading layer axis
        "ln1_g": jnp.ones((layers, 1, width), jnp.float32),
        "ln1_b": jnp.zeros((layers, 1, width), jnp.float32),
        "ln2_g": jnp.ones((layers, 1, width), jnp.float32),
        "ln2_b": jnp.zeros((layers, 1, width), jnp.float32),
        "w_qkv": nrm((layers, width, 3 * width), width ** -0.5, jnp.bfloat16),
        "b_qkv": jnp.zeros((layers, 1, 3 * width), jnp.float32),
        "w_out": nrm((layers, width, width), width ** -0.5, jnp.bfloat16),
        "b_out": jnp.zeros((layers, 1, width), jnp.float32),
        "w_fc": nrm((layers, width, 4 * width), width ** -0.5, jnp.bfloat16),
        "b_fc": jnp.zeros((layers, 1, 4 * width), jnp.float32),
        "w_proj2": nrm((layers, 4 * width, width), (4 * width) ** -0.5, jnp.bfloat16),
        "b_proj2": jnp.zeros((layers, 1, width), jnp.float32),
    }
    return cfg, params


def clip_adapter_forward(cfg, params, x):
    B, C, H, W = x.shape
    p, width, heads, layers = cfg["patch"], cfg["width"], cfg["heads"], cfg["layers"]
    nP = (H // p) * (W // p)
    T = nP + 1
    Cpp = C * p * p
    out_class = params["w_pred"].shape[1]

    # im2col for the patch-embed conv (kernel=stride=p, no pad, no bias); prepend a
    # zero row per sample so the patch matmul directly yields T token rows (row 0 = CLS).
    patches = x.reshape(B, C, H // p, p, W // p, p)
    patches = patches.transpose(0, 2, 4, 1, 3, 5).reshape(B, nP, Cpp)
    patches = jnp.concatenate([jnp.zeros((B, 1, Cpp), patches.dtype), patches], axis=1)

    # fold the CLS embedding into row 0 of the positional embedding
    pos_cls = params["pos"].at[0].add(params["cls"][0])           # (T, width)

    def rep(shape):
        nd = len(shape)
        return pl.BlockSpec(shape, lambda b: (0,) * nd)           # replicated (DMA'd once)

    kernel = functools.partial(_clip_fused_kernel, layers=layers, heads=heads, eps=1e-5)

    out = pl.pallas_call(
        kernel,
        out_shape=jax.ShapeDtypeStruct((B, 1, out_class), jnp.float32),
        grid=(B,),
        in_specs=[
            pl.BlockSpec((1, T, Cpp), lambda b: (b, 0, 0)),       # per-sample tokens
            rep(params["w_patch"].shape),
            rep(pos_cls.shape),
            rep(params["ln_pre_g"].shape), rep(params["ln_pre_b"].shape),
            rep(params["ln1_g"].shape), rep(params["ln1_b"].shape),
            rep(params["w_qkv"].shape), rep(params["b_qkv"].shape),
            rep(params["w_out"].shape), rep(params["b_out"].shape),
            rep(params["ln2_g"].shape), rep(params["ln2_b"].shape),
            rep(params["w_fc"].shape), rep(params["b_fc"].shape),
            rep(params["w_proj2"].shape), rep(params["b_proj2"].shape),
            rep(params["ln_post_g"].shape), rep(params["ln_post_b"].shape),
            rep(params["w_vproj"].shape),
            rep(params["w_pred"].shape), rep(params["b_pred"].shape),
        ],
        out_specs=pl.BlockSpec((1, 1, out_class), lambda b: (b, 0, 0)),
        compiler_params=pltpu.CompilerParams(
            dimension_semantics=("parallel",),
            vmem_limit_bytes=64 << 20),
    )(patches, params["w_patch"], pos_cls,
      params["ln_pre_g"], params["ln_pre_b"],
      params["ln1_g"], params["ln1_b"], params["w_qkv"], params["b_qkv"],
      params["w_out"], params["b_out"], params["ln2_g"], params["ln2_b"],
      params["w_fc"], params["b_fc"], params["w_proj2"], params["b_proj2"],
      params["ln_post_g"], params["ln_post_b"],
      params["w_vproj"], params["w_pred"], params["b_pred"])

    return out.reshape(B, out_class)


if __name__ == "__main__":
    key = jax.random.PRNGKey(0)
    k_param, k_x = jax.random.split(key)

    cfg, params = init_params(k_param, in_ch=3, patch=8, img=16, width=64,
                              heads=4, layers=2, hid_dim=512, out_class=10)
    x = jax.random.normal(k_x, (2, 3, 16, 16), jnp.float32)   # NCHW, like PyTorch

    fwd = jax.jit(functools.partial(clip_adapter_forward, cfg))
    out = fwd(params, x)
    out = jax.block_until_ready(out)
    assert out.shape == (2, 10) and out.dtype == jnp.float32
    assert bool(jnp.all(jnp.isfinite(out)))
    print("KERNEL_OK")
</pallas_src>

<mosaic_0001>
module attributes {stable_mosaic.version = 11 : i64} {
  func.func @_clip_fused_kernel(%arg0: i32, %arg1: memref<1x5x192xf32, #tpu.memory_space<vmem>>, %arg2: memref<192x64xbf16, #tpu.memory_space<vmem>>, %arg3: memref<5x64xf32, #tpu.memory_space<vmem>>, %arg4: memref<1x64xf32, #tpu.memory_space<vmem>>, %arg5: memref<1x64xf32, #tpu.memory_space<vmem>>, %arg6: memref<2x1x64xf32, #tpu.memory_space<vmem>>, %arg7: memref<2x1x64xf32, #tpu.memory_space<vmem>>, %arg8: memref<2x64x192xbf16, #tpu.memory_space<vmem>>, %arg9: memref<2x1x192xf32, #tpu.memory_space<vmem>>, %arg10: memref<2x64x64xbf16, #tpu.memory_space<vmem>>, %arg11: memref<2x1x64xf32, #tpu.memory_space<vmem>>, %arg12: memref<2x1x64xf32, #tpu.memory_space<vmem>>, %arg13: memref<2x1x64xf32, #tpu.memory_space<vmem>>, %arg14: memref<2x64x256xbf16, #tpu.memory_space<vmem>>, %arg15: memref<2x1x256xf32, #tpu.memory_space<vmem>>, %arg16: memref<2x256x64xbf16, #tpu.memory_space<vmem>>, %arg17: memref<2x1x64xf32, #tpu.memory_space<vmem>>, %arg18: memref<1x64xf32, #tpu.memory_space<vmem>>, %arg19: memref<1x64xf32, #tpu.memory_space<vmem>>, %arg20: memref<64x512xbf16, #tpu.memory_space<vmem>>, %arg21: memref<512x10xbf16, #tpu.memory_space<vmem>>, %arg22: memref<1x10xf32, #tpu.memory_space<vmem>>, %arg23: memref<1x1x10xf32, #tpu.memory_space<vmem>>) attributes {dimension_semantics = [#tpu.dimension_semantics<parallel>], iteration_bounds = array<i64: 2>, scalar_prefetch = 0 : i64, scratch_operands = 0 : i64, tpu.core_type = #tpu.core_type<tc>, window_params = [{transform_indices = @transform_0, window_bounds = array<i64: 1, 5, 192>}, {pipeline_mode = #tpu.pipeline_mode<synchronous>, transform_indices = @transform_1, window_bounds = array<i64: 192, 64>}, {pipeline_mode = #tpu.pipeline_mode<synchronous>, transform_indices = @transform_2, window_bounds = array<i64: 5, 64>}, {pipeline_mode = #tpu.pipeline_mode<synchronous>, transform_indices = @transform_3, window_bounds = array<i64: 1, 64>}, {pipeline_mode = #tpu.pipeline_mode<synchronous>, transform_indices = @transform_4, window_bounds = array<i64: 1, 64>}, {pipeline_mode = #tpu.pipeline_mode<synchronous>, transform_indices = @transform_5, window_bounds = array<i64: 2, 1, 64>}, {pipeline_mode = #tpu.pipeline_mode<synchronous>, transform_indices = @transform_6, window_bounds = array<i64: 2, 1, 64>}, {pipeline_mode = #tpu.pipeline_mode<synchronous>, transform_indices = @transform_7, window_bounds = array<i64: 2, 64, 192>}, {pipeline_mode = #tpu.pipeline_mode<synchronous>, transform_indices = @transform_8, window_bounds = array<i64: 2, 1, 192>}, {pipeline_mode = #tpu.pipeline_mode<synchronous>, transform_indices = @transform_9, window_bounds = array<i64: 2, 64, 64>}, {pipeline_mode = #tpu.pipeline_mode<synchronous>, transform_indices = @transform_10, window_bounds = array<i64: 2, 1, 64>}, {pipeline_mode = #tpu.pipeline_mode<synchronous>, transform_indices = @transform_11, window_bounds = array<i64: 2, 1, 64>}, {pipeline_mode = #tpu.pipeline_mode<synchronous>, transform_indices = @transform_12, window_bounds = array<i64: 2, 1, 64>}, {pipeline_mode = #tpu.pipeline_mode<synchronous>, transform_indices = @transform_13, window_bounds = array<i64: 2, 64, 256>}, {pipeline_mode = #tpu.pipeline_mode<synchronous>, transform_indices = @transform_14, window_bounds = array<i64: 2, 1, 256>}, {pipeline_mode = #tpu.pipeline_mode<synchronous>, transform_indices = @transform_15, window_bounds = array<i64: 2, 256, 64>}, {pipeline_mode = #tpu.pipeline_mode<synchronous>, transform_indices = @transform_16, window_bounds = array<i64: 2, 1, 64>}, {pipeline_mode = #tpu.pipeline_mode<synchronous>, transform_indices = @transform_17, window_bounds = array<i64: 1, 64>}, {pipeline_mode = #tpu.pipeline_mode<synchronous>, transform_indices = @transform_18, window_bounds = array<i64: 1, 64>}, {pipeline_mode = #tpu.pipeline_mode<synchronous>, transform_indices = @transform_19, window_bounds = array<i64: 64, 512>}, {pipeline_mode = #tpu.pipeline_mode<synchronous>, transform_indices = @transform_20, window_bounds = array<i64: 512, 10>}, {pipeline_mode = #tpu.pipeline_mode<synchronous>, transform_indices = @transform_21, window_bounds = array<i64: 1, 10>}, {transform_indices = @transform_22, window_bounds = array<i64: 1, 1, 10>}]} {
    %c0 = arith.constant 0 : index
    %c0_0 = arith.constant 0 : index
    %c0_1 = arith.constant 0 : index
    %0 = vector.load %arg1[%c0, %c0_0, %c0_1] : memref<1x5x192xf32, #tpu.memory_space<vmem>>, vector<1x5x192xf32>
    %1 = vector.shape_cast %0 : vector<1x5x192xf32> to vector<5x192xf32>
    %c0_2 = arith.constant 0 : index
    %c0_3 = arith.constant 0 : index
    %2 = vector.load %arg2[%c0_2, %c0_3] : memref<192x64xbf16, #tpu.memory_space<vmem>>, vector<192x64xbf16>
    %3 = arith.truncf %1 : vector<5x192xf32> to vector<5x192xbf16>
    %cst = arith.constant dense<0.000000e+00> : vector<5x64xf32>
    %4 = tpu.matmul %3, %2, %cst {dimension_numbers = #tpu.dot_dimension_numbers<[1], [0], [0], [1], [0, 0, 1, 1], [], []>} : vector<5x192xbf16>, vector<192x64xbf16>, vector<5x64xf32> -> vector<5x64xf32>
    %c0_4 = arith.constant 0 : index
    %c0_5 = arith.constant 0 : index
    %5 = vector.load %arg3[%c0_4, %c0_5] : memref<5x64xf32, #tpu.memory_space<vmem>>, vector<5x64xf32>
    %6 = arith.addf %4, %5 : vector<5x64xf32>
    %c0_6 = arith.constant 0 : index
    %c0_7 = arith.constant 0 : index
    %7 = vector.load %arg4[%c0_6, %c0_7] : memref<1x64xf32, #tpu.memory_space<vmem>>, vector<1x64xf32>
    %c0_8 = arith.constant 0 : index
    %c0_9 = arith.constant 0 : index
    %8 = vector.load %arg5[%c0_8, %c0_9] : memref<1x64xf32, #tpu.memory_space<vmem>>, vector<1x64xf32>
    %cst_10 = arith.constant dense<0.000000e+00> : vector<5xf32>
    %9 = vector.multi_reduction <add>, %6, %cst_10 [1] : vector<5x64xf32> to vector<5xf32>
    %10 = vector.shape_cast %9 : vector<5xf32> to vector<5x1xf32>
    %cst_11 = arith.constant 6.400000e+01 : f32
    %11 = vector.broadcast %cst_11 : f32 to vector<5x1xf32>
    %12 = arith.divf %10, %11 : vector<5x1xf32>
    %13 = vector.broadcast %12 : vector<5x1xf32> to vector<5x64xf32>
    %14 = arith.subf %6, %13 : vector<5x64xf32>
    %15 = arith.mulf %14, %14 : vector<5x64xf32>
    %cst_12 = arith.constant dense<0.000000e+00> : vector<5xf32>
    %16 = vector.multi_reduction <add>, %15, %cst_12 [1] : vector<5x64xf32> to vector<5xf32>
    %17 = vector.shape_cast %16 : vector<5xf32> to vector<5x1xf32>
    %cst_13 = arith.constant 6.400000e+01 : f32
    %18 = vector.broadcast %cst_13 : f32 to vector<5x1xf32>
    %19 = arith.divf %17, %18 : vector<5x1xf32>
    %20 = vector.broadcast %12 : vector<5x1xf32> to vector<5x64xf32>
    %21 = arith.subf %6, %20 : vector<5x64xf32>
    %cst_14 = arith.constant 9.99999974E-6 : f32
    %22 = vector.broadcast %cst_14 : f32 to vector<5x1xf32>
    %23 = arith.addf %19, %22 : vector<5x1xf32>
    %24 = math.rsqrt %23 : vector<5x1xf32>
    %25 = vector.broadcast %24 : vector<5x1xf32> to vector<5x64xf32>
    %26 = arith.mulf %21, %25 : vector<5x64xf32>
    %27 = vector.broadcast %7 : vector<1x64xf32> to vector<5x64xf32>
    %28 = arith.mulf %26, %27 : vector<5x64xf32>
    %29 = vector.broadcast %8 : vector<1x64xf32> to vector<5x64xf32>
    %30 = arith.addf %28, %29 : vector<5x64xf32>
    %c0_15 = arith.constant 0 : index
    %c0_16 = arith.constant 0 : index
    %c0_17 = arith.constant 0 : index
    %31 = vector.load %arg6[%c0_15, %c0_16, %c0_17] : memref<2x1x64xf32, #tpu.memory_space<vmem>>, vector<1x1x64xf32>
    %32 = vector.shape_cast %31 : vector<1x1x64xf32> to vector<1x64xf32>
    %c0_18 = arith.constant 0 : index
    %c0_19 = arith.constant 0 : index
    %c0_20 = arith.constant 0 : index
    %33 = vector.load %arg7[%c0_18, %c0_19, %c0_20] : memref<2x1x64xf32, #tpu.memory_space<vmem>>, vector<1x1x64xf32>
    %34 = vector.shape_cast %33 : vector<1x1x64xf32> to vector<1x64xf32>
    %cst_21 = arith.constant dense<0.000000e+00> : vector<5xf32>
    %35 = vector.multi_reduction <add>, %30, %cst_21 [1] : vector<5x64xf32> to vector<5xf32>
    %36 = vector.shape_cast %35 : vector<5xf32> to vector<5x1xf32>
    %cst_22 = arith.constant 6.400000e+01 : f32
    %37 = vector.broadcast %cst_22 : f32 to vector<5x1xf32>
    %38 = arith.divf %36, %37 : vector<5x1xf32>
    %39 = vector.broadcast %38 : vector<5x1xf32> to vector<5x64xf32>
    %40 = arith.subf %30, %39 : vector<5x64xf32>
    %41 = arith.mulf %40, %40 : vector<5x64xf32>
    %cst_23 = arith.constant dense<0.000000e+00> : vector<5xf32>
    %42 = vector.multi_reduction <add>, %41, %cst_23 [1] : vector<5x64xf32> to vector<5xf32>
    %43 = vector.shape_cast %42 : vector<5xf32> to vector<5x1xf32>
    %cst_24 = arith.constant 6.400000e+01 : f32
    %44 = vector.broadcast %cst_24 : f32 to vector<5x1xf32>
    %45 = arith.divf %43, %44 : vector<5x1xf32>
    %46 = vector.broadcast %38 : vector<5x1xf32> to vector<5x64xf32>
    %47 = arith.subf %30, %46 : vector<5x64xf32>
    %cst_25 = arith.constant 9.99999974E-6 : f32
    %48 = vector.broadcast %cst_25 : f32 to vector<5x1xf32>
    %49 = arith.addf %45, %48 : vector<5x1xf32>
    %50 = math.rsqrt %49 : vector<5x1xf32>
    %51 = vector.broadcast %50 : vector<5x1xf32> to vector<5x64xf32>
    %52 = arith.mulf %47, %51 : vector<5x64xf32>
    %53 = vector.broadcast %32 : vector<1x64xf32> to vector<5x64xf32>
    %54 = arith.mulf %52, %53 : vector<5x64xf32>
    %55 = vector.broadcast %34 : vector<1x64xf32> to vector<5x64xf32>
    %56 = arith.addf %54, %55 : vector<5x64xf32>
    %c0_26 = arith.constant 0 : index
    %c0_27 = arith.constant 0 : index
    %c0_28 = arith.constant 0 : index
    %57 = vector.load %arg8[%c0_26, %c0_27, %c0_28] : memref<2x64x192xbf16, #tpu.memory_space<vmem>>, vector<1x64x192xbf16>
    %58 = vector.shape_cast %57 : vector<1x64x192xbf16> to vector<64x192xbf16>
    %c0_29 = arith.constant 0 : index
    %c0_30 = arith.constant 0 : index
    %c0_31 = arith.constant 0 : index
    %59 = vector.load %arg9[%c0_29, %c0_30, %c0_31] : memref<2x1x192xf32, #tpu.memory_space<vmem>>, vector<1x1x192xf32>
    %60 = vector.shape_cast %59 : vector<1x1x192xf32> to vector<1x192xf32>
    %61 = arith.truncf %56 : vector<5x64xf32> to vector<5x64xbf16>
    %cst_32 = arith.constant dense<0.000000e+00> : vector<5x192xf32>
    %62 = tpu.matmul %61, %58, %cst_32 {dimension_numbers = #tpu.dot_dimension_numbers<[1], [0], [0], [1], [0, 0, 1, 1], [], []>} : vector<5x64xbf16>, vector<64x192xbf16>, vector<5x192xf32> -> vector<5x192xf32>
    %63 = vector.broadcast %60 : vector<1x192xf32> to vector<5x192xf32>
    %64 = arith.addf %62, %63 : vector<5x192xf32>
    %65 = vector.extract_strided_slice %64 {offsets = [0, 0], sizes = [5, 64], strides = [1, 1]} : vector<5x192xf32> to vector<5x64xf32>
    %cst_33 = arith.constant 2.500000e-01 : f32
    %66 = vector.broadcast %cst_33 : f32 to vector<5x64xf32>
    %67 = arith.mulf %65, %66 : vector<5x64xf32>
    %68 = arith.truncf %67 : vector<5x64xf32> to vector<5x64xbf16>
    %69 = vector.extract_strided_slice %64 {offsets = [0, 64], sizes = [5, 64], strides = [1, 1]} : vector<5x192xf32> to vector<5x64xf32>
    %70 = arith.truncf %69 : vector<5x64xf32> to vector<5x64xbf16>
    %71 = vector.extract_strided_slice %64 {offsets = [0, 128], sizes = [5, 64], strides = [1, 1]} : vector<5x192xf32> to vector<5x64xf32>
    %72 = arith.truncf %71 : vector<5x64xf32> to vector<5x64xbf16>
    %c0_34 = arith.constant 0 : index
    %c0_35 = arith.constant 0 : index
    %c0_36 = arith.constant 0 : index
    %73 = vector.load %arg10[%c0_34, %c0_35, %c0_36] : memref<2x64x64xbf16, #tpu.memory_space<vmem>>, vector<1x64x64xbf16>
    %74 = vector.shape_cast %73 : vector<1x64x64xbf16> to vector<64x64xbf16>
    %cst_37 = arith.constant 0.000000e+00 : f32
    %75 = vector.broadcast %cst_37 : f32 to vector<5x64xf32>
    %76 = vector.extract_strided_slice %68 {offsets = [0, 0], sizes = [5, 16], strides = [1, 1]} : vector<5x64xbf16> to vector<5x16xbf16>
    %77 = vector.extract_strided_slice %70 {offsets = [0, 0], sizes = [5, 16], strides = [1, 1]} : vector<5x64xbf16> to vector<5x16xbf16>
    %78 = vector.extract_strided_slice %72 {offsets = [0, 0], sizes = [5, 16], strides = [1, 1]} : vector<5x64xbf16> to vector<5x16xbf16>
    "tpu.trace_start"() <{level = 10 : i32, message = "qd,kd->qk"}> : () -> ()
    %cst_38 = arith.constant dense<0.000000e+00> : vector<5x5xf32>
    %79 = tpu.matmul %76, %77, %cst_38 {dimension_numbers = #tpu.dot_dimension_numbers<[1], [1], [0], [0], [0, 0, 1, 0], [], []>} : vector<5x16xbf16>, vector<5x16xbf16>, vector<5x5xf32> -> vector<5x5xf32>
    "tpu.trace_stop"() : () -> ()
    %cst_39 = arith.constant dense<0xFF800000> : vector<5xf32>
    %80 = vector.multi_reduction <maximumf>, %79, %cst_39 [1] : vector<5x5xf32> to vector<5xf32>
    %81 = vector.shape_cast %80 : vector<5xf32> to vector<5x1xf32>
    %82 = vector.broadcast %81 : vector<5x1xf32> to vector<5x5xf32>
    %83 = arith.subf %79, %82 : vector<5x5xf32>
    %84 = math.exp %83 : vector<5x5xf32>
    %cst_40 = arith.constant dense<0.000000e+00> : vector<5xf32>
    %85 = vector.multi_reduction <add>, %84, %cst_40 [1] : vector<5x5xf32> to vector<5xf32>
    %86 = vector.shape_cast %85 : vector<5xf32> to vector<5x1xf32>
    %87 = tpu.reciprocal %86 {approx = true} : vector<5x1xf32> -> vector<5x1xf32>
    %88 = vector.broadcast %87 : vector<5x1xf32> to vector<5x5xf32>
    %89 = arith.mulf %84, %88 : vector<5x5xf32>
    %90 = arith.truncf %89 : vector<5x5xf32> to vector<5x5xbf16>
    %cst_41 = arith.constant dense<0.000000e+00> : vector<5x16xf32>
    %91 = tpu.matmul %90, %78, %cst_41 {dimension_numbers = #tpu.dot_dimension_numbers<[1], [0], [0], [1], [0, 0, 1, 1], [], []>} : vector<5x5xbf16>, vector<5x16xbf16>, vector<5x16xf32> -> vector<5x16xf32>
    %92 = arith.truncf %91 : vector<5x16xf32> to vector<5x16xbf16>
    %93 = vector.extract_strided_slice %74 {offsets = [0, 0], sizes = [16, 64], strides = [1, 1]} : vector<64x64xbf16> to vector<16x64xbf16>
    %cst_42 = arith.constant dense<0.000000e+00> : vector<5x64xf32>
    %94 = tpu.matmul %92, %93, %cst_42 {dimension_numbers = #tpu.dot_dimension_numbers<[1], [0], [0], [1], [0, 0, 1, 1], [], []>} : vector<5x16xbf16>, vector<16x64xbf16>, vector<5x64xf32> -> vector<5x64xf32>
    %95 = arith.addf %75, %94 : vector<5x64xf32>
    %96 = vector.extract_strided_slice %68 {offsets = [0, 16], sizes = [5, 16], strides = [1, 1]} : vector<5x64xbf16> to vector<5x16xbf16>
    %97 = vector.extract_strided_slice %70 {offsets = [0, 16], sizes = [5, 16], strides = [1, 1]} : vector<5x64xbf16> to vector<5x16xbf16>
    %98 = vector.extract_strided_slice %72 {offsets = [0, 16], sizes = [5, 16], strides = [1, 1]} : vector<5x64xbf16> to vector<5x16xbf16>
    "tpu.trace_start"() <{level = 10 : i32, message = "qd,kd->qk"}> : () -> ()
    %cst_43 = arith.constant dense<0.000000e+00> : vector<5x5xf32>
    %99 = tpu.matmul %96, %97, %cst_43 {dimension_numbers = #tpu.dot_dimension_numbers<[1], [1], [0], [0], [0, 0, 1, 0], [], []>} : vector<5x16xbf16>, vector<5x16xbf16>, vector<5x5xf32> -> vector<5x5xf32>
    "tpu.trace_stop"() : () -> ()
    %cst_44 = arith.constant dense<0xFF800000> : vector<5xf32>
    %100 = vector.multi_reduction <maximumf>, %99, %cst_44 [1] : vector<5x5xf32> to vector<5xf32>
    %101 = vector.shape_cast %100 : vector<5xf32> to vector<5x1xf32>
    %102 = vector.broadcast %101 : vector<5x1xf32> to vector<5x5xf32>
    %103 = arith.subf %99, %102 : vector<5x5xf32>
    %104 = math.exp %103 : vector<5x5xf32>
    %cst_45 = arith.constant dense<0.000000e+00> : vector<5xf32>
    %105 = vector.multi_reduction <add>, %104, %cst_45 [1] : vector<5x5xf32> to vector<5xf32>
    %106 = vector.shape_cast %105 : vector<5xf32> to vector<5x1xf32>
    %107 = tpu.reciprocal %106 {approx = true} : vector<5x1xf32> -> vector<5x1xf32>
    %108 = vector.broadcast %107 : vector<5x1xf32> to vector<5x5xf32>
    %109 = arith.mulf %104, %108 : vector<5x5xf32>
    %110 = arith.truncf %109 : vector<5x5xf32> to vector<5x5xbf16>
    %cst_46 = arith.constant dense<0.000000e+00> : vector<5x16xf32>
    %111 = tpu.matmul %110, %98, %cst_46 {dimension_numbers = #tpu.dot_dimension_numbers<[1], [0], [0], [1], [0, 0, 1, 1], [], []>} : vector<5x5xbf16>, vector<5x16xbf16>, vector<5x16xf32> -> vector<5x16xf32>
    %112 = arith.truncf %111 : vector<5x16xf32> to vector<5x16xbf16>
    %113 = vector.extract_strided_slice %74 {offsets = [16, 0], sizes = [16, 64], strides = [1, 1]} : vector<64x64xbf16> to vector<16x64xbf16>
    %cst_47 = arith.constant dense<0.000000e+00> : vector<5x64xf32>
    %114 = tpu.matmul %112, %113, %cst_47 {dimension_numbers = #tpu.dot_dimension_numbers<[1], [0], [0], [1], [0, 0, 1, 1], [], []>} : vector<5x16xbf16>, vector<16x64xbf16>, vector<5x64xf32> -> vector<5x64xf32>
    %115 = arith.addf %95, %114 : vector<5x64xf32>
    %116 = vector.extract_strided_slice %68 {offsets = [0, 32], sizes = [5, 16], strides = [1, 1]} : vector<5x64xbf16> to vector<5x16xbf16>
    %117 = vector.extract_strided_slice %70 {offsets = [0, 32], sizes = [5, 16], strides = [1, 1]} : vector<5x64xbf16> to vector<5x16xbf16>
    %118 = vector.extract_strided_slice %72 {offsets = [0, 32], sizes = [5, 16], strides = [1, 1]} : vector<5x64xbf16> to vector<5x16xbf16>
    "tpu.trace_start"() <{level = 10 : i32, message = "qd,kd->qk"}> : () -> ()
    %cst_48 = arith.constant dense<0.000000e+00> : vector<5x5xf32>
    %119 = tpu.matmul %116, %117, %cst_48 {dimension_numbers = #tpu.dot_dimension_numbers<[1], [1], [0], [0], [0, 0, 1, 0], [], []>} : vector<5x16xbf16>, vector<5x16xbf16>, vector<5x5xf32> -> vector<5x5xf32>
    "tpu.trace_stop"() : () -> ()
    %cst_49 = arith.constant dense<0xFF800000> : vector<5xf32>
    %120 = vector.multi_reduction <maximumf>, %119, %cst_49 [1] : vector<5x5xf32> to vector<5xf32>
    %121 = vector.shape_cast %120 : vector<5xf32> to vector<5x1xf32>
    %122 = vector.broadcast %121 : vector<5x1xf32> to vector<5x5xf32>
    %123 = arith.subf %119, %122 : vector<5x5xf32>
    %124 = math.exp %123 : vector<5x5xf32>
    %cst_50 = arith.constant dense<0.000000e+00> : vector<5xf32>
    %125 = vector.multi_reduction <add>, %124, %cst_50 [1] : vector<5x5xf32> to vector<5xf32>
    %126 = vector.shape_cast %125 : vector<5xf32> to vector<5x1xf32>
    %127 = tpu.reciprocal %126 {approx = true} : vector<5x1xf32> -> vector<5x1xf32>
    %128 = vector.broadcast %127 : vector<5x1xf32> to vector<5x5xf32>
    %129 = arith.mulf %124, %128 : vector<5x5xf32>
    %130 = arith.truncf %129 : vector<5x5xf32> to vector<5x5xbf16>
    %cst_51 = arith.constant dense<0.000000e+00> : vector<5x16xf32>
    %131 = tpu.matmul %130, %118, %cst_51 {dimension_numbers = #tpu.dot_dimension_numbers<[1], [0], [0], [1], [0, 0, 1, 1], [], []>} : vector<5x5xbf16>, vector<5x16xbf16>, vector<5x16xf32> -> vector<5x16xf32>
    %132 = arith.truncf %131 : vector<5x16xf32> to vector<5x16xbf16>
    %133 = vector.extract_strided_slice %74 {offsets = [32, 0], sizes = [16, 64], strides = [1, 1]} : vector<64x64xbf16> to vector<16x64xbf16>
    %cst_52 = arith.constant dense<0.000000e+00> : vector<5x64xf32>
    %134 = tpu.matmul %132, %133, %cst_52 {dimension_numbers = #tpu.dot_dimension_numbers<[1], [0], [0], [1], [0, 0, 1, 1], [], []>} : vector<5x16xbf16>, vector<16x64xbf16>, vector<5x64xf32> -> vector<5x64xf32>
    %135 = arith.addf %115, %134 : vector<5x64xf32>
    %136 = vector.extract_strided_slice %68 {offsets = [0, 48], sizes = [5, 16], strides = [1, 1]} : vector<5x64xbf16> to vector<5x16xbf16>
    %137 = vector.extract_strided_slice %70 {offsets = [0, 48], sizes = [5, 16], strides = [1, 1]} : vector<5x64xbf16> to vector<5x16xbf16>
    %138 = vector.extract_strided_slice %72 {offsets = [0, 48], sizes = [5, 16], strides = [1, 1]} : vector<5x64xbf16> to vector<5x16xbf16>
    "tpu.trace_start"() <{level = 10 : i32, message = "qd,kd->qk"}> : () -> ()
    %cst_53 = arith.constant dense<0.000000e+00> : vector<5x5xf32>
    %139 = tpu.matmul %136, %137, %cst_53 {dimension_numbers = #tpu.dot_dimension_numbers<[1], [1], [0], [0], [0, 0, 1, 0], [], []>} : vector<5x16xbf16>, vector<5x16xbf16>, vector<5x5xf32> -> vector<5x5xf32>
    "tpu.trace_stop"() : () -> ()
    %cst_54 = arith.constant dense<0xFF800000> : vector<5xf32>
    %140 = vector.multi_reduction <maximumf>, %139, %cst_54 [1] : vector<5x5xf32> to vector<5xf32>
    %141 = vector.shape_cast %140 : vector<5xf32> to vector<5x1xf32>
    %142 = vector.broadcast %141 : vector<5x1xf32> to vector<5x5xf32>
    %143 = arith.subf %139, %142 : vector<5x5xf32>
    %144 = math.exp %143 : vector<5x5xf32>
    %cst_55 = arith.constant dense<0.000000e+00> : vector<5xf32>
    %145 = vector.multi_reduction <add>, %144, %cst_55 [1] : vector<5x5xf32> to vector<5xf32>
    %146 = vector.shape_cast %145 : vector<5xf32> to vector<5x1xf32>
    %147 = tpu.reciprocal %146 {approx = true} : vector<5x1xf32> -> vector<5x1xf32>
    %148 = vector.broadcast %147 : vector<5x1xf32> to vector<5x5xf32>
    %149 = arith.mulf %144, %148 : vector<5x5xf32>
    %150 = arith.truncf %149 : vector<5x5xf32> to vector<5x5xbf16>
    %cst_56 = arith.constant dense<0.000000e+00> : vector<5x16xf32>
    %151 = tpu.matmul %150, %138, %cst_56 {dimension_numbers = #tpu.dot_dimension_numbers<[1], [0], [0], [1], [0, 0, 1, 1], [], []>} : vector<5x5xbf16>, vector<5x16xbf16>, vector<5x16xf32> -> vector<5x16xf32>
    %152 = arith.truncf %151 : vector<5x16xf32> to vector<5x16xbf16>
    %153 = vector.extract_strided_slice %74 {offsets = [48, 0], sizes = [16, 64], strides = [1, 1]} : vector<64x64xbf16> to vector<16x64xbf16>
    %cst_57 = arith.constant dense<0.000000e+00> : vector<5x64xf32>
    %154 = tpu.matmul %152, %153, %cst_57 {dimension_numbers = #tpu.dot_dimension_numbers<[1], [0], [0], [1], [0, 0, 1, 1], [], []>} : vector<5x16xbf16>, vector<16x64xbf16>, vector<5x64xf32> -> vector<5x64xf32>
    %155 = arith.addf %135, %154 : vector<5x64xf32>
    %156 = arith.addf %30, %155 : vector<5x64xf32>
    %c0_58 = arith.constant 0 : index
    %c0_59 = arith.constant 0 : index
    %c0_60 = arith.constant 0 : index
    %157 = vector.load %arg11[%c0_58, %c0_59, %c0_60] : memref<2x1x64xf32, #tpu.memory_space<vmem>>, vector<1x1x64xf32>
    %158 = vector.shape_cast %157 : vector<1x1x64xf32> to vector<1x64xf32>
    %159 = vector.broadcast %158 : vector<1x64xf32> to vector<5x64xf32>
    %160 = arith.addf %156, %159 : vector<5x64xf32>
    %c0_61 = arith.constant 0 : index
    %c0_62 = arith.constant 0 : index
    %c0_63 = arith.constant 0 : index
    %161 = vector.load %arg12[%c0_61, %c0_62, %c0_63] : memref<2x1x64xf32, #tpu.memory_space<vmem>>, vector<1x1x64xf32>
    %162 = vector.shape_cast %161 : vector<1x1x64xf32> to vector<1x64xf32>
    %c0_64 = arith.constant 0 : index
    %c0_65 = arith.constant 0 : index
    %c0_66 = arith.constant 0 : index
    %163 = vector.load %arg13[%c0_64, %c0_65, %c0_66] : memref<2x1x64xf32, #tpu.memory_space<vmem>>, vector<1x1x64xf32>
    %164 = vector.shape_cast %163 : vector<1x1x64xf32> to vector<1x64xf32>
    %cst_67 = arith.constant dense<0.000000e+00> : vector<5xf32>
    %165 = vector.multi_reduction <add>, %160, %cst_67 [1] : vector<5x64xf32> to vector<5xf32>
    %166 = vector.shape_cast %165 : vector<5xf32> to vector<5x1xf32>
    %cst_68 = arith.constant 6.400000e+01 : f32
    %167 = vector.broadcast %cst_68 : f32 to vector<5x1xf32>
    %168 = arith.divf %166, %167 : vector<5x1xf32>
    %169 = vector.broadcast %168 : vector<5x1xf32> to vector<5x64xf32>
    %170 = arith.subf %160, %169 : vector<5x64xf32>
    %171 = arith.mulf %170, %170 : vector<5x64xf32>
    %cst_69 = arith.constant dense<0.000000e+00> : vector<5xf32>
    %172 = vector.multi_reduction <add>, %171, %cst_69 [1] : vector<5x64xf32> to vector<5xf32>
    %173 = vector.shape_cast %172 : vector<5xf32> to vector<5x1xf32>
    %cst_70 = arith.constant 6.400000e+01 : f32
    %174 = vector.broadcast %cst_70 : f32 to vector<5x1xf32>
    %175 = arith.divf %173, %174 : vector<5x1xf32>
    %176 = vector.broadcast %168 : vector<5x1xf32> to vector<5x64xf32>
    %177 = arith.subf %160, %176 : vector<5x64xf32>
    %cst_71 = arith.constant 9.99999974E-6 : f32
    %178 = vector.broadcast %cst_71 : f32 to vector<5x1xf32>
    %179 = arith.addf %175, %178 : vector<5x1xf32>
    %180 = math.rsqrt %179 : vector<5x1xf32>
    %181 = vector.broadcast %180 : vector<5x1xf32> to vector<5x64xf32>
    %182 = arith.mulf %177, %181 : vector<5x64xf32>
    %183 = vector.broadcast %162 : vector<1x64xf32> to vector<5x64xf32>
    %184 = arith.mulf %182, %183 : vector<5x64xf32>
    %185 = vector.broadcast %164 : vector<1x64xf32> to vector<5x64xf32>
    %186 = arith.addf %184, %185 : vector<5x64xf32>
    %c0_72 = arith.constant 0 : index
    %c0_73 = arith.constant 0 : index
    %c0_74 = arith.constant 0 : index
    %187 = vector.load %arg14[%c0_72, %c0_73, %c0_74] : memref<2x64x256xbf16, #tpu.memory_space<vmem>>, vector<1x64x256xbf16>
    %188 = vector.shape_cast %187 : vector<1x64x256xbf16> to vector<64x256xbf16>
    %c0_75 = arith.constant 0 : index
    %c0_76 = arith.constant 0 : index
    %c0_77 = arith.constant 0 : index
    %189 = vector.load %arg15[%c0_75, %c0_76, %c0_77] : memref<2x1x256xf32, #tpu.memory_space<vmem>>, vector<1x1x256xf32>
    %190 = vector.shape_cast %189 : vector<1x1x256xf32> to vector<1x256xf32>
    %191 = arith.truncf %186 : vector<5x64xf32> to vector<5x64xbf16>
    %cst_78 = arith.constant dense<0.000000e+00> : vector<5x256xf32>
    %192 = tpu.matmul %191, %188, %cst_78 {dimension_numbers = #tpu.dot_dimension_numbers<[1], [0], [0], [1], [0, 0, 1, 1], [], []>} : vector<5x64xbf16>, vector<64x256xbf16>, vector<5x256xf32> -> vector<5x256xf32>
    %193 = vector.broadcast %190 : vector<1x256xf32> to vector<5x256xf32>
    %194 = arith.addf %192, %193 : vector<5x256xf32>
    %cst_79 = arith.constant 1.702000e+00 : f32
    %195 = vector.broadcast %cst_79 : f32 to vector<5x256xf32>
    %196 = arith.mulf %195, %194 : vector<5x256xf32>
    %197 = arith.negf %196 : vector<5x256xf32>
    %198 = math.exp %197 : vector<5x256xf32>
    %cst_80 = arith.constant 1.000000e+00 : f32
    %199 = vector.broadcast %cst_80 : f32 to vector<5x256xf32>
    %200 = arith.addf %199, %198 : vector<5x256xf32>
    %201 = arith.divf %199, %200 : vector<5x256xf32>
    %202 = arith.mulf %194, %201 : vector<5x256xf32>
    %c0_81 = arith.constant 0 : index
    %c0_82 = arith.constant 0 : index
    %c0_83 = arith.constant 0 : index
    %203 = vector.load %arg16[%c0_81, %c0_82, %c0_83] : memref<2x256x64xbf16, #tpu.memory_space<vmem>>, vector<1x256x64xbf16>
    %204 = vector.shape_cast %203 : vector<1x256x64xbf16> to vector<256x64xbf16>
    %c0_84 = arith.constant 0 : index
    %c0_85 = arith.constant 0 : index
    %c0_86 = arith.constant 0 : index
    %205 = vector.load %arg17[%c0_84, %c0_85, %c0_86] : memref<2x1x64xf32, #tpu.memory_space<vmem>>, vector<1x1x64xf32>
    %206 = vector.shape_cast %205 : vector<1x1x64xf32> to vector<1x64xf32>
    %207 = arith.truncf %202 : vector<5x256xf32> to vector<5x256xbf16>
    %cst_87 = arith.constant dense<0.000000e+00> : vector<5x64xf32>
    %208 = tpu.matmul %207, %204, %cst_87 {dimension_numbers = #tpu.dot_dimension_numbers<[1], [0], [0], [1], [0, 0, 1, 1], [], []>} : vector<5x256xbf16>, vector<256x64xbf16>, vector<5x64xf32> -> vector<5x64xf32>
    %209 = vector.broadcast %206 : vector<1x64xf32> to vector<5x64xf32>
    %210 = arith.addf %208, %209 : vector<5x64xf32>
    %211 = arith.addf %160, %210 : vector<5x64xf32>
    %c1 = arith.constant 1 : index
    %c0_88 = arith.constant 0 : index
    %c0_89 = arith.constant 0 : index
    %212 = vector.load %arg6[%c1, %c0_88, %c0_89] : memref<2x1x64xf32, #tpu.memory_space<vmem>>, vector<1x1x64xf32>
    %213 = vector.shape_cast %212 : vector<1x1x64xf32> to vector<1x64xf32>
    %c1_90 = arith.constant 1 : index
    %c0_91 = arith.constant 0 : index
    %c0_92 = arith.constant 0 : index
    %214 = vector.load %arg7[%c1_90, %c0_91, %c0_92] : memref<2x1x64xf32, #tpu.memory_space<vmem>>, vector<1x1x64xf32>
    %215 = vector.shape_cast %214 : vector<1x1x64xf32> to vector<1x64xf32>
    %cst_93 = arith.constant dense<0.000000e+00> : vector<5xf32>
    %216 = vector.multi_reduction <add>, %211, %cst_93 [1] : vector<5x64xf32> to vector<5xf32>
    %217 = vector.shape_cast %216 : vector<5xf32> to vector<5x1xf32>
    %cst_94 = arith.constant 6.400000e+01 : f32
    %218 = vector.broadcast %cst_94 : f32 to vector<5x1xf32>
    %219 = arith.divf %217, %218 : vector<5x1xf32>
    %220 = vector.broadcast %219 : vector<5x1xf32> to vector<5x64xf32>
    %221 = arith.subf %211, %220 : vector<5x64xf32>
    %222 = arith.mulf %221, %221 : vector<5x64xf32>
    %cst_95 = arith.constant dense<0.000000e+00> : vector<5xf32>
    %223 = vector.multi_reduction <add>, %222, %cst_95 [1] : vector<5x64xf32> to vector<5xf32>
    %224 = vector.shape_cast %223 : vector<5xf32> to vector<5x1xf32>
    %cst_96 = arith.constant 6.400000e+01 : f32
    %225 = vector.broadcast %cst_96 : f32 to vector<5x1xf32>
    %226 = arith.divf %224, %225 : vector<5x1xf32>
    %227 = vector.broadcast %219 : vector<5x1xf32> to vector<5x64xf32>
    %228 = arith.subf %211, %227 : vector<5x64xf32>
    %cst_97 = arith.constant 9.99999974E-6 : f32
    %229 = vector.broadcast %cst_97 : f32 to vector<5x1xf32>
    %230 = arith.addf %226, %229 : vector<5x1xf32>
    %231 = math.rsqrt %230 : vector<5x1xf32>
    %232 = vector.broadcast %231 : vector<5x1xf32> to vector<5x64xf32>
    %233 = arith.mulf %228, %232 : vector<5x64xf32>
    %234 = vector.broadcast %213 : vector<1x64xf32> to vector<5x64xf32>
    %235 = arith.mulf %233, %234 : vector<5x64xf32>
    %236 = vector.broadcast %215 : vector<1x64xf32> to vector<5x64xf32>
    %237 = arith.addf %235, %236 : vector<5x64xf32>
    %c1_98 = arith.constant 1 : index
    %c0_99 = arith.constant 0 : index
    %c0_100 = arith.constant 0 : index
    %238 = vector.load %arg8[%c1_98, %c0_99, %c0_100] : memref<2x64x192xbf16, #tpu.memory_space<vmem>>, vector<1x64x192xbf16>
    %239 = vector.shape_cast %238 : vector<1x64x192xbf16> to vector<64x192xbf16>
    %c1_101 = arith.constant 1 : index
    %c0_102 = arith.constant 0 : index
    %c0_103 = arith.constant 0 : index
    %240 = vector.load %arg9[%c1_101, %c0_102, %c0_103] : memref<2x1x192xf32, #tpu.memory_space<vmem>>, vector<1x1x192xf32>
    %241 = vector.shape_cast %240 : vector<1x1x192xf32> to vector<1x192xf32>
    %242 = arith.truncf %237 : vector<5x64xf32> to vector<5x64xbf16>
    %cst_104 = arith.constant dense<0.000000e+00> : vector<5x192xf32>
    %243 = tpu.matmul %242, %239, %cst_104 {dimension_numbers = #tpu.dot_dimension_numbers<[1], [0], [0], [1], [0, 0, 1, 1], [], []>} : vector<5x64xbf16>, vector<64x192xbf16>, vector<5x192xf32> -> vector<5x192xf32>
    %244 = vector.broadcast %241 : vector<1x192xf32> to vector<5x192xf32>
    %245 = arith.addf %243, %244 : vector<5x192xf32>
    %246 = vector.extract_strided_slice %245 {offsets = [0, 0], sizes = [5, 64], strides = [1, 1]} : vector<5x192xf32> to vector<5x64xf32>
    %cst_105 = arith.constant 2.500000e-01 : f32
    %247 = vector.broadcast %cst_105 : f32 to vector<5x64xf32>
    %248 = arith.mulf %246, %247 : vector<5x64xf32>
    %249 = arith.truncf %248 : vector<5x64xf32> to vector<5x64xbf16>
    %250 = vector.extract_strided_slice %245 {offsets = [0, 64], sizes = [5, 64], strides = [1, 1]} : vector<5x192xf32> to vector<5x64xf32>
    %251 = arith.truncf %250 : vector<5x64xf32> to vector<5x64xbf16>
    %252 = vector.extract_strided_slice %245 {offsets = [0, 128], sizes = [5, 64], strides = [1, 1]} : vector<5x192xf32> to vector<5x64xf32>
    %253 = arith.truncf %252 : vector<5x64xf32> to vector<5x64xbf16>
    %c1_106 = arith.constant 1 : index
    %c0_107 = arith.constant 0 : index
    %c0_108 = arith.constant 0 : index
    %254 = vector.load %arg10[%c1_106, %c0_107, %c0_108] : memref<2x64x64xbf16, #tpu.memory_space<vmem>>, vector<1x64x64xbf16>
    %255 = vector.shape_cast %254 : vector<1x64x64xbf16> to vector<64x64xbf16>
    %cst_109 = arith.constant 0.000000e+00 : f32
    %256 = vector.broadcast %cst_109 : f32 to vector<5x64xf32>
    %257 = vector.extract_strided_slice %249 {offsets = [0, 0], sizes = [5, 16], strides = [1, 1]} : vector<5x64xbf16> to vector<5x16xbf16>
    %258 = vector.extract_strided_slice %251 {offsets = [0, 0], sizes = [5, 16], strides = [1, 1]} : vector<5x64xbf16> to vector<5x16xbf16>
    %259 = vector.extract_strided_slice %253 {offsets = [0, 0], sizes = [5, 16], strides = [1, 1]} : vector<5x64xbf16> to vector<5x16xbf16>
    "tpu.trace_start"() <{level = 10 : i32, message = "qd,kd->qk"}> : () -> ()
    %cst_110 = arith.constant dense<0.000000e+00> : vector<5x5xf32>
    %260 = tpu.matmul %257, %258, %cst_110 {dimension_numbers = #tpu.dot_dimension_numbers<[1], [1], [0], [0], [0, 0, 1, 0], [], []>} : vector<5x16xbf16>, vector<5x16xbf16>, vector<5x5xf32> -> vector<5x5xf32>
    "tpu.trace_stop"() : () -> ()
    %cst_111 = arith.constant dense<0xFF800000> : vector<5xf32>
    %261 = vector.multi_reduction <maximumf>, %260, %cst_111 [1] : vector<5x5xf32> to vector<5xf32>
    %262 = vector.shape_cast %261 : vector<5xf32> to vector<5x1xf32>
    %263 = vector.broadcast %262 : vector<5x1xf32> to vector<5x5xf32>
    %264 = arith.subf %260, %263 : vector<5x5xf32>
    %265 = math.exp %264 : vector<5x5xf32>
    %cst_112 = arith.constant dense<0.000000e+00> : vector<5xf32>
    %266 = vector.multi_reduction <add>, %265, %cst_112 [1] : vector<5x5xf32> to vector<5xf32>
    %267 = vector.shape_cast %266 : vector<5xf32> to vector<5x1xf32>
    %268 = tpu.reciprocal %267 {approx = true} : vector<5x1xf32> -> vector<5x1xf32>
    %269 = vector.broadcast %268 : vector<5x1xf32> to vector<5x5xf32>
    %270 = arith.mulf %265, %269 : vector<5x5xf32>
    %271 = arith.truncf %270 : vector<5x5xf32> to vector<5x5xbf16>
    %cst_113 = arith.constant dense<0.000000e+00> : vector<5x16xf32>
    %272 = tpu.matmul %271, %259, %cst_113 {dimension_numbers = #tpu.dot_dimension_numbers<[1], [0], [0], [1], [0, 0, 1, 1], [], []>} : vector<5x5xbf16>, vector<5x16xbf16>, vector<5x16xf32> -> vector<5x16xf32>
    %273 = arith.truncf %272 : vector<5x16xf32> to vector<5x16xbf16>
    %274 = vector.extract_strided_slice %255 {offsets = [0, 0], sizes = [16, 64], strides = [1, 1]} : vector<64x64xbf16> to vector<16x64xbf16>
    %cst_114 = arith.constant dense<0.000000e+00> : vector<5x64xf32>
    %275 = tpu.matmul %273, %274, %cst_114 {dimension_numbers = #tpu.dot_dimension_numbers<[1], [0], [0], [1], [0, 0, 1, 1], [], []>} : vector<5x16xbf16>, vector<16x64xbf16>, vector<5x64xf32> -> vector<5x64xf32>
    %276 = arith.addf %256, %275 : vector<5x64xf32>
    %277 = vector.extract_strided_slice %249 {offsets = [0, 16], sizes = [5, 16], strides = [1, 1]} : vector<5x64xbf16> to vector<5x16xbf16>
    %278 = vector.extract_strided_slice %251 {offsets = [0, 16], sizes = [5, 16], strides = [1, 1]} : vector<5x64xbf16> to vector<5x16xbf16>
    %279 = vector.extract_strided_slice %253 {offsets = [0, 16], sizes = [5, 16], strides = [1, 1]} : vector<5x64xbf16> to vector<5x16xbf16>
    "tpu.trace_start"() <{level = 10 : i32, message = "qd,kd->qk"}> : () -> ()
    %cst_115 = arith.constant dense<0.000000e+00> : vector<5x5xf32>
    %280 = tpu.matmul %277, %278, %cst_115 {dimension_numbers = #tpu.dot_dimension_numbers<[1], [1], [0], [0], [0, 0, 1, 0], [], []>} : vector<5x16xbf16>, vector<5x16xbf16>, vector<5x5xf32> -> vector<5x5xf32>
    "tpu.trace_stop"() : () -> ()
    %cst_116 = arith.constant dense<0xFF800000> : vector<5xf32>
    %281 = vector.multi_reduction <maximumf>, %280, %cst_116 [1] : vector<5x5xf32> to vector<5xf32>
    %282 = vector.shape_cast %281 : vector<5xf32> to vector<5x1xf32>
    %283 = vector.broadcast %282 : vector<5x1xf32> to vector<5x5xf32>
    %284 = arith.subf %280, %283 : vector<5x5xf32>
    %285 = math.exp %284 : vector<5x5xf32>
    %cst_117 = arith.constant dense<0.000000e+00> : vector<5xf32>
    %286 = vector.multi_reduction <add>, %285, %cst_117 [1] : vector<5x5xf32> to vector<5xf32>
    %287 = vector.shape_cast %286 : vector<5xf32> to vector<5x1xf32>
    %288 = tpu.reciprocal %287 {approx = true} : vector<5x1xf32> -> vector<5x1xf32>
    %289 = vector.broadcast %288 : vector<5x1xf32> to vector<5x5xf32>
    %290 = arith.mulf %285, %289 : vector<5x5xf32>
    %291 = arith.truncf %290 : vector<5x5xf32> to vector<5x5xbf16>
    %cst_118 = arith.constant dense<0.000000e+00> : vector<5x16xf32>
    %292 = tpu.matmul %291, %279, %cst_118 {dimension_numbers = #tpu.dot_dimension_numbers<[1], [0], [0], [1], [0, 0, 1, 1], [], []>} : vector<5x5xbf16>, vector<5x16xbf16>, vector<5x16xf32> -> vector<5x16xf32>
    %293 = arith.truncf %292 : vector<5x16xf32> to vector<5x16xbf16>
    %294 = vector.extract_strided_slice %255 {offsets = [16, 0], sizes = [16, 64], strides = [1, 1]} : vector<64x64xbf16> to vector<16x64xbf16>
    %cst_119 = arith.constant dense<0.000000e+00> : vector<5x64xf32>
    %295 = tpu.matmul %293, %294, %cst_119 {dimension_numbers = #tpu.dot_dimension_numbers<[1], [0], [0], [1], [0, 0, 1, 1], [], []>} : vector<5x16xbf16>, vector<16x64xbf16>, vector<5x64xf32> -> vector<5x64xf32>
    %296 = arith.addf %276, %295 : vector<5x64xf32>
    %297 = vector.extract_strided_slice %249 {offsets = [0, 32], sizes = [5, 16], strides = [1, 1]} : vector<5x64xbf16> to vector<5x16xbf16>
    %298 = vector.extract_strided_slice %251 {offsets = [0, 32], sizes = [5, 16], strides = [1, 1]} : vector<5x64xbf16> to vector<5x16xbf16>
    %299 = vector.extract_strided_slice %253 {offsets = [0, 32], sizes = [5, 16], strides = [1, 1]} : vector<5x64xbf16> to vector<5x16xbf16>
    "tpu.trace_start"() <{level = 10 : i32, message = "qd,kd->qk"}> : () -> ()
    %cst_120 = arith.constant dense<0.000000e+00> : vector<5x5xf32>
    %300 = tpu.matmul %297, %298, %cst_120 {dimension_numbers = #tpu.dot_dimension_numbers<[1], [1], [0], [0], [0, 0, 1, 0], [], []>} : vector<5x16xbf16>, vector<5x16xbf16>, vector<5x5xf32> -> vector<5x5xf32>
    "tpu.trace_stop"() : () -> ()
    %cst_121 = arith.constant dense<0xFF800000> : vector<5xf32>
    %301 = vector.multi_reduction <maximumf>, %300, %cst_121 [1] : vector<5x5xf32> to vector<5xf32>
    %302 = vector.shape_cast %301 : vector<5xf32> to vector<5x1xf32>
    %303 = vector.broadcast %302 : vector<5x1xf32> to vector<5x5xf32>
    %304 = arith.subf %300, %303 : vector<5x5xf32>
    %305 = math.exp %304 : vector<5x5xf32>
    %cst_122 = arith.constant dense<0.000000e+00> : vector<5xf32>
    %306 = vector.multi_reduction <add>, %305, %cst_122 [1] : vector<5x5xf32> to vector<5xf32>
    %307 = vector.shape_cast %306 : vector<5xf32> to vector<5x1xf32>
    %308 = tpu.reciprocal %307 {approx = true} : vector<5x1xf32> -> vector<5x1xf32>
    %309 = vector.broadcast %308 : vector<5x1xf32> to vector<5x5xf32>
    %310 = arith.mulf %305, %309 : vector<5x5xf32>
    %311 = arith.truncf %310 : vector<5x5xf32> to vector<5x5xbf16>
    %cst_123 = arith.constant dense<0.000000e+00> : vector<5x16xf32>
    %312 = tpu.matmul %311, %299, %cst_123 {dimension_numbers = #tpu.dot_dimension_numbers<[1], [0], [0], [1], [0, 0, 1, 1], [], []>} : vector<5x5xbf16>, vector<5x16xbf16>, vector<5x16xf32> -> vector<5x16xf32>
    %313 = arith.truncf %312 : vector<5x16xf32> to vector<5x16xbf16>
    %314 = vector.extract_strided_slice %255 {offsets = [32, 0], sizes = [16, 64], strides = [1, 1]} : vector<64x64xbf16> to vector<16x64xbf16>
    %cst_124 = arith.constant dense<0.000000e+00> : vector<5x64xf32>
    %315 = tpu.matmul %313, %314, %cst_124 {dimension_numbers = #tpu.dot_dimension_numbers<[1], [0], [0], [1], [0, 0, 1, 1], [], []>} : vector<5x16xbf16>, vector<16x64xbf16>, vector<5x64xf32> -> vector<5x64xf32>
    %316 = arith.addf %296, %315 : vector<5x64xf32>
    %317 = vector.extract_strided_slice %249 {offsets = [0, 48], sizes = [5, 16], strides = [1, 1]} : vector<5x64xbf16> to vector<5x16xbf16>
    %318 = vector.extract_strided_slice %251 {offsets = [0, 48], sizes = [5, 16], strides = [1, 1]} : vector<5x64xbf16> to vector<5x16xbf16>
    %319 = vector.extract_strided_slice %253 {offsets = [0, 48], sizes = [5, 16], strides = [1, 1]} : vector<5x64xbf16> to vector<5x16xbf16>
    "tpu.trace_start"() <{level = 10 : i32, message = "qd,kd->qk"}> : () -> ()
    %cst_125 = arith.constant dense<0.000000e+00> : vector<5x5xf32>
    %320 = tpu.matmul %317, %318, %cst_125 {dimension_numbers = #tpu.dot_dimension_numbers<[1], [1], [0], [0], [0, 0, 1, 0], [], []>} : vector<5x16xbf16>, vector<5x16xbf16>, vector<5x5xf32> -> vector<5x5xf32>
    "tpu.trace_stop"() : () -> ()
    %cst_126 = arith.constant dense<0xFF800000> : vector<5xf32>
    %321 = vector.multi_reduction <maximumf>, %320, %cst_126 [1] : vector<5x5xf32> to vector<5xf32>
    %322 = vector.shape_cast %321 : vector<5xf32> to vector<5x1xf32>
    %323 = vector.broadcast %322 : vector<5x1xf32> to vector<5x5xf32>
    %324 = arith.subf %320, %323 : vector<5x5xf32>
    %325 = math.exp %324 : vector<5x5xf32>
    %cst_127 = arith.constant dense<0.000000e+00> : vector<5xf32>
    %326 = vector.multi_reduction <add>, %325, %cst_127 [1] : vector<5x5xf32> to vector<5xf32>
    %327 = vector.shape_cast %326 : vector<5xf32> to vector<5x1xf32>
    %328 = tpu.reciprocal %327 {approx = true} : vector<5x1xf32> -> vector<5x1xf32>
    %329 = vector.broadcast %328 : vector<5x1xf32> to vector<5x5xf32>
    %330 = arith.mulf %325, %329 : vector<5x5xf32>
    %331 = arith.truncf %330 : vector<5x5xf32> to vector<5x5xbf16>
    %cst_128 = arith.constant dense<0.000000e+00> : vector<5x16xf32>
    %332 = tpu.matmul %331, %319, %cst_128 {dimension_numbers = #tpu.dot_dimension_numbers<[1], [0], [0], [1], [0, 0, 1, 1], [], []>} : vector<5x5xbf16>, vector<5x16xbf16>, vector<5x16xf32> -> vector<5x16xf32>
    %333 = arith.truncf %332 : vector<5x16xf32> to vector<5x16xbf16>
    %334 = vector.extract_strided_slice %255 {offsets = [48, 0], sizes = [16, 64], strides = [1, 1]} : vector<64x64xbf16> to vector<16x64xbf16>
    %cst_129 = arith.constant dense<0.000000e+00> : vector<5x64xf32>
    %335 = tpu.matmul %333, %334, %cst_129 {dimension_numbers = #tpu.dot_dimension_numbers<[1], [0], [0], [1], [0, 0, 1, 1], [], []>} : vector<5x16xbf16>, vector<16x64xbf16>, vector<5x64xf32> -> vector<5x64xf32>
    %336 = arith.addf %316, %335 : vector<5x64xf32>
    %337 = arith.addf %211, %336 : vector<5x64xf32>
    %c1_130 = arith.constant 1 : index
    %c0_131 = arith.constant 0 : index
    %c0_132 = arith.constant 0 : index
    %338 = vector.load %arg11[%c1_130, %c0_131, %c0_132] : memref<2x1x64xf32, #tpu.memory_space<vmem>>, vector<1x1x64xf32>
    %339 = vector.shape_cast %338 : vector<1x1x64xf32> to vector<1x64xf32>
    %340 = vector.broadcast %339 : vector<1x64xf32> to vector<5x64xf32>
    %341 = arith.addf %337, %340 : vector<5x64xf32>
    %c1_133 = arith.constant 1 : index
    %c0_134 = arith.constant 0 : index
    %c0_135 = arith.constant 0 : index
    %342 = vector.load %arg12[%c1_133, %c0_134, %c0_135] : memref<2x1x64xf32, #tpu.memory_space<vmem>>, vector<1x1x64xf32>
    %343 = vector.shape_cast %342 : vector<1x1x64xf32> to vector<1x64xf32>
    %c1_136 = arith.constant 1 : index
    %c0_137 = arith.constant 0 : index
    %c0_138 = arith.constant 0 : index
    %344 = vector.load %arg13[%c1_136, %c0_137, %c0_138] : memref<2x1x64xf32, #tpu.memory_space<vmem>>, vector<1x1x64xf32>
    %345 = vector.shape_cast %344 : vector<1x1x64xf32> to vector<1x64xf32>
    %cst_139 = arith.constant dense<0.000000e+00> : vector<5xf32>
    %346 = vector.multi_reduction <add>, %341, %cst_139 [1] : vector<5x64xf32> to vector<5xf32>
    %347 = vector.shape_cast %346 : vector<5xf32> to vector<5x1xf32>
    %cst_140 = arith.constant 6.400000e+01 : f32
    %348 = vector.broadcast %cst_140 : f32 to vector<5x1xf32>
    %349 = arith.divf %347, %348 : vector<5x1xf32>
    %350 = vector.broadcast %349 : vector<5x1xf32> to vector<5x64xf32>
    %351 = arith.subf %341, %350 : vector<5x64xf32>
    %352 = arith.mulf %351, %351 : vector<5x64xf32>
    %cst_141 = arith.constant dense<0.000000e+00> : vector<5xf32>
    %353 = vector.multi_reduction <add>, %352, %cst_141 [1] : vector<5x64xf32> to vector<5xf32>
    %354 = vector.shape_cast %353 : vector<5xf32> to vector<5x1xf32>
    %cst_142 = arith.constant 6.400000e+01 : f32
    %355 = vector.broadcast %cst_142 : f32 to vector<5x1xf32>
    %356 = arith.divf %354, %355 : vector<5x1xf32>
    %357 = vector.broadcast %349 : vector<5x1xf32> to vector<5x64xf32>
    %358 = arith.subf %341, %357 : vector<5x64xf32>
    %cst_143 = arith.constant 9.99999974E-6 : f32
    %359 = vector.broadcast %cst_143 : f32 to vector<5x1xf32>
    %360 = arith.addf %356, %359 : vector<5x1xf32>
    %361 = math.rsqrt %360 : vector<5x1xf32>
    %362 = vector.broadcast %361 : vector<5x1xf32> to vector<5x64xf32>
    %363 = arith.mulf %358, %362 : vector<5x64xf32>
    %364 = vector.broadcast %343 : vector<1x64xf32> to vector<5x64xf32>
    %365 = arith.mulf %363, %364 : vector<5x64xf32>
    %366 = vector.broadcast %345 : vector<1x64xf32> to vector<5x64xf32>
    %367 = arith.addf %365, %366 : vector<5x64xf32>
    %c1_144 = arith.constant 1 : index
    %c0_145 = arith.constant 0 : index
    %c0_146 = arith.constant 0 : index
    %368 = vector.load %arg14[%c1_144, %c0_145, %c0_146] : memref<2x64x256xbf16, #tpu.memory_space<vmem>>, vector<1x64x256xbf16>
    %369 = vector.shape_cast %368 : vector<1x64x256xbf16> to vector<64x256xbf16>
    %c1_147 = arith.constant 1 : index
    %c0_148 = arith.constant 0 : index
    %c0_149 = arith.constant 0 : index
    %370 = vector.load %arg15[%c1_147, %c0_148, %c0_149] : memref<2x1x256xf32, #tpu.memory_space<vmem>>, vector<1x1x256xf32>
    %371 = vector.shape_cast %370 : vector<1x1x256xf32> to vector<1x256xf32>
    %372 = arith.truncf %367 : vector<5x64xf32> to vector<5x64xbf16>
    %cst_150 = arith.constant dense<0.000000e+00> : vector<5x256xf32>
    %373 = tpu.matmul %372, %369, %cst_150 {dimension_numbers = #tpu.dot_dimension_numbers<[1], [0], [0], [1], [0, 0, 1, 1], [], []>} : vector<5x64xbf16>, vector<64x256xbf16>, vector<5x256xf32> -> vector<5x256xf32>
    %374 = vector.broadcast %371 : vector<1x256xf32> to vector<5x256xf32>
    %375 = arith.addf %373, %374 : vector<5x256xf32>
    %cst_151 = arith.constant 1.702000e+00 : f32
    %376 = vector.broadcast %cst_151 : f32 to vector<5x256xf32>
    %377 = arith.mulf %376, %375 : vector<5x256xf32>
    %378 = arith.negf %377 : vector<5x256xf32>
    %379 = math.exp %378 : vector<5x256xf32>
    %cst_152 = arith.constant 1.000000e+00 : f32
    %380 = vector.broadcast %cst_152 : f32 to vector<5x256xf32>
    %381 = arith.addf %380, %379 : vector<5x256xf32>
    %382 = arith.divf %380, %381 : vector<5x256xf32>
    %383 = arith.mulf %375, %382 : vector<5x256xf32>
    %c1_153 = arith.constant 1 : index
    %c0_154 = arith.constant 0 : index
    %c0_155 = arith.constant 0 : index
    %384 = vector.load %arg16[%c1_153, %c0_154, %c0_155] : memref<2x256x64xbf16, #tpu.memory_space<vmem>>, vector<1x256x64xbf16>
    %385 = vector.shape_cast %384 : vector<1x256x64xbf16> to vector<256x64xbf16>
    %c1_156 = arith.constant 1 : index
    %c0_157 = arith.constant 0 : index
    %c0_158 = arith.constant 0 : index
    %386 = vector.load %arg17[%c1_156, %c0_157, %c0_158] : memref<2x1x64xf32, #tpu.memory_space<vmem>>, vector<1x1x64xf32>
    %387 = vector.shape_cast %386 : vector<1x1x64xf32> to vector<1x64xf32>
    %388 = arith.truncf %383 : vector<5x256xf32> to vector<5x256xbf16>
    %cst_159 = arith.constant dense<0.000000e+00> : vector<5x64xf32>
    %389 = tpu.matmul %388, %385, %cst_159 {dimension_numbers = #tpu.dot_dimension_numbers<[1], [0], [0], [1], [0, 0, 1, 1], [], []>} : vector<5x256xbf16>, vector<256x64xbf16>, vector<5x64xf32> -> vector<5x64xf32>
    %390 = vector.broadcast %387 : vector<1x64xf32> to vector<5x64xf32>
    %391 = arith.addf %389, %390 : vector<5x64xf32>
    %392 = arith.addf %341, %391 : vector<5x64xf32>
    %393 = vector.extract_strided_slice %392 {offsets = [0, 0], sizes = [1, 64], strides = [1, 1]} : vector<5x64xf32> to vector<1x64xf32>
    %c0_160 = arith.constant 0 : index
    %c0_161 = arith.constant 0 : index
    %394 = vector.load %arg18[%c0_160, %c0_161] : memref<1x64xf32, #tpu.memory_space<vmem>>, vector<1x64xf32>
    %c0_162 = arith.constant 0 : index
    %c0_163 = arith.constant 0 : index
    %395 = vector.load %arg19[%c0_162, %c0_163] : memref<1x64xf32, #tpu.memory_space<vmem>>, vector<1x64xf32>
    %cst_164 = arith.constant dense<0.000000e+00> : vector<1xf32>
    %396 = vector.multi_reduction <add>, %393, %cst_164 [1] : vector<1x64xf32> to vector<1xf32>
    %397 = vector.shape_cast %396 : vector<1xf32> to vector<1x1xf32>
    %cst_165 = arith.constant 6.400000e+01 : f32
    %398 = vector.broadcast %cst_165 : f32 to vector<1x1xf32>
    %399 = arith.divf %397, %398 : vector<1x1xf32>
    %400 = vector.broadcast %399 : vector<1x1xf32> to vector<1x64xf32>
    %401 = arith.subf %393, %400 : vector<1x64xf32>
    %402 = arith.mulf %401, %401 : vector<1x64xf32>
    %cst_166 = arith.constant dense<0.000000e+00> : vector<1xf32>
    %403 = vector.multi_reduction <add>, %402, %cst_166 [1] : vector<1x64xf32> to vector<1xf32>
    %404 = vector.shape_cast %403 : vector<1xf32> to vector<1x1xf32>
    %cst_167 = arith.constant 6.400000e+01 : f32
    %405 = vector.broadcast %cst_167 : f32 to vector<1x1xf32>
    %406 = arith.divf %404, %405 : vector<1x1xf32>
    %407 = vector.broadcast %399 : vector<1x1xf32> to vector<1x64xf32>
    %408 = arith.subf %393, %407 : vector<1x64xf32>
    %cst_168 = arith.constant 9.99999974E-6 : f32
    %409 = vector.broadcast %cst_168 : f32 to vector<1x1xf32>
    %410 = arith.addf %406, %409 : vector<1x1xf32>
    %411 = math.rsqrt %410 : vector<1x1xf32>
    %412 = vector.broadcast %411 : vector<1x1xf32> to vector<1x64xf32>
    %413 = arith.mulf %408, %412 : vector<1x64xf32>
    %414 = arith.mulf %413, %394 : vector<1x64xf32>
    %415 = arith.addf %414, %395 : vector<1x64xf32>
    %c0_169 = arith.constant 0 : index
    %c0_170 = arith.constant 0 : index
    %416 = vector.load %arg20[%c0_169, %c0_170] : memref<64x512xbf16, #tpu.memory_space<vmem>>, vector<64x512xbf16>
    %417 = arith.truncf %415 : vector<1x64xf32> to vector<1x64xbf16>
    %cst_171 = arith.constant dense<0.000000e+00> : vector<1x512xf32>
    %418 = tpu.matmul %417, %416, %cst_171 {dimension_numbers = #tpu.dot_dimension_numbers<[1], [0], [0], [1], [0, 0, 1, 1], [], []>} : vector<1x64xbf16>, vector<64x512xbf16>, vector<1x512xf32> -> vector<1x512xf32>
    %c0_172 = arith.constant 0 : index
    %c0_173 = arith.constant 0 : index
    %419 = vector.load %arg21[%c0_172, %c0_173] : memref<512x10xbf16, #tpu.memory_space<vmem>>, vector<512x10xbf16>
    %c0_174 = arith.constant 0 : index
    %c0_175 = arith.constant 0 : index
    %420 = vector.load %arg22[%c0_174, %c0_175] : memref<1x10xf32, #tpu.memory_space<vmem>>, vector<1x10xf32>
    %421 = arith.truncf %418 : vector<1x512xf32> to vector<1x512xbf16>
    %cst_176 = arith.constant dense<0.000000e+00> : vector<1x10xf32>
    %422 = tpu.matmul %421, %419, %cst_176 {dimension_numbers = #tpu.dot_dimension_numbers<[1], [0], [0], [1], [0, 0, 1, 1], [], []>} : vector<1x512xbf16>, vector<512x10xbf16>, vector<1x10xf32> -> vector<1x10xf32>
    %423 = arith.addf %422, %420 : vector<1x10xf32>
    %c0_177 = arith.constant 0 : index
    %c0_178 = arith.constant 0 : index
    %c0_179 = arith.constant 0 : index
    %424 = vector.load %arg23[%c0_177, %c0_178, %c0_179] : memref<1x1x10xf32, #tpu.memory_space<vmem>>, vector<1x1x10xf32>
    %425 = vector.shape_cast %424 : vector<1x1x10xf32> to vector<1x10xf32>
    %426 = vector.shape_cast %423 : vector<1x10xf32> to vector<1x1x10xf32>
    tpu.vector_store %arg23[%c0_177, %c0_178, %c0_179], %426 {strides = array<i32>} : memref<1x1x10xf32, #tpu.memory_space<vmem>>, vector<1x1x10xf32>,
    return
  }
  func.func @transform_0(%arg0: i32) -> (i32, i32, i32) {
    %c0_i32 = arith.constant 0 : i32
    %c0_i32_0 = arith.constant 0 : i32
    %c0_i32_1 = arith.constant 0 : i32
    return %arg0, %c0_i32, %c0_i32_0 : i32, i32, i32
  }
  func.func @transform_1(%arg0: i32) -> (i32, i32) {
    %c0_i32 = arith.constant 0 : i32
    %c0_i32_0 = arith.constant 0 : i32
    %c0_i32_1 = arith.constant 0 : i32
    return %c0_i32, %c0_i32_0 : i32, i32
  }
  func.func @transform_2(%arg0: i32) -> (i32, i32) {
    %c0_i32 = arith.constant 0 : i32
    %c0_i32_0 = arith.constant 0 : i32
    %c0_i32_1 = arith.constant 0 : i32
    return %c0_i32, %c0_i32_0 : i32, i32
  }
  func.func @transform_3(%arg0: i32) -> (i32, i32) {
    %c0_i32 = arith.constant 0 : i32
    %c0_i32_0 = arith.constant 0 : i32
    %c0_i32_1 = arith.constant 0 : i32
    return %c0_i32, %c0_i32_0 : i32, i32
  }
  func.func @transform_4(%arg0: i32) -> (i32, i32) {
    %c0_i32 = arith.constant 0 : i32
    %c0_i32_0 = arith.constant 0 : i32
    %c0_i32_1 = arith.constant 0 : i32
    return %c0_i32, %c0_i32_0 : i32, i32
  }
  func.func @transform_5(%arg0: i32) -> (i32, i32, i32) {
    %c0_i32 = arith.constant 0 : i32
    %c0_i32_0 = arith.constant 0 : i32
    %c0_i32_1 = arith.constant 0 : i32
    %c0_i32_2 = arith.constant 0 : i32
    return %c0_i32, %c0_i32_0, %c0_i32_1 : i32, i32, i32
  }
  func.func @transform_6(%arg0: i32) -> (i32, i32, i32) {
    %c0_i32 = arith.constant 0 : i32
    %c0_i32_0 = arith.constant 0 : i32
    %c0_i32_1 = arith.constant 0 : i32
    %c0_i32_2 = arith.constant 0 : i32
    return %c0_i32, %c0_i32_0, %c0_i32_1 : i32, i32, i32
  }
  func.func @transform_7(%arg0: i32) -> (i32, i32, i32) {
    %c0_i32 = arith.constant 0 : i32
    %c0_i32_0 = arith.constant 0 : i32
    %c0_i32_1 = arith.constant 0 : i32
    %c0_i32_2 = arith.constant 0 : i32
    return %c0_i32, %c0_i32_0, %c0_i32_1 : i32, i32, i32
  }
  func.func @transform_8(%arg0: i32) -> (i32, i32, i32) {
    %c0_i32 = arith.constant 0 : i32
    %c0_i32_0 = arith.constant 0 : i32
    %c0_i32_1 = arith.constant 0 : i32
    %c0_i32_2 = arith.constant 0 : i32
    return %c0_i32, %c0_i32_0, %c0_i32_1 : i32, i32, i32
  }
  func.func @transform_9(%arg0: i32) -> (i32, i32, i32) {
    %c0_i32 = arith.constant 0 : i32
    %c0_i32_0 = arith.constant 0 : i32
    %c0_i32_1 = arith.constant 0 : i32
    %c0_i32_2 = arith.constant 0 : i32
    return %c0_i32, %c0_i32_0, %c0_i32_1 : i32, i32, i32
  }
  func.func @transform_10(%arg0: i32) -> (i32, i32, i32) {
    %c0_i32 = arith.constant 0 : i32
    %c0_i32_0 = arith.constant 0 : i32
    %c0_i32_1 = arith.constant 0 : i32
    %c0_i32_2 = arith.constant 0 : i32
    return %c0_i32, %c0_i32_0, %c0_i32_1 : i32, i32, i32
  }
  func.func @transform_11(%arg0: i32) -> (i32, i32, i32) {
    %c0_i32 = arith.constant 0 : i32
    %c0_i32_0 = arith.constant 0 : i32
    %c0_i32_1 = arith.constant 0 : i32
    %c0_i32_2 = arith.constant 0 : i32
    return %c0_i32, %c0_i32_0, %c0_i32_1 : i32, i32, i32
  }
  func.func @transform_12(%arg0: i32) -> (i32, i32, i32) {
    %c0_i32 = arith.constant 0 : i32
    %c0_i32_0 = arith.constant 0 : i32
    %c0_i32_1 = arith.constant 0 : i32
    %c0_i32_2 = arith.constant 0 : i32
    return %c0_i32, %c0_i32_0, %c0_i32_1 : i32, i32, i32
  }
  func.func @transform_13(%arg0: i32) -> (i32, i32, i32) {
    %c0_i32 = arith.constant 0 : i32
    %c0_i32_0 = arith.constant 0 : i32
    %c0_i32_1 = arith.constant 0 : i32
    %c0_i32_2 = arith.constant 0 : i32
    return %c0_i32, %c0_i32_0, %c0_i32_1 : i32, i32, i32
  }
  func.func @transform_14(%arg0: i32) -> (i32, i32, i32) {
    %c0_i32 = arith.constant 0 : i32
    %c0_i32_0 = arith.constant 0 : i32
    %c0_i32_1 = arith.constant 0 : i32
    %c0_i32_2 = arith.constant 0 : i32
    return %c0_i32, %c0_i32_0, %c0_i32_1 : i32, i32, i32
  }
  func.func @transform_15(%arg0: i32) -> (i32, i32, i32) {
    %c0_i32 = arith.constant 0 : i32
    %c0_i32_0 = arith.constant 0 : i32
    %c0_i32_1 = arith.constant 0 : i32
    %c0_i32_2 = arith.constant 0 : i32
    return %c0_i32, %c0_i32_0, %c0_i32_1 : i32, i32, i32
  }
  func.func @transform_16(%arg0: i32) -> (i32, i32, i32) {
    %c0_i32 = arith.constant 0 : i32
    %c0_i32_0 = arith.constant 0 : i32
    %c0_i32_1 = arith.constant 0 : i32
    %c0_i32_2 = arith.constant 0 : i32
    return %c0_i32, %c0_i32_0, %c0_i32_1 : i32, i32, i32
  }
  func.func @transform_17(%arg0: i32) -> (i32, i32) {
    %c0_i32 = arith.constant 0 : i32
    %c0_i32_0 = arith.constant 0 : i32
    %c0_i32_1 = arith.constant 0 : i32
    return %c0_i32, %c0_i32_0 : i32, i32
  }
  func.func @transform_18(%arg0: i32) -> (i32, i32) {
    %c0_i32 = arith.constant 0 : i32
    %c0_i32_0 = arith.constant 0 : i32
    %c0_i32_1 = arith.constant 0 : i32
    return %c0_i32, %c0_i32_0 : i32, i32
  }
  func.func @transform_19(%arg0: i32) -> (i32, i32) {
    %c0_i32 = arith.constant 0 : i32
    %c0_i32_0 = arith.constant 0 : i32
    %c0_i32_1 = arith.constant 0 : i32
    return %c0_i32, %c0_i32_0 : i32, i32
  }
  func.func @transform_20(%arg0: i32) -> (i32, i32) {
    %c0_i32 = arith.constant 0 : i32
    %c0_i32_0 = arith.constant 0 : i32
    %c0_i32_1 = arith.constant 0 : i32
    return %c0_i32, %c0_i32_0 : i32, i32
  }
  func.func @transform_21(%arg0: i32) -> (i32, i32) {
    %c0_i32 = arith.constant 0 : i32
    %c0_i32_0 = arith.constant 0 : i32
    %c0_i32_1 = arith.constant 0 : i32
    return %c0_i32, %c0_i32_0 : i32, i32
  }
  func.func @transform_22(%arg0: i32) -> (i32, i32, i32) {
    %c0_i32 = arith.constant 0 : i32
    %c0_i32_0 = arith.constant 0 : i32
    %c0_i32_1 = arith.constant 0 : i32
    return %arg0, %c0_i32, %c0_i32_0 : i32, i32, i32
  }
}

</mosaic_0001>

<llo_original>
// kernel: clip_adapter_forward.1
$region0: #{clip_adapter_forward.1}
  #allocation0 [shape = 'u32[]', space=smem, size = 0x4, offset = 0x4, fixed_abs, tag = 'smem constant byte address 0x4 - core index']
  #allocation1 [shape = 'u32[144,128]{1,0:T(1,128)}', space=vmem, size = 0x12000, scoped, tag = 'internal scratch']
  %s0 = inlined_call_operand.vmem [shape: f32[2,5,192], index: 0, kind: input, shape index: {}]
  %s1 = inlined_call_operand.vmem [shape: bf16[192,64], index: 1, kind: input, shape index: {}]
  %s2 = inlined_call_operand.vmem [shape: f32[5,64], index: 2, kind: input, shape index: {}]
  %s3 = inlined_call_operand.vmem [shape: f32[1,64], index: 3, kind: input, shape index: {}]
  %s4 = inlined_call_operand.vmem [shape: f32[1,64], index: 4, kind: input, shape index: {}]
  %s5 = inlined_call_operand.vmem [shape: f32[2,1,64], index: 5, kind: input, shape index: {}]
  %s6 = inlined_call_operand.vmem [shape: f32[2,1,64], index: 6, kind: input, shape index: {}]
  %s7 = inlined_call_operand.vmem [shape: bf16[2,64,192], index: 7, kind: input, shape index: {}]
  %s8 = inlined_call_operand.vmem [shape: f32[2,1,192], index: 8, kind: input, shape index: {}]
  %s9 = inlined_call_operand.vmem [shape: bf16[2,64,64], index: 9, kind: input, shape index: {}]
  %s10 = inlined_call_operand.vmem [shape: f32[2,1,64], index: 10, kind: input, shape index: {}]
  %s11 = inlined_call_operand.vmem [shape: f32[2,1,64], index: 11, kind: input, shape index: {}]
  %s12 = inlined_call_operand.vmem [shape: f32[2,1,64], index: 12, kind: input, shape index: {}]
  %s13 = inlined_call_operand.vmem [shape: bf16[2,64,256], index: 13, kind: input, shape index: {}]
  %s14 = inlined_call_operand.vmem [shape: f32[2,1,256], index: 14, kind: input, shape index: {}]
  %s15 = inlined_call_operand.vmem [shape: bf16[2,256,64], index: 15, kind: input, shape index: {}]
  %s16 = inlined_call_operand.vmem [shape: f32[2,1,64], index: 16, kind: input, shape index: {}]
  %s17 = inlined_call_operand.vmem [shape: f32[1,64], index: 17, kind: input, shape index: {}]
  %s18 = inlined_call_operand.vmem [shape: f32[1,64], index: 18, kind: input, shape index: {}]
  %s19 = inlined_call_operand.vmem [shape: bf16[64,512], index: 19, kind: input, shape index: {}]
  %s20 = inlined_call_operand.vmem [shape: bf16[512,10], index: 20, kind: input, shape index: {}]
  %s21 = inlined_call_operand.vmem [shape: f32[1,10], index: 21, kind: input, shape index: {}]
  %s22 = inlined_call_operand.hbm [shape: f32[2,1,10], index: 22, kind: output, shape index: {}]
  %s23 = sld [smem:[#allocation0]]
  $region121: #{clip_adapter_forward.1} parent=0
    _
  %s25 = ssub.s32 1, %s23
  %s26 = scalar_select 0, %s25, %s23
  $region1: #{clip_adapter_forward.1} parent=0
    #allocation2 [shape = 'u8[1024]{0}', space=vmem, size = 0x400, scoped, tag = 'output window, operand 0']
    #allocation3 [shape = 's32[2]{0}', space=sflag, size = 0x8, scoped, tag = 'scoped memory for clip_adapter_forward.1']
    %27 = vsyncpa [#allocation3], 0
    %s28 = scalar_lea.sflag [#allocation3], 1
    %29 = vsyncpa %s28, 0
    loop: start=0, step=1, limit=4
    $region2: #{clip_adapter_forward.1} parent=1 // loop_pre_header
      _
    $region3: #{clip_adapter_forward.1} parent=1 // loop_header
      %s31 = sphi 0, %s35
      %p32 = scmp.ge.s32.totalorder %s31, 4
      %s41 = sphi 0, %s43
      %s44 = sphi 0, %s41
      %s45 = sphi 0, %s44
      %s61 = sphi 0, %s45
      %s65 = sphi 0, %s65
      %s67 = sphi 0, %s65
      %s68 = sphi 0, %s67
      %s82 = sphi 0, %s68
      %s86 = sphi 0, %s86
      %s88 = sphi 0, %s86
      %s89 = sphi 0, %s88
      %s103 = sphi 0, %s89
      %s107 = sphi 0, %s107
      %s109 = sphi 0, %s107
      %s110 = sphi 0, %s109
      %s124 = sphi 0, %s110
      %s128 = sphi 0, %s128
      %s130 = sphi 0, %s128
      %s131 = sphi 0, %s130
      %s145 = sphi 0, %s131
      %s149 = sphi 0, %s149
      %s151 = sphi 0, %s149
      %s152 = sphi 0, %s151
      %s166 = sphi 0, %s152
      %s170 = sphi 0, %s170
      %s172 = sphi 0, %s170
      %s173 = sphi 0, %s172
      %s187 = sphi 0, %s173
      %s191 = sphi 0, %s191
      %s193 = sphi 0, %s191
      %s194 = sphi 0, %s193
      %s208 = sphi 0, %s194
      %s212 = sphi 0, %s212
      %s214 = sphi 0, %s212
      %s215 = sphi 0, %s214
      %s229 = sphi 0, %s215
      %s233 = sphi 0, %s233
      %s235 = sphi 0, %s233
      %s236 = sphi 0, %s235
      %s250 = sphi 0, %s236
      %s254 = sphi 0, %s254
      %s256 = sphi 0, %s254
      %s257 = sphi 0, %s256
      %s271 = sphi 0, %s257
      %s275 = sphi 0, %s275
      %s277 = sphi 0, %s275
      %s278 = sphi 0, %s277
      %s292 = sphi 0, %s278
      %s296 = sphi 0, %s296
      %s298 = sphi 0, %s296
      %s299 = sphi 0, %s298
      %s313 = sphi 0, %s299
      %s317 = sphi 0, %s317
      %s319 = sphi 0, %s317
      %s320 = sphi 0, %s319
      %s334 = sphi 0, %s320
      %s338 = sphi 0, %s338
      %s340 = sphi 0, %s338
      %s341 = sphi 0, %s340
      %s355 = sphi 0, %s341
      %s359 = sphi 0, %s359
      %s361 = sphi 0, %s359
      %s362 = sphi 0, %s361
      %s376 = sphi 0, %s362
      %s380 = sphi 0, %s380
      %s382 = sphi 0, %s380
      %s383 = sphi 0, %s382
      %s397 = sphi 0, %s383
      %s401 = sphi 0, %s401
      %s403 = sphi 0, %s401
      %s404 = sphi 0, %s403
      %s418 = sphi 0, %s404
      %s422 = sphi 0, %s422
      %s424 = sphi 0, %s422
      %s425 = sphi 0, %s424
      %s439 = sphi 0, %s425
      %s443 = sphi 0, %s443
      %s445 = sphi 0, %s443
      %s446 = sphi 0, %s445
      %s460 = sphi 0, %s446
      %s464 = sphi 0, %s464
      %s466 = sphi 0, %s464
      %s467 = sphi 0, %s466
      %s481 = sphi 0, %s467
      %s485 = sphi 0, %s485
      %s487 = sphi 0, %s485
      %s488 = sphi 0, %s487
      %s502 = sphi 0, %s488
      %s508 = sphi 0, %s510
      %s511 = sphi 0, %s508
      %s512 = sphi 0, %s511
      %s528 = sphi 0, %s512
    $region4: #{clip_adapter_forward.1} parent=1 // loop_header_branch
      %34 = sbr.rel (%p32) target = $region8
    $region5: #{clip_adapter_forward.1} parent=1 // loop_body
      %s36 = ssub.s32 %s31, 1
      %s37 = ssub.s32 %s31, 2
      %s38 = sadd.s32 %s31, 1
      %s39 = ssub.s32 %s31, %s38
      %p40 = scmp.eq.s32.totalorder %s39, 0
      %s42 = sadd.s32 %s41, 1
      %s43 = scalar_select %p40, %s41, %s42
      %p46 = pneg %p40
      %p47 = scmp.eq.s32.totalorder %s31, 1
      %p48 = por %p46, %p47
      %p49 = scmp.ne.s32.totalorder %s41, %s44
      %p50 = scmp.eq.s32.totalorder %s31, 0
      %p51 = por %p49, %p50
      %p52 = scmp.ne.s32.totalorder %s41, %s44
      %p53 = scmp.eq.s32.totalorder %s36, 1
      %p54 = por %p52, %p53
      %p55 = scmp.ne.s32.totalorder %s44, %s45
      %p56 = scmp.eq.s32.totalorder %s36, 0
      %p57 = por %p55, %p56
      %p58 = scmp.ne.s32.totalorder %s44, %s45
      %p59 = scmp.eq.s32.totalorder %s37, 1
      %p60 = por %p58, %p59
      %p62 = scmp.ne.s32.totalorder %s45, %s61
      %p63 = scmp.eq.s32.totalorder %s37, 0
      %p64 = por %p62, %p63
      %s66 = sadd.s32 %s65, 1
      %p69 = scmp.eq.s32.totalorder %s31, 1
      %p70 = scmp.ne.s32.totalorder %s65, %s67
      %p71 = scmp.eq.s32.totalorder %s31, 0
      %p72 = por %p70, %p71
      %p73 = scmp.ne.s32.totalorder %s65, %s67
      %p74 = scmp.eq.s32.totalorder %s36, 1
      %p75 = por %p73, %p74
      %p76 = scmp.ne.s32.totalorder %s67, %s68
      %p77 = scmp.eq.s32.totalorder %s36, 0
      %p78 = por %p76, %p77
      %p79 = scmp.ne.s32.totalorder %s67, %s68
      %p80 = scmp.eq.s32.totalorder %s37, 1
      %p81 = por %p79, %p80
      %p83 = scmp.ne.s32.totalorder %s68, %s82
      %p84 = scmp.eq.s32.totalorder %s37, 0
      %p85 = por %p83, %p84
      %s87 = sadd.s32 %s86, 1
      %p90 = scmp.eq.s32.totalorder %s31, 1
      %p91 = scmp.ne.s32.totalorder %s86, %s88
      %p92 = scmp.eq.s32.totalorder %s31, 0
      %p93 = por %p91, %p92
      %p94 = scmp.ne.s32.totalorder %s86, %s88
      %p95 = scmp.eq.s32.totalorder %s36, 1
      %p96 = por %p94, %p95
      %p97 = scmp.ne.s32.totalorder %s88, %s89
      %p98 = scmp.eq.s32.totalorder %s36, 0
      %p99 = por %p97, %p98
      %p100 = scmp.ne.s32.totalorder %s88, %s89
      %p101 = scmp.eq.s32.totalorder %s37, 1
      %p102 = por %p100, %p101
      %p104 = scmp.ne.s32.totalorder %s89, %s103
      %p105 = scmp.eq.s32.totalorder %s37, 0
      %p106 = por %p104, %p105
      %s108 = sadd.s32 %s107, 1
      %p111 = scmp.eq.s32.totalorder %s31, 1
      %p112 = scmp.ne.s32.totalorder %s107, %s109
      %p113 = scmp.eq.s32.totalorder %s31, 0
      %p114 = por %p112, %p113
      %p115 = scmp.ne.s32.totalorder %s107, %s109
      %p116 = scmp.eq.s32.totalorder %s36, 1
      %p117 = por %p115, %p116
      %p118 = scmp.ne.s32.totalorder %s109, %s110
      %p119 = scmp.eq.s32.totalorder %s36, 0
      %p120 = por %p118, %p119
      %p121 = scmp.ne.s32.totalorder %s109, %s110
      %p122 = scmp.eq.s32.totalorder %s37, 1
      %p123 = por %p121, %p122
      %p125 = scmp.ne.s32.totalorder %s110, %s124
      %p126 = scmp.eq.s32.totalorder %s37, 0
      %p127 = por %p125, %p126
      %s129 = sadd.s32 %s128, 1
      %p132 = scmp.eq.s32.totalorder %s31, 1
      %p133 = scmp.ne.s32.totalorder %s128, %s130
      %p134 = scmp.eq.s32.totalorder %s31, 0
      %p135 = por %p133, %p134
      %p136 = scmp.ne.s32.totalorder %s128, %s130
      %p137 = scmp.eq.s32.totalorder %s36, 1
      %p138 = por %p136, %p137
      %p139 = scmp.ne.s32.totalorder %s130, %s131
      %p140 = scmp.eq.s32.totalorder %s36, 0
      %p141 = por %p139, %p140
      %p142 = scmp.ne.s32.totalorder %s130, %s131
      %p143 = scmp.eq.s32.totalorder %s37, 1
      %p144 = por %p142, %p143
      %p146 = scmp.ne.s32.totalorder %s131, %s145
      %p147 = scmp.eq.s32.totalorder %s37, 0
      %p148 = por %p146, %p147
      %s150 = sadd.s32 %s149, 1
      %p153 = scmp.eq.s32.totalorder %s31, 1
      %p154 = scmp.ne.s32.totalorder %s149, %s151
      %p155 = scmp.eq.s32.totalorder %s31, 0
      %p156 = por %p154, %p155
      %p157 = scmp.ne.s32.totalorder %s149, %s151
      %p158 = scmp.eq.s32.totalorder %s36, 1
      %p159 = por %p157, %p158
      %p160 = scmp.ne.s32.totalorder %s151, %s152
      %p161 = scmp.eq.s32.totalorder %s36, 0
      %p162 = por %p160, %p161
      %p163 = scmp.ne.s32.totalorder %s151, %s152
      %p164 = scmp.eq.s32.totalorder %s37, 1
      %p165 = por %p163, %p164
      %p167 = scmp.ne.s32.totalorder %s152, %s166
      %p168 = scmp.eq.s32.totalorder %s37, 0
      %p169 = por %p167, %p168
      %s171 = sadd.s32 %s170, 1
      %p174 = scmp.eq.s32.totalorder %s31, 1
      %p175 = scmp.ne.s32.totalorder %s170, %s172
      %p176 = scmp.eq.s32.totalorder %s31, 0
      %p177 = por %p175, %p176
      %p178 = scmp.ne.s32.totalorder %s170, %s172
      %p179 = scmp.eq.s32.totalorder %s36, 1
      %p180 = por %p178, %p179
      %p181 = scmp.ne.s32.totalorder %s172, %s173
      %p182 = scmp.eq.s32.totalorder %s36, 0
      %p183 = por %p181, %p182
      %p184 = scmp.ne.s32.totalorder %s172, %s173
      %p185 = scmp.eq.s32.totalorder %s37, 1
      %p186 = por %p184, %p185
      %p188 = scmp.ne.s32.totalorder %s173, %s187
      %p189 = scmp.eq.s32.totalorder %s37, 0
      %p190 = por %p188, %p189
      %s192 = sadd.s32 %s191, 1
      %p195 = scmp.eq.s32.totalorder %s31, 1
      %p196 = scmp.ne.s32.totalorder %s191, %s193
      %p197 = scmp.eq.s32.totalorder %s31, 0
      %p198 = por %p196, %p197
      %p199 = scmp.ne.s32.totalorder %s191, %s193
      %p200 = scmp.eq.s32.totalorder %s36, 1
      %p201 = por %p199, %p200
      %p202 = scmp.ne.s32.totalorder %s193, %s194
      %p203 = scmp.eq.s32.totalorder %s36, 0
      %p204 = por %p202, %p203
      %p205 = scmp.ne.s32.totalorder %s193, %s194
      %p206 = scmp.eq.s32.totalorder %s37, 1
      %p207 = por %p205, %p206
      %p209 = scmp.ne.s32.totalorder %s194, %s208
      %p210 = scmp.eq.s32.totalorder %s37, 0
      %p211 = por %p209, %p210
      %s213 = sadd.s32 %s212, 1
      %p216 = scmp.eq.s32.totalorder %s31, 1
      %p217 = scmp.ne.s32.totalorder %s212, %s214
      %p218 = scmp.eq.s32.totalorder %s31, 0
      %p219 = por %p217, %p218
      %p220 = scmp.ne.s32.totalorder %s212, %s214
      %p221 = scmp.eq.s32.totalorder %s36, 1
      %p222 = por %p220, %p221
      %p223 = scmp.ne.s32.totalorder %s214, %s215
      %p224 = scmp.eq.s32.totalorder %s36, 0
      %p225 = por %p223, %p224
      %p226 = scmp.ne.s32.totalorder %s214, %s215
      %p227 = scmp.eq.s32.totalorder %s37, 1
      %p228 = por %p226, %p227
      %p230 = scmp.ne.s32.totalorder %s215, %s229
      %p231 = scmp.eq.s32.totalorder %s37, 0
      %p232 = por %p230, %p231
      %s234 = sadd.s32 %s233, 1
      %p237 = scmp.eq.s32.totalorder %s31, 1
      %p238 = scmp.ne.s32.totalorder %s233, %s235
      %p239 = scmp.eq.s32.totalorder %s31, 0
      %p240 = por %p238, %p239
      %p241 = scmp.ne.s32.totalorder %s233, %s235
      %p242 = scmp.eq.s32.totalorder %s36, 1
      %p243 = por %p241, %p242
      %p244 = scmp.ne.s32.totalorder %s235, %s236
      %p245 = scmp.eq.s32.totalorder %s36, 0
      %p246 = por %p244, %p245
      %p247 = scmp.ne.s32.totalorder %s235, %s236
      %p248 = scmp.eq.s32.totalorder %s37, 1
      %p249 = por %p247, %p248
      %p251 = scmp.ne.s32.totalorder %s236, %s250
      %p252 = scmp.eq.s32.totalorder %s37, 0
      %p253 = por %p251, %p252
      %s255 = sadd.s32 %s254, 1
      %p258 = scmp.eq.s32.totalorder %s31, 1
      %p259 = scmp.ne.s32.totalorder %s254, %s256
      %p260 = scmp.eq.s32.totalorder %s31, 0
      %p261 = por %p259, %p260
      %p262 = scmp.ne.s32.totalorder %s254, %s256
      %p263 = scmp.eq.s32.totalorder %s36, 1
      %p264 = por %p262, %p263
      %p265 = scmp.ne.s32.totalorder %s256, %s257
      %p266 = scmp.eq.s32.totalorder %s36, 0
      %p267 = por %p265, %p266
      %p268 = scmp.ne.s32.totalorder %s256, %s257
      %p269 = scmp.eq.s32.totalorder %s37, 1
      %p270 = por %p268, %p269
      %p272 = scmp.ne.s32.totalorder %s257, %s271
      %p273 = scmp.eq.s32.totalorder %s37, 0
      %p274 = por %p272, %p273
      %s276 = sadd.s32 %s275, 1
      %p279 = scmp.eq.s32.totalorder %s31, 1
      %p280 = scmp.ne.s32.totalorder %s275, %s277
      %p281 = scmp.eq.s32.totalorder %s31, 0
      %p282 = por %p280, %p281
      %p283 = scmp.ne.s32.totalorder %s275, %s277
      %p284 = scmp.eq.s32.totalorder %s36, 1
      %p285 = por %p283, %p284
      %p286 = scmp.ne.s32.totalorder %s277, %s278
      %p287 = scmp.eq.s32.totalorder %s36, 0
      %p288 = por %p286, %p287
      %p289 = scmp.ne.s32.totalorder %s277, %s278
      %p290 = scmp.eq.s32.totalorder %s37, 1
      %p291 = por %p289, %p290
      %p293 = scmp.ne.s32.totalorder %s278, %s292
      %p294 = scmp.eq.s32.totalorder %s37, 0
      %p295 = por %p293, %p294
      %s297 = sadd.s32 %s296, 1
      %p300 = scmp.eq.s32.totalorder %s31, 1
      %p301 = scmp.ne.s32.totalorder %s296, %s298
      %p302 = scmp.eq.s32.totalorder %s31, 0
      %p303 = por %p301, %p302
      %p304 = scmp.ne.s32.totalorder %s296, %s298
      %p305 = scmp.eq.s32.totalorder %s36, 1
      %p306 = por %p304, %p305
      %p307 = scmp.ne.s32.totalorder %s298, %s299
      %p308 = scmp.eq.s32.totalorder %s36, 0
      %p309 = por %p307, %p308
      %p310 = scmp.ne.s32.totalorder %s298, %s299
      %p311 = scmp.eq.s32.totalorder %s37, 1
      %p312 = por %p310, %p311
      %p314 = scmp.ne.s32.totalorder %s299, %s313
      %p315 = scmp.eq.s32.totalorder %s37, 0
      %p316 = por %p314, %p315
      %s318 = sadd.s32 %s317, 1
      %p321 = scmp.eq.s32.totalorder %s31, 1
      %p322 = scmp.ne.s32.totalorder %s317, %s319
      %p323 = scmp.eq.s32.totalorder %s31, 0
      %p324 = por %p322, %p323
      %p325 = scmp.ne.s32.totalorder %s317, %s319
      %p326 = scmp.eq.s32.totalorder %s36, 1
      %p327 = por %p325, %p326
      %p328 = scmp.ne.s32.totalorder %s319, %s320
      %p329 = scmp.eq.s32.totalorder %s36, 0
      %p330 = por %p328, %p329
      %p331 = scmp.ne.s32.totalorder %s319, %s320
      %p332 = scmp.eq.s32.totalorder %s37, 1
      %p333 = por %p331, %p332
      %p335 = scmp.ne.s32.totalorder %s320, %s334
      %p336 = scmp.eq.s32.totalorder %s37, 0
      %p337 = por %p335, %p336
      %s339 = sadd.s32 %s338, 1
      %p342 = scmp.eq.s32.totalorder %s31, 1
      %p343 = scmp.ne.s32.totalorder %s338, %s340
      %p344 = scmp.eq.s32.totalorder %s31, 0
      %p345 = por %p343, %p344
      %p346 = scmp.ne.s32.totalorder %s338, %s340
      %p347 = scmp.eq.s32.totalorder %s36, 1
      %p348 = por %p346, %p347
      %p349 = scmp.ne.s32.totalorder %s340, %s341
      %p350 = scmp.eq.s32.totalorder %s36, 0
      %p351 = por %p349, %p350
      %p352 = scmp.ne.s32.totalorder %s340, %s341
      %p353 = scmp.eq.s32.totalorder %s37, 1
      %p354 = por %p352, %p353
      %p356 = scmp.ne.s32.totalorder %s341, %s355
      %p357 = scmp.eq.s32.totalorder %s37, 0
      %p358 = por %p356, %p357
      %s360 = sadd.s32 %s359, 1
      %p363 = scmp.eq.s32.totalorder %s31, 1
      %p364 = scmp.ne.s32.totalorder %s359, %s361
      %p365 = scmp.eq.s32.totalorder %s31, 0
      %p366 = por %p364, %p365
      %p367 = scmp.ne.s32.totalorder %s359, %s361
      %p368 = scmp.eq.s32.totalorder %s36, 1
      %p369 = por %p367, %p368
      %p370 = scmp.ne.s32.totalorder %s361, %s362
      %p371 = scmp.eq.s32.totalorder %s36, 0
      %p372 = por %p370, %p371
      %p373 = scmp.ne.s32.totalorder %s361, %s362
      %p374 = scmp.eq.s32.totalorder %s37, 1
      %p375 = por %p373, %p374
      %p377 = scmp.ne.s32.totalorder %s362, %s376
      %p378 = scmp.eq.s32.totalorder %s37, 0
      %p379 = por %p377, %p378
      %s381 = sadd.s32 %s380, 1
      %p384 = scmp.eq.s32.totalorder %s31, 1
      %p385 = scmp.ne.s32.totalorder %s380, %s382
      %p386 = scmp.eq.s32.totalorder %s31, 0
      %p387 = por %p385, %p386
      %p388 = scmp.ne.s32.totalorder %s380, %s382
      %p389 = scmp.eq.s32.totalorder %s36, 1
      %p390 = por %p388, %p389
      %p391 = scmp.ne.s32.totalorder %s382, %s383
      %p392 = scmp.eq.s32.totalorder %s36, 0
      %p393 = por %p391, %p392
      %p394 = scmp.ne.s32.totalorder %s382, %s383
      %p395 = scmp.eq.s32.totalorder %s37, 1
      %p396 = por %p394, %p395
      %p398 = scmp.ne.s32.totalorder %s383, %s397
      %p399 = scmp.eq.s32.totalorder %s37, 0
      %p400 = por %p398, %p399
      %s402 = sadd.s32 %s401, 1
      %p405 = scmp.eq.s32.totalorder %s31, 1
      %p406 = scmp.ne.s32.totalorder %s401, %s403
      %p407 = scmp.eq.s32.totalorder %s31, 0
      %p408 = por %p406, %p407
      %p409 = scmp.ne.s32.totalorder %s401, %s403
      %p410 = scmp.eq.s32.totalorder %s36, 1
      %p411 = por %p409, %p410
      %p412 = scmp.ne.s32.totalorder %s403, %s404
      %p413 = scmp.eq.s32.totalorder %s36, 0
      %p414 = por %p412, %p413
      %p415 = scmp.ne.s32.totalorder %s403, %s404
      %p416 = scmp.eq.s32.totalorder %s37, 1
      %p417 = por %p415, %p416
      %p419 = scmp.ne.s32.totalorder %s404, %s418
      %p420 = scmp.eq.s32.totalorder %s37, 0
      %p421 = por %p419, %p420
      %s423 = sadd.s32 %s422, 1
      %p426 = scmp.eq.s32.totalorder %s31, 1
      %p427 = scmp.ne.s32.totalorder %s422, %s424
      %p428 = scmp.eq.s32.totalorder %s31, 0
      %p429 = por %p427, %p428
      %p430 = scmp.ne.s32.totalorder %s422, %s424
      %p431 = scmp.eq.s32.totalorder %s36, 1
      %p432 = por %p430, %p431
      %p433 = scmp.ne.s32.totalorder %s424, %s425
      %p434 = scmp.eq.s32.totalorder %s36, 0
      %p435 = por %p433, %p434
      %p436 = scmp.ne.s32.totalorder %s424, %s425
      %p437 = scmp.eq.s32.totalorder %s37, 1
      %p438 = por %p436, %p437
      %p440 = scmp.ne.s32.totalorder %s425, %s439
      %p441 = scmp.eq.s32.totalorder %s37, 0
      %p442 = por %p440, %p441
      %s444 = sadd.s32 %s443, 1
      %p447 = scmp.eq.s32.totalorder %s31, 1
      %p448 = scmp.ne.s32.totalorder %s443, %s445
      %p449 = scmp.eq.s32.totalorder %s31, 0
      %p450 = por %p448, %p449
      %p451 = scmp.ne.s32.totalorder %s443, %s445
      %p452 = scmp.eq.s32.totalorder %s36, 1
      %p453 = por %p451, %p452
      %p454 = scmp.ne.s32.totalorder %s445, %s446
      %p455 = scmp.eq.s32.totalorder %s36, 0
      %p456 = por %p454, %p455
      %p457 = scmp.ne.s32.totalorder %s445, %s446
      %p458 = scmp.eq.s32.totalorder %s37, 1
      %p459 = por %p457, %p458
      %p461 = scmp.ne.s32.totalorder %s446, %s460
      %p462 = scmp.eq.s32.totalorder %s37, 0
      %p463 = por %p461, %p462
      %s465 = sadd.s32 %s464, 1
      %p468 = scmp.eq.s32.totalorder %s31, 1
      %p469 = scmp.ne.s32.totalorder %s464, %s466
      %p470 = scmp.eq.s32.totalorder %s31, 0
      %p471 = por %p469, %p470
      %p472 = scmp.ne.s32.totalorder %s464, %s466
      %p473 = scmp.eq.s32.totalorder %s36, 1
      %p474 = por %p472, %p473
      %p475 = scmp.ne.s32.totalorder %s466, %s467
      %p476 = scmp.eq.s32.totalorder %s36, 0
      %p477 = por %p475, %p476
      %p478 = scmp.ne.s32.totalorder %s466, %s467
      %p479 = scmp.eq.s32.totalorder %s37, 1
      %p480 = por %p478, %p479
      %p482 = scmp.ne.s32.totalorder %s467, %s481
      %p483 = scmp.eq.s32.totalorder %s37, 0
      %p484 = por %p482, %p483
      %s486 = sadd.s32 %s485, 1
      %p489 = scmp.eq.s32.totalorder %s31, 1
      %p490 = scmp.ne.s32.totalorder %s485, %s487
      %p491 = scmp.eq.s32.totalorder %s31, 0
      %p492 = por %p490, %p491
      %p493 = scmp.ne.s32.totalorder %s485, %s487
      %p494 = scmp.eq.s32.totalorder %s36, 1
      %p495 = por %p493, %p494
      %p496 = scmp.ne.s32.totalorder %s487, %s488
      %p497 = scmp.eq.s32.totalorder %s36, 0
      %p498 = por %p496, %p497
      %p499 = scmp.ne.s32.totalorder %s487, %s488
      %p500 = scmp.eq.s32.totalorder %s37, 1
      %p501 = por %p499, %p500
      %p503 = scmp.ne.s32.totalorder %s488, %s502
      %p504 = scmp.eq.s32.totalorder %s37, 0
      %p505 = por %p503, %p504
      %s506 = ssub.s32 %s31, %s38
      %p507 = scmp.eq.s32.totalorder %s506, 0
      %s509 = sadd.s32 %s508, 1
      %s510 = scalar_select %p507, %s508, %s509
      %p513 = pneg %p507
      %p514 = scmp.eq.s32.totalorder %s31, 1
      %p515 = por %p513, %p514
      %p516 = scmp.ne.s32.totalorder %s508, %s511
      %p517 = scmp.eq.s32.totalorder %s31, 0
      %p518 = por %p516, %p517
      %p519 = scmp.ne.s32.totalorder %s508, %s511
      %p520 = scmp.eq.s32.totalorder %s36, 1
      %p521 = por %p519, %p520
      %p522 = scmp.ne.s32.totalorder %s511, %s512
      %p523 = scmp.eq.s32.totalorder %s36, 0
      %p524 = por %p522, %p523
      %p525 = scmp.ne.s32.totalorder %s511, %s512
      %p526 = scmp.eq.s32.totalorder %s37, 1
      %p527 = por %p525, %p526
      %p529 = scmp.ne.s32.totalorder %s512, %s528
      %p530 = scmp.eq.s32.totalorder %s37, 0
      %p531 = por %p529, %p530
      %p532 = scmp.le.s32.totalorder 1, %s31
      %p533 = scmp.lt.s32.totalorder %s31, 3
      %p534 = pnand %p532, %p533
      %p535 = pneg %p534
      // Predicated region
      $region9: #{clip_adapter_forward.1} parent=5 // pred_check
        _
      $region10: #{clip_adapter_forward.1} parent=5 // pred_check_branch
        %537 = sbr.rel (%p534) target = $region12
      $region11: #{clip_adapter_forward.1} parent=5 // pred_region
        %s538 = ssub.s32 %s31, 1
        // Predicated region
        $region13: #{clip_adapter_forward.1} parent=11 // pred_check
          %p539 = pneg %p78
        $region14: #{clip_adapter_forward.1} parent=11 // pred_check_branch
          %541 = sbr.rel (%p539) target = $region16
        $region15: #{clip_adapter_forward.1} parent=11 // pred_region
          _
        $region16: #{clip_adapter_forward.1} parent=11 // pred_fallthru
          _
        // Predicated region
        $region17: #{clip_adapter_forward.1} parent=11 // pred_check
          %p542 = pneg %p99
        $region18: #{clip_adapter_forward.1} parent=11 // pred_check_branch
          %544 = sbr.rel (%p542) target = $region20
        $region19: #{clip_adapter_forward.1} parent=11 // pred_region
          _
        $region20: #{clip_adapter_forward.1} parent=11 // pred_fallthru
          _
        // Predicated region
        $region21: #{clip_adapter_forward.1} parent=11 // pred_check
          %p545 = pneg %p120
        $region22: #{clip_adapter_forward.1} parent=11 // pred_check_branch
          %547 = sbr.rel (%p545) target = $region24
        $region23: #{clip_adapter_forward.1} parent=11 // pred_region
          _
        $region24: #{clip_adapter_forward.1} parent=11 // pred_fallthru
          _
        // Predicated region
        $region25: #{clip_adapter_forward.1} parent=11 // pred_check
          %p548 = pneg %p141
        $region26: #{clip_adapter_forward.1} parent=11 // pred_check_branch
          %550 = sbr.rel (%p548) target = $region28
        $region27: #{clip_adapter_forward.1} parent=11 // pred_region
          _
        $region28: #{clip_adapter_forward.1} parent=11 // pred_fallthru
          _
        // Predicated region
        $region29: #{clip_adapter_forward.1} parent=11 // pred_check
          %p551 = pneg %p162
        $region30: #{clip_adapter_forward.1} parent=11 // pred_check_branch
          %553 = sbr.rel (%p551) target = $region32
        $region31: #{clip_adapter_forward.1} parent=11 // pred_region
          _
        $region32: #{clip_adapter_forward.1} parent=11 // pred_fallthru
          _
        // Predicated region
        $region33: #{clip_adapter_forward.1} parent=11 // pred_check
          %p554 = pneg %p183
        $region34: #{clip_adapter_forward.1} parent=11 // pred_check_branch
          %556 = sbr.rel (%p554) target = $region36
        $region35: #{clip_adapter_forward.1} parent=11 // pred_region
          _
        $region36: #{clip_adapter_forward.1} parent=11 // pred_fallthru
          _
        // Predicated region
        $region37: #{clip_adapter_forward.1} parent=11 // pred_check
          %p557 = pneg %p204
        $region38: #{clip_adapter_forward.1} parent=11 // pred_check_branch
          %559 = sbr.rel (%p557) target = $region40
        $region39: #{clip_adapter_forward.1} parent=11 // pred_region
          _
        $region40: #{clip_adapter_forward.1} parent=11 // pred_fallthru
          _
        // Predicated region
        $region41: #{clip_adapter_forward.1} parent=11 // pred_check
          %p560 = pneg %p225
        $region42: #{clip_adapter_forward.1} parent=11 // pred_check_branch
          %562 = sbr.rel (%p560) target = $region44
        $region43: #{clip_adapter_forward.1} parent=11 // pred_region
          _
        $region44: #{clip_adapter_forward.1} parent=11 // pred_fallthru
          _
        // Predicated region
        $region45: #{clip_adapter_forward.1} parent=11 // pred_check
          %p563 = pneg %p246
        $region46: #{clip_adapter_forward.1} parent=11 // pred_check_branch
          %565 = sbr.rel (%p563) target = $region48
        $region47: #{clip_adapter_forward.1} parent=11 // pred_region
          _
        $region48: #{clip_adapter_forward.1} parent=11 // pred_fallthru
          _
        // Predicated region
        $region49: #{clip_adapter_forward.1} parent=11 // pred_check
          %p566 = pneg %p267
        $region50: #{clip_adapter_forward.1} parent=11 // pred_check_branch
          %568 = sbr.rel (%p566) target = $region52
        $region51: #{clip_adapter_forward.1} parent=11 // pred_region
          _
        $region52: #{clip_adapter_forward.1} parent=11 // pred_fallthru
          _
        // Predicated region
        $region53: #{clip_adapter_forward.1} parent=11 // pred_check
          %p569 = pneg %p288
        $region54: #{clip_adapter_forward.1} parent=11 // pred_check_branch
          %571 = sbr.rel (%p569) target = $region56
        $region55: #{clip_adapter_forward.1} parent=11 // pred_region
          _
        $region56: #{clip_adapter_forward.1} parent=11 // pred_fallthru
          _
        // Predicated region
        $region57: #{clip_adapter_forward.1} parent=11 // pred_check
          %p572 = pneg %p309
        $region58: #{clip_adapter_forward.1} parent=11 // pred_check_branch
          %574 = sbr.rel (%p572) target = $region60
        $region59: #{clip_adapter_forward.1} parent=11 // pred_region
          _
        $region60: #{clip_adapter_forward.1} parent=11 // pred_fallthru
          _
        // Predicated region
        $region61: #{clip_adapter_forward.1} parent=11 // pred_check
          %p575 = pneg %p330
        $region62: #{clip_adapter_forward.1} parent=11 // pred_check_branch
          %577 = sbr.rel (%p575) target = $region64
        $region63: #{clip_adapter_forward.1} parent=11 // pred_region
          _
        $region64: #{clip_adapter_forward.1} parent=11 // pred_fallthru
          _
        // Predicated region
        $region65: #{clip_adapter_forward.1} parent=11 // pred_check
          %p578 = pneg %p351
        $region66: #{clip_adapter_forward.1} parent=11 // pred_check_branch
          %580 = sbr.rel (%p578) target = $region68
        $region67: #{clip_adapter_forward.1} parent=11 // pred_region
          _
        $region68: #{clip_adapter_forward.1} parent=11 // pred_fallthru
          _
        // Predicated region
        $region69: #{clip_adapter_forward.1} parent=11 // pred_check
          %p581 = pneg %p372
        $region70: #{clip_adapter_forward.1} parent=11 // pred_check_branch
          %583 = sbr.rel (%p581) target = $region72
        $region71: #{clip_adapter_forward.1} parent=11 // pred_region
          _
        $region72: #{clip_adapter_forward.1} parent=11 // pred_fallthru
          _
        // Predicated region
        $region73: #{clip_adapter_forward.1} parent=11 // pred_check
          %p584 = pneg %p393
        $region74: #{clip_adapter_forward.1} parent=11 // pred_check_branch
          %586 = sbr.rel (%p584) target = $region76
        $region75: #{clip_adapter_forward.1} parent=11 // pred_region
          _
        $region76: #{clip_adapter_forward.1} parent=11 // pred_fallthru
          _
        // Predicated region
        $region77: #{clip_adapter_forward.1} parent=11 // pred_check
          %p587 = pneg %p414
        $region78: #{clip_adapter_forward.1} parent=11 // pred_check_branch
          %589 = sbr.rel (%p587) target = $region80
        $region79: #{clip_adapter_forward.1} parent=11 // pred_region
          _
        $region80: #{clip_adapter_forward.1} parent=11 // pred_fallthru
          _
        // Predicated region
        $region81: #{clip_adapter_forward.1} parent=11 // pred_check
          %p590 = pneg %p435
        $region82: #{clip_adapter_forward.1} parent=11 // pred_check_branch
          %592 = sbr.rel (%p590) target = $region84
        $region83: #{clip_adapter_forward.1} parent=11 // pred_region
          _
        $region84: #{clip_adapter_forward.1} parent=11 // pred_fallthru
          _
        // Predicated region
        $region85: #{clip_adapter_forward.1} parent=11 // pred_check
          %p593 = pneg %p456
        $region86: #{clip_adapter_forward.1} parent=11 // pred_check_branch
          %595 = sbr.rel (%p593) target = $region88
        $region87: #{clip_adapter_forward.1} parent=11 // pred_region
          _
        $region88: #{clip_adapter_forward.1} parent=11 // pred_fallthru
          _
        // Predicated region
        $region89: #{clip_adapter_forward.1} parent=11 // pred_check
          %p596 = pneg %p477
        $region90: #{clip_adapter_forward.1} parent=11 // pred_check_branch
          %598 = sbr.rel (%p596) target = $region92
        $region91: #{clip_adapter_forward.1} parent=11 // pred_region
          _
        $region92: #{clip_adapter_forward.1} parent=11 // pred_fallthru
          _
        // Predicated region
        $region93: #{clip_adapter_forward.1} parent=11 // pred_check
          %p599 = pneg %p498
        $region94: #{clip_adapter_forward.1} parent=11 // pred_check_branch
          %601 = sbr.rel (%p599) target = $region96
        $region95: #{clip_adapter_forward.1} parent=11 // pred_region
          _
        $region96: #{clip_adapter_forward.1} parent=11 // pred_fallthru
          _
      $region12: #{clip_adapter_forward.1} parent=5 // pred_fallthru
        _
      %p602 = scmp.lt.s32.totalorder %s31, 2
      // Predicated region
      $region97: #{clip_adapter_forward.1} parent=5 // pred_check
        %p603 = pneg %p602
      $region98: #{clip_adapter_forward.1} parent=5 // pred_check_branch
        %605 = sbr.rel (%p603) target = $region100
      $region99: #{clip_adapter_forward.1} parent=5 // pred_region
        // Predicated region
        $region101: #{clip_adapter_forward.1} parent=99 // pred_check
          %p606 = pneg %p51
        $region102: #{clip_adapter_forward.1} parent=99 // pred_check_branch
          %608 = sbr.rel (%p606) target = $region104
        $region103: #{clip_adapter_forward.1} parent=99 // pred_region
          %p609 = scmp.lt.s32.totalorder %s31, 1
          %s610 = scalar_select %p609, %s31, 1
          %s611 = smul.addr %s610, 2
          %s612 = smul.addr %s611, 8
          %s613 = scalar_lea.vmem %s0, %s612
        $region104: #{clip_adapter_forward.1} parent=99 // pred_fallthru
          _
      $region100: #{clip_adapter_forward.1} parent=5 // pred_fallthru
        _
      %p614 = scmp.le.s32.totalorder 1, %s31
      %p615 = scmp.lt.s32.totalorder %s31, 3
      %p616 = pnand %p614, %p615
      %p617 = pneg %p616
      // Predicated region
      $region105: #{clip_adapter_forward.1} parent=5 // pred_check
        _
      $region106: #{clip_adapter_forward.1} parent=5 // pred_check_branch
        %619 = sbr.rel (%p616) target = $region108
      $region107: #{clip_adapter_forward.1} parent=5 // pred_region
        %s620 = ssub.s32 %s31, 1
        %p621 = scmp.lt.s32.totalorder %s36, 1
        %s622 = scalar_select %p621, %s36, 1
        %s623 = smul.addr %s622, 2
        %s624 = smul.addr %s623, 8
        %s625 = scalar_lea.vmem %s0, %s624
        %p626 = pneg %p57
        %p627 = pneg %p54
        %p628 = pneg %p78
        %p629 = pneg %p75
        %p630 = pneg %p99
        %p631 = pneg %p96
        %p632 = pneg %p120
        %p633 = pneg %p117
        %p634 = pneg %p141
        %p635 = pneg %p138
        %p636 = pneg %p162
        %p637 = pneg %p159
        %p638 = pneg %p183
        %p639 = pneg %p180
        %p640 = pneg %p204
        %p641 = pneg %p201
        %p642 = pneg %p225
        %p643 = pneg %p222
        %p644 = pneg %p246
        %p645 = pneg %p243
        %p646 = pneg %p267
        %p647 = pneg %p264
        %p648 = pneg %p288
        %p649 = pneg %p285
        %p650 = pneg %p309
        %p651 = pneg %p306
        %p652 = pneg %p330
        %p653 = pneg %p327
        %p654 = pneg %p351
        %p655 = pneg %p348
        %p656 = pneg %p372
        %p657 = pneg %p369
        %p658 = pneg %p393
        %p659 = pneg %p390
        %p660 = pneg %p414
        %p661 = pneg %p411
        %p662 = pneg %p435
        %p663 = pneg %p432
        %p664 = pneg %p456
        %p665 = pneg %p453
        %p666 = pneg %p477
        %p667 = pneg %p474
        %p668 = pneg %p498
        %p669 = pneg %p495
        %p670 = pneg %p524
        %p671 = pneg %p521
        %s672 = sand.u32 %s511, 1
        %s673 = scalar_lea.sflag [#allocation3], %s672
        %s674 = sand.u32 %s511, 1
        %s675 = scalar_lea.vmem [#allocation2], %s674
        %p676 = scmp.lt.s32.totalorder %s36, 1
        %s677 = scalar_select %p676, %s36, 1
        %s678 = smul.addr %s677, 2
        %s679 = smul.addr %s678, 8
        %s680 = scalar_lea.vmem %s0, %s679
        %v682 = vld [vmem:[%s680] sm:$0x1f]
        %v683 = vld [vmem:[%s680 + $0x8] sm:$0x1f]
        %v684 = vld [vmem:[%s1] sm:$0xf]
        %v685 = vld [vmem:[%s1 + $0x4] sm:$0xf]
        %v686 = vld [vmem:[%s1 + $0x8] sm:$0xf]
        %v687 = vld [vmem:[%s1 + $0xc] sm:$0xf]
        %v688 = vld [vmem:[%s1 + $0x10] sm:$0xf]
        %v689 = vld [vmem:[%s1 + $0x14] sm:$0xf]
        %v690 = vld [vmem:[%s1 + $0x18] sm:$0xf]
        %v691 = vld [vmem:[%s1 + $0x1c] sm:$0xf]
        %v692 = vld [vmem:[%s1 + $0x20] sm:$0xf]
        %v693 = vld [vmem:[%s1 + $0x24] sm:$0xf]
        %v694 = vld [vmem:[%s1 + $0x28] sm:$0xf]
        %v695 = vld [vmem:[%s1 + $0x2c] sm:$0xf]
        %v696 = vld [vmem:[%s1 + $0x30] sm:$0xf]
        %v697 = vld [vmem:[%s1 + $0x34] sm:$0xf]
        %v698 = vld [vmem:[%s1 + $0x38] sm:$0xf]
        %v699 = vld [vmem:[%s1 + $0x3c] sm:$0xf]
        %v700 = vld [vmem:[%s1 + $0x40] sm:$0xf]
        %v701 = vld [vmem:[%s1 + $0x44] sm:$0xf]
        %v702 = vld [vmem:[%s1 + $0x48] sm:$0xf]
        %v703 = vld [vmem:[%s1 + $0x4c] sm:$0xf]
        %v704 = vld [vmem:[%s1 + $0x50] sm:$0xf]
        %v705 = vld [vmem:[%s1 + $0x54] sm:$0xf]
        %v706 = vld [vmem:[%s1 + $0x58] sm:$0xf]
        %v707 = vld [vmem:[%s1 + $0x5c] sm:$0xf]
        %v708 = vpack.c.bf16 %v682, %v682
        %v709 = vpack.c.bf16 %v683, %v683
        %v710 = vld [vmem:[%s2] sm:$0x1f]
        %v735 = vunpack.c.l.b16 %v684
        %v736 = vunpack.c.l.b16 %v685
        %v737 = vunpack.c.l.b16 %v686
        %v738 = vunpack.c.l.b16 %v687
        %v739 = vunpack.c.l.b16 %v688
        %v740 = vunpack.c.l.b16 %v689
        %v741 = vunpack.c.l.b16 %v690
        %v742 = vunpack.c.l.b16 %v691
        %v743 = vunpack.c.l.b16 %v692
        %v744 = vunpack.c.l.b16 %v693
        %v745 = vunpack.c.l.b16 %v694
        %v746 = vunpack.c.l.b16 %v695
        %v747 = vunpack.c.l.b16 %v696
        %v748 = vunpack.c.l.b16 %v697
        %v749 = vunpack.c.l.b16 %v698
        %v750 = vunpack.c.l.b16 %v699
        %v751 = vunpack.c.l.b16 %v700
        %v752 = vunpack.c.l.b16 %v701
        %v753 = vunpack.c.l.b16 %v702
        %v754 = vunpack.c.l.b16 %v703
        %v755 = vunpack.c.l.b16 %v704
        %v756 = vunpack.c.l.b16 %v705
        %v757 = vunpack.c.l.b16 %v706
        %v758 = vunpack.c.l.b16 %v707
        %v759 = vpack.c.b16 %v736, %v735
        %v760 = vpack.c.b16 %v738, %v737
        %v761 = vpack.c.b16 %v740, %v739
        %v762 = vpack.c.b16 %v742, %v741
        %v763 = vpack.c.b16 %v744, %v743
        %v764 = vpack.c.b16 %v746, %v745
        %v765 = vpack.c.b16 %v748, %v747
        %v766 = vpack.c.b16 %v750, %v749
        %v767 = vpack.c.b16 %v752, %v751
        %v768 = vpack.c.b16 %v754, %v753
        %v769 = vpack.c.b16 %v756, %v755
        %v770 = vpack.c.b16 %v758, %v757
        %vm783 = vcmask 523264
        %v785 = vsel %vm783, %v709, 0
        %787 = vmatprep.subr.bf16.mxu0 0
        %788 = vmatpush1.bf16.msra.mxu0 %v766
        %789 = vmatprep.subr.bf16.mxu0 0
        %790 = vmatpush1.bf16.msra.mxu0 %v765
        %791 = vmatprep.subr.bf16.mxu0 0
        %792 = vmatpush1.bf16.msra.mxu0 %v764
        %793 = vmatprep.subr.bf16.mxu0 0
        %794 = vmatpush1.bf16.msra.mxu0 %v763
        %795 = vmatprep.subr.bf16.mxu0 0
        %796 = vmatpush1.bf16.msra.mxu0 %v762
        %797 = vmatprep.subr.bf16.mxu0 0
        %798 = vmatpush1.bf16.msra.mxu0 %v761
        %799 = vmatprep.subr.bf16.mxu0 0
        %800 = vmatpush1.bf16.msra.mxu0 %v760
        %801 = vmatprep.subr.bf16.mxu0 0
        %802 = vmatpush1.bf16.msra.mxu0 %v759
        %803 = vmatprep.subr.bf16.mxu0 0
        %804 = vmatpush2.bf16.msra.mxu0 0
        %805 = vmatprep.subr.bf16.mxu0 0
        %806 = vmatpush2.bf16.msra.mxu0 0
        %807 = vmatprep.subr.bf16.mxu0 0
        %808 = vmatpush2.bf16.msra.mxu0 0
        %809 = vmatprep.subr.bf16.mxu0 0
        %810 = vmatpush2.bf16.msra.mxu0 0
        %811 = vmatprep.subr.bf16.mxu0 0
        %812 = vmatpush2.bf16.msra.mxu0 %v770
        %813 = vmatprep.subr.bf16.mxu0 0
        %814 = vmatpush2.bf16.msra.mxu0 %v769
        %815 = vmatprep.subr.bf16.mxu0 0
        %816 = vmatpush2.bf16.msra.mxu0 %v768
        %817 = vmatprep.subr.bf16.mxu0 0
        %818 = vmatpush2.bf16.msra.mxu0 %v767
        %819 = vmatprep.mubr.bf16.mxu0 %v785
        %820 = vmatmul.mubr.bf16.gmra.mxu0 %v708
        %v821 = vpop.f32.mrf.mxu0
        %v822 = vadd.f32 %v710, %v821
        %v823 = vpop.f32.mrf.mxu0
        %v824 = vpop.f32.mrf.mxu0
        %v825 = vpop.f32.mrf.mxu0
        %826 = vdwg.mxu0
        %v827 = vld [vmem:[%s3] sm:$0x1]
        %v828 = vld [vmem:[%s4] sm:$0x1]
        %vm829 = vcmask 520192
        %v830 = vsel %vm829, %v822, 0.0
        %831 = vadd.xlane.f32.xlu0 %v830
        %v832 = vpop.xlane.xlu0 %831
        %v833 = vrcp.pop 64.0
        %v834 = vmul.f32 %v832, %v833
        %v835 = vsub.f32 %v822, %v834
        %v836 = vmul.f32 %v835, %v835
        %v837 = vsel %vm829, %v836, 0.0
        %838 = vadd.xlane.f32.xlu0 %v837
        %v839 = vpop.xlane.xlu0 %838
        %v840 = vmul.f32 %v839, %v833
        %v841 = vadd.f32 %v840, 1e-05
        %v842 = vrsqrt.pop %v841
        %v843 = vmul.f32 %v835, %v842
        %v845 = vlaneseq
        %v846 = vshrl.u32 %v845, 7
        %v847 = vsub.s32 0, %v846
        %v848 = vrot.slane %v827, %v847
        %v850 = vmul.f32 %v843, %v848
        %v852 = vlaneseq
        %v853 = vshrl.u32 %v852, 7
        %v854 = vsub.s32 0, %v853
        %v855 = vrot.slane %v828, %v854
        %v857 = vadd.f32 %v850, %v855
        %v858 = vld [vmem:[%s5] sm:$0x1]
        %v859 = vld [vmem:[%s6] sm:$0x1]
        %v860 = vsel %vm829, %v857, 0.0
        %861 = vadd.xlane.f32.xlu0 %v860
        %v862 = vpop.xlane.xlu0 %861
        %v863 = vmul.f32 %v862, %v833
        %v864 = vsub.f32 %v857, %v863
        %v865 = vmul.f32 %v864, %v864
        %v866 = vsel %vm829, %v865, 0.0
        %867 = vadd.xlane.f32.xlu0 %v866
        %v868 = vpop.xlane.xlu0 %867
        %v869 = vmul.f32 %v868, %v833
        %v870 = vadd.f32 %v869, 1e-05
        %v871 = vrsqrt.pop %v870
        %v872 = vmul.f32 %v864, %v871
        %v874 = vlaneseq
        %v875 = vshrl.u32 %v874, 7
        %v876 = vsub.s32 0, %v875
        %v877 = vrot.slane %v858, %v876
        %v879 = vmul.f32 %v872, %v877
        %v881 = vlaneseq
        %v882 = vshrl.u32 %v881, 7
        %v883 = vsub.s32 0, %v882
        %v884 = vrot.slane %v859, %v883
        %v886 = vadd.f32 %v879, %v884
        %v887 = vld [vmem:[%s7] sm:$0xff]
        %v888 = vld [vmem:[%s7 + $0x8] sm:$0xff]
        %v889 = vld [vmem:[%s7 + $0x10] sm:$0xff]
        %v890 = vld [vmem:[%s7 + $0x18] sm:$0xff]
        %v891 = vld [vmem:[%s7 + $0x20] sm:$0xff]
        %v892 = vld [vmem:[%s7 + $0x28] sm:$0xff]
        %v893 = vld [vmem:[%s7 + $0x30] sm:$0xff]
        %v894 = vld [vmem:[%s7 + $0x38] sm:$0xff]
        %v895 = vld [vmem:[%s8] sm:$0x3]
        %v896 = vpack.c.bf16 %v886, %v886
        %v898 = vlaneseq
        %v899 = vshrl.u32 %v898, 7
        %v900 = vsub.s32 0, %v899
        %v901 = vrot.slane %v895, %v900
        %v902 = vlaneseq
        %v903 = vshrl.u32 %v902, 7
        %v904 = vsub.s32 1, %v903
        %v905 = vrot.slane %v895, %v904
        %v916 = vunpack.c.l.b16 %v887
        %v917 = vunpack.c.h.b16 %v887
        %v918 = vunpack.c.l.b16 %v888
        %v919 = vunpack.c.h.b16 %v888
        %v920 = vunpack.c.l.b16 %v889
        %v921 = vunpack.c.h.b16 %v889
        %v922 = vunpack.c.l.b16 %v890
        %v923 = vunpack.c.h.b16 %v890
        %v924 = vunpack.c.l.b16 %v891
        %v925 = vunpack.c.h.b16 %v891
        %v926 = vunpack.c.l.b16 %v892
        %v927 = vunpack.c.h.b16 %v892
        %v928 = vunpack.c.l.b16 %v893
        %v929 = vunpack.c.h.b16 %v893
        %v930 = vunpack.c.l.b16 %v894
        %v931 = vunpack.c.h.b16 %v894
        %v932 = vpack.c.b16 %v918, %v916
        %v933 = vpack.c.b16 %v919, %v917
        %v934 = vpack.c.b16 %v922, %v920
        %v935 = vpack.c.b16 %v923, %v921
        %v936 = vpack.c.b16 %v926, %v924
        %v937 = vpack.c.b16 %v927, %v925
        %v938 = vpack.c.b16 %v930, %v928
        %v939 = vpack.c.b16 %v931, %v929
        %v949 = vsel %vm783, %v896, 0
        %951 = vmatprep.subr.bf16.mxu0 0
        %952 = vmatpush1.bf16.msra.mxu0 0
        %953 = vmatprep.subr.bf16.mxu0 0
        %954 = vmatpush1.bf16.msra.mxu0 0
        %955 = vmatprep.subr.bf16.mxu0 0
        %956 = vmatpush1.bf16.msra.mxu0 0
        %957 = vmatprep.subr.bf16.mxu0 0
        %958 = vmatpush1.bf16.msra.mxu0 0
        %959 = vmatprep.subr.bf16.mxu0 %v939
        %960 = vmatpush1.bf16.msra.mxu0 %v938
        %961 = vmatprep.subr.bf16.mxu0 %v937
        %962 = vmatpush1.bf16.msra.mxu0 %v936
        %963 = vmatprep.subr.bf16.mxu0 %v935
        %964 = vmatpush1.bf16.msra.mxu0 %v934
        %965 = vmatprep.subr.bf16.mxu0 %v933
        %966 = vmatpush1.bf16.msra.mxu0 %v932
        %967 = vmatprep.subr.bf16.mxu0 0
        %968 = vmatpush2.bf16.msra.mxu0 0
        %969 = vmatprep.subr.bf16.mxu0 0
        %970 = vmatpush2.bf16.msra.mxu0 0
        %971 = vmatprep.subr.bf16.mxu0 0
        %972 = vmatpush2.bf16.msra.mxu0 0
        %973 = vmatprep.subr.bf16.mxu0 0
        %974 = vmatpush2.bf16.msra.mxu0 0
        %975 = vmatprep.subr.bf16.mxu0 0
        %976 = vmatpush2.bf16.msra.mxu0 0
        %977 = vmatprep.subr.bf16.mxu0 0
        %978 = vmatpush2.bf16.msra.mxu0 0
        %979 = vmatprep.subr.bf16.mxu0 0
        %980 = vmatpush2.bf16.msra.mxu0 0
        %981 = vmatprep.subr.bf16.mxu0 0
        %982 = vmatpush2.bf16.msra.mxu0 0
        %983 = vmatprep.mubr.bf16.mxu0 0
        %984 = vmatmul.mubr.bf16.gmra.mxu0 %v949
        %v985 = vpop.f32.mrf.mxu0
        %v986 = vadd.f32 %v901, %v985
        %v987 = vpop.f32.mrf.mxu0
        %v988 = vadd.f32 %v905, %v987
        %v989 = vpop.f32.mrf.mxu0
        %v990 = vpop.f32.mrf.mxu0
        %991 = vdwg.mxu0
        %v992 = vmul.f32 %v986, 0.25
        %v993 = vpack.c.bf16 %v992, %v992
        %v994 = vpack.c.bf16 %v986, %v986
        %v995 = vpack.c.bf16 %v988, %v988
        %v996 = vld [vmem:[%s9] sm:$0xf]
        %v997 = vld [vmem:[%s9 + $0x4] sm:$0xf]
        %v998 = vld [vmem:[%s9 + $0x8] sm:$0xf]
        %v999 = vld [vmem:[%s9 + $0xc] sm:$0xf]
        %v1000 = vld [vmem:[%s9 + $0x10] sm:$0xf]
        %v1001 = vld [vmem:[%s9 + $0x14] sm:$0xf]
        %v1002 = vld [vmem:[%s9 + $0x18] sm:$0xf]
        %v1003 = vld [vmem:[%s9 + $0x1c] sm:$0xf]
        %1005 = vrot.lane.b32.xlu0 %v994, 64
        %v1006 = vpop.permute.xlu0 %1005
        %vm1007 = vcmask 130048
        %v1009 = vsel %vm1007, %v993, 0
        %v1012 = vsel %vm1007, %v1006, 0
        %1014 = vmatprep.subr.bf16.mxu0 0
        %1015 = vmatpush1.bf16.xpose.msra.mxu0 0
        %1016 = vmatprep.subr.bf16.mxu0 0
        %1017 = vmatpush1.bf16.xpose.msra.mxu0 0
        %1018 = vmatprep.subr.bf16.mxu0 0
        %1019 = vmatpush1.bf16.xpose.msra.mxu0 0
        %1020 = vmatprep.subr.bf16.mxu0 0
        %1021 = vmatpush1.bf16.xpose.msra.mxu0 0
        %1022 = vmatprep.subr.bf16.mxu0 0
        %1023 = vmatpush1.bf16.xpose.msra.mxu0 0
        %1024 = vmatprep.subr.bf16.mxu0 0
        %1025 = vmatpush1.bf16.xpose.msra.mxu0 0
        %1026 = vmatprep.subr.bf16.mxu0 0
        %1027 = vmatpush1.bf16.xpose.msra.mxu0 0
        %1028 = vmatprep.subr.bf16.mxu0 0
        %1029 = vmatpush1.bf16.xpose.msra.mxu0 %v1012
        %1030 = vmatprep.subr.bf16.mxu0 0
        %1031 = vmatpush2.bf16.xpose.msra.mxu0 0
        %1032 = vmatprep.subr.bf16.mxu0 0
        %1033 = vmatpush2.bf16.xpose.msra.mxu0 0
        %1034 = vmatprep.subr.bf16.mxu0 0
        %1035 = vmatpush2.bf16.xpose.msra.mxu0 0
        %1036 = vmatprep.subr.bf16.mxu0 0
        %1037 = vmatpush2.bf16.xpose.msra.mxu0 0
        %1038 = vmatprep.subr.bf16.mxu0 0
        %1039 = vmatpush2.bf16.xpose.msra.mxu0 0
        %1040 = vmatprep.subr.bf16.mxu0 0
        %1041 = vmatpush2.bf16.xpose.msra.mxu0 0
        %1042 = vmatprep.subr.bf16.mxu0 0
        %1043 = vmatpush2.bf16.xpose.msra.mxu0 0
        %1044 = vmatprep.subr.bf16.mxu0 0
        %1045 = vmatpush2.bf16.xpose.msra.mxu0 0
        %1046 = vmatprep.mubr.bf16.mxu0 0
        %1047 = vmatmul.mubr.bf16.gmra.mxu0 %v1009
        %v1048 = vpop.f32.mrf.mxu0
        %v1049 = vadd.f32 0.0, %v1048
        %v1050 = vpop.f32.mrf.mxu0
        %v1051 = vpop.f32.mrf.mxu0
        %v1052 = vpop.f32.mrf.mxu0
        %1053 = vdwg.mxu0
        %vm1054 = vcmask 36864
        %v1055 = vsel %vm1054, %v1049, -inf
        %1056 = vmax.xlane.f32.xlu0 %v1055
        %v1057 = vpop.xlane.xlu0 %1056
        %v1058 = vsub.f32 %v1049, %v1057
        %v1059 = vmul.f32 %v1058, 1.442695
        %v1060 = vpow.pop %v1059
        %v1061 = vsel %vm1054, %v1060, 0.0
        %1062 = vadd.xlane.f32.xlu0 %v1061
        %v1063 = vpop.xlane.xlu0 %1062
        %v1064 = vrcp.pop %v1063
        %v1065 = vmul.f32 %v1060, %v1064
        %v1066 = vpack.c.bf16 %v1065, %v1065
        %vm1067 = vcmask 39936
        %v1069 = vsel %vm1067, %v1066, 0
        %vm1071 = vcmask 1041408
        %vm1072 = vcmask 1042432
        %v1073 = vsel %vm1071, 4294967295, 65535
        %v1074 = vsel %vm1072, %v1073, 0
        %v1076 = vand.u32 %v995, %v1074
        %1078 = vmatprep.subr.bf16.mxu0 0
        %1079 = vmatpush1.bf16.msra.mxu0 0
        %1080 = vmatprep.subr.bf16.mxu0 0
        %1081 = vmatpush1.bf16.msra.mxu0 0
        %1082 = vmatprep.subr.bf16.mxu0 0
        %1083 = vmatpush1.bf16.msra.mxu0 0
        %1084 = vmatprep.subr.bf16.mxu0 0
        %1085 = vmatpush1.bf16.msra.mxu0 0
        %1086 = vmatprep.subr.bf16.mxu0 0
        %1087 = vmatpush1.bf16.msra.mxu0 0
        %1088 = vmatprep.subr.bf16.mxu0 0
        %1089 = vmatpush1.bf16.msra.mxu0 0
        %1090 = vmatprep.subr.bf16.mxu0 0
        %1091 = vmatpush1.bf16.msra.mxu0 0
        %1092 = vmatprep.subr.bf16.mxu0 0
        %1093 = vmatpush1.bf16.msra.mxu0 %v1076
        %1094 = vmatprep.subr.bf16.mxu0 0
        %1095 = vmatpush2.bf16.msra.mxu0 0
        %1096 = vmatprep.subr.bf16.mxu0 0
        %1097 = vmatpush2.bf16.msra.mxu0 0
        %1098 = vmatprep.subr.bf16.mxu0 0
        %1099 = vmatpush2.bf16.msra.mxu0 0
        %1100 = vmatprep.subr.bf16.mxu0 0
        %1101 = vmatpush2.bf16.msra.mxu0 0
        %1102 = vmatprep.subr.bf16.mxu0 0
        %1103 = vmatpush2.bf16.msra.mxu0 0
        %1104 = vmatprep.subr.bf16.mxu0 0
        %1105 = vmatpush2.bf16.msra.mxu0 0
        %1106 = vmatprep.subr.bf16.mxu0 0
        %1107 = vmatpush2.bf16.msra.mxu0 0
        %1108 = vmatprep.subr.bf16.mxu0 0
        %1109 = vmatpush2.bf16.msra.mxu0 0
        %1110 = vmatprep.mubr.bf16.mxu0 0
        %1111 = vmatmul.mubr.bf16.gmra.mxu0 %v1069
        %v1112 = vpop.f32.mrf.mxu0
        %v1113 = vadd.f32 0.0, %v1112
        %v1114 = vpop.f32.mrf.mxu0
        %v1115 = vpop.f32.mrf.mxu0
        %v1116 = vpop.f32.mrf.mxu0
        %1117 = vdwg.mxu0
        %v1118 = vpack.c.bf16 %v1113, %v1113
        %1120 = vrot.lane.b32.xlu0 %v993, 112
        %v1121 = vpop.permute.xlu0 %1120
        %1122 = vrot.lane.b32.xlu0 %v994, 48
        %v1123 = vpop.permute.xlu0 %1122
        %v1125 = vsel %vm1007, %v1121, 0
        %v1128 = vsel %vm1007, %v1123, 0
        %1130 = vmatprep.subr.bf16.mxu0 0
        %1131 = vmatpush1.bf16.xpose.msra.mxu0 0
        %1132 = vmatprep.subr.bf16.mxu0 0
        %1133 = vmatpush1.bf16.xpose.msra.mxu0 0
        %1134 = vmatprep.subr.bf16.mxu0 0
        %1135 = vmatpush1.bf16.xpose.msra.mxu0 0
        %1136 = vmatprep.subr.bf16.mxu0 0
        %1137 = vmatpush1.bf16.xpose.msra.mxu0 0
        %1138 = vmatprep.subr.bf16.mxu0 0
        %1139 = vmatpush1.bf16.xpose.msra.mxu0 0
        %1140 = vmatprep.subr.bf16.mxu0 0
        %1141 = vmatpush1.bf16.xpose.msra.mxu0 0
        %1142 = vmatprep.subr.bf16.mxu0 0
        %1143 = vmatpush1.bf16.xpose.msra.mxu0 0
        %1144 = vmatprep.subr.bf16.mxu0 0
        %1145 = vmatpush1.bf16.xpose.msra.mxu0 %v1128
        %1146 = vmatprep.subr.bf16.mxu0 0
        %1147 = vmatpush2.bf16.xpose.msra.mxu0 0
        %1148 = vmatprep.subr.bf16.mxu0 0
        %1149 = vmatpush2.bf16.xpose.msra.mxu0 0
        %1150 = vmatprep.subr.bf16.mxu0 0
        %1151 = vmatpush2.bf16.xpose.msra.mxu0 0
        %1152 = vmatprep.subr.bf16.mxu0 0
        %1153 = vmatpush2.bf16.xpose.msra.mxu0 0
        %1154 = vmatprep.subr.bf16.mxu0 0
        %1155 = vmatpush2.bf16.xpose.msra.mxu0 0
        %1156 = vmatprep.subr.bf16.mxu0 0
        %1157 = vmatpush2.bf16.xpose.msra.mxu0 0
        %1158 = vmatprep.subr.bf16.mxu0 0
        %1159 = vmatpush2.bf16.xpose.msra.mxu0 0
        %1160 = vmatprep.subr.bf16.mxu0 0
        %1161 = vmatpush2.bf16.xpose.msra.mxu0 0
        %1162 = vmatprep.mubr.bf16.mxu0 0
        %1163 = vmatmul.mubr.bf16.gmra.mxu0 %v1125
        %v1164 = vpop.f32.mrf.mxu0
        %v1165 = vadd.f32 0.0, %v1164
        %v1166 = vpop.f32.mrf.mxu0
        %v1167 = vpop.f32.mrf.mxu0
        %v1168 = vpop.f32.mrf.mxu0
        %1169 = vdwg.mxu0
        %v1170 = vsel %vm1054, %v1165, -inf
        %1171 = vmax.xlane.f32.xlu0 %v1170
        %v1172 = vpop.xlane.xlu0 %1171
        %v1173 = vsub.f32 %v1165, %v1172
        %v1174 = vmul.f32 %v1173, 1.442695
        %v1175 = vpow.pop %v1174
        %v1176 = vsel %vm1054, %v1175, 0.0
        %1177 = vadd.xlane.f32.xlu0 %v1176
        %v1178 = vpop.xlane.xlu0 %1177
        %v1179 = vrcp.pop %v1178
        %v1180 = vmul.f32 %v1175, %v1179
        %v1181 = vpack.c.bf16 %v1180, %v1180
        %1183 = vrot.lane.b32.xlu0 %v995, 112
        %v1184 = vpop.permute.xlu0 %1183
        %v1186 = vsel %vm1067, %v1181, 0
        %v1189 = vand.u32 %v1184, %v1074
        %1191 = vmatprep.subr.bf16.mxu0 0
        %1192 = vmatpush1.bf16.msra.mxu0 0
        %1193 = vmatprep.subr.bf16.mxu0 0
        %1194 = vmatpush1.bf16.msra.mxu0 0
        %1195 = vmatprep.subr.bf16.mxu0 0
        %1196 = vmatpush1.bf16.msra.mxu0 0
        %1197 = vmatprep.subr.bf16.mxu0 0
        %1198 = vmatpush1.bf16.msra.mxu0 0
        %1199 = vmatprep.subr.bf16.mxu0 0
        %1200 = vmatpush1.bf16.msra.mxu0 0
        %1201 = vmatprep.subr.bf16.mxu0 0
        %1202 = vmatpush1.bf16.msra.mxu0 0
        %1203 = vmatprep.subr.bf16.mxu0 0
        %1204 = vmatpush1.bf16.msra.mxu0 0
        %1205 = vmatprep.subr.bf16.mxu0 0
        %1206 = vmatpush1.bf16.msra.mxu0 %v1189
        %1207 = vmatprep.subr.bf16.mxu0 0
        %1208 = vmatpush2.bf16.msra.mxu0 0
        %1209 = vmatprep.subr.bf16.mxu0 0
        %1210 = vmatpush2.bf16.msra.mxu0 0
        %1211 = vmatprep.subr.bf16.mxu0 0
        %1212 = vmatpush2.bf16.msra.mxu0 0
        %1213 = vmatprep.subr.bf16.mxu0 0
        %1214 = vmatpush2.bf16.msra.mxu0 0
        %1215 = vmatprep.subr.bf16.mxu0 0
        %1216 = vmatpush2.bf16.msra.mxu0 0
        %1217 = vmatprep.subr.bf16.mxu0 0
        %1218 = vmatpush2.bf16.msra.mxu0 0
        %1219 = vmatprep.subr.bf16.mxu0 0
        %1220 = vmatpush2.bf16.msra.mxu0 0
        %1221 = vmatprep.subr.bf16.mxu0 0
        %1222 = vmatpush2.bf16.msra.mxu0 0
        %1223 = vmatprep.mubr.bf16.mxu0 0
        %1224 = vmatmul.mubr.bf16.gmra.mxu0 %v1186
        %v1225 = vpop.f32.mrf.mxu0
        %v1226 = vadd.f32 0.0, %v1225
        %v1227 = vpop.f32.mrf.mxu0
        %v1228 = vpop.f32.mrf.mxu0
        %v1229 = vpop.f32.mrf.mxu0
        %1230 = vdwg.mxu0
        %v1231 = vpack.c.bf16 %v1226, %v1226
        %v1234 = vunpack.c.l.b16 %v998
        %v1235 = vunpack.c.l.b16 %v999
        %v1236 = vpack.c.b16 %v1235, %v1234
        %v1239 = vsel %vm1007, %v1231, 0
        %1241 = vmatprep.subr.bf16.mxu0 0
        %1242 = vmatpush1.bf16.msra.mxu0 0
        %1243 = vmatprep.subr.bf16.mxu0 0
        %1244 = vmatpush1.bf16.msra.mxu0 0
        %1245 = vmatprep.subr.bf16.mxu0 0
        %1246 = vmatpush1.bf16.msra.mxu0 0
        %1247 = vmatprep.subr.bf16.mxu0 0
        %1248 = vmatpush1.bf16.msra.mxu0 0
        %1249 = vmatprep.subr.bf16.mxu0 0
        %1250 = vmatpush1.bf16.msra.mxu0 0
        %1251 = vmatprep.subr.bf16.mxu0 0
        %1252 = vmatpush1.bf16.msra.mxu0 0
        %1253 = vmatprep.subr.bf16.mxu0 0
        %1254 = vmatpush1.bf16.msra.mxu0 0
        %1255 = vmatprep.subr.bf16.mxu0 0
        %1256 = vmatpush1.bf16.msra.mxu0 %v1236
        %1257 = vmatprep.subr.bf16.mxu0 0
        %1258 = vmatpush2.bf16.msra.mxu0 0
        %1259 = vmatprep.subr.bf16.mxu0 0
        %1260 = vmatpush2.bf16.msra.mxu0 0
        %1261 = vmatprep.subr.bf16.mxu0 0
        %1262 = vmatpush2.bf16.msra.mxu0 0
        %1263 = vmatprep.subr.bf16.mxu0 0
        %1264 = vmatpush2.bf16.msra.mxu0 0
        %1265 = vmatprep.subr.bf16.mxu0 0
        %1266 = vmatpush2.bf16.msra.mxu0 0
        %1267 = vmatprep.subr.bf16.mxu0 0
        %1268 = vmatpush2.bf16.msra.mxu0 0
        %1269 = vmatprep.subr.bf16.mxu0 0
        %1270 = vmatpush2.bf16.msra.mxu0 0
        %1271 = vmatprep.subr.bf16.mxu0 0
        %1272 = vmatpush2.bf16.msra.mxu0 0
        %1273 = vmatprep.mubr.bf16.mxu0 0
        %1274 = vmatmul.mubr.bf16.gmra.mxu0 %v1239
        %v1275 = vpop.f32.mrf.mxu0
        %v1276 = vadd.f32 0.0, %v1275
        %v1277 = vpop.f32.mrf.mxu0
        %v1278 = vpop.f32.mrf.mxu0
        %v1279 = vpop.f32.mrf.mxu0
        %1280 = vdwg.mxu0
        %v1283 = vunpack.c.l.b16 %v996
        %v1284 = vunpack.c.l.b16 %v997
        %v1285 = vpack.c.b16 %v1284, %v1283
        %v1288 = vsel %vm1007, %v1118, 0
        %1290 = vmatprep.subr.bf16.mxu0 0
        %1291 = vmatpush1.bf16.msra.mxu0 0
        %1292 = vmatprep.subr.bf16.mxu0 0
        %1293 = vmatpush1.bf16.msra.mxu0 0
        %1294 = vmatprep.subr.bf16.mxu0 0
        %1295 = vmatpush1.bf16.msra.mxu0 0
        %1296 = vmatprep.subr.bf16.mxu0 0
        %1297 = vmatpush1.bf16.msra.mxu0 0
        %1298 = vmatprep.subr.bf16.mxu0 0
        %1299 = vmatpush1.bf16.msra.mxu0 0
        %1300 = vmatprep.subr.bf16.mxu0 0
        %1301 = vmatpush1.bf16.msra.mxu0 0
        %1302 = vmatprep.subr.bf16.mxu0 0
        %1303 = vmatpush1.bf16.msra.mxu0 0
        %1304 = vmatprep.subr.bf16.mxu0 0
        %1305 = vmatpush1.bf16.msra.mxu0 %v1285
        %1306 = vmatprep.subr.bf16.mxu0 0
        %1307 = vmatpush2.bf16.msra.mxu0 0
        %1308 = vmatprep.subr.bf16.mxu0 0
        %1309 = vmatpush2.bf16.msra.mxu0 0
        %1310 = vmatprep.subr.bf16.mxu0 0
        %1311 = vmatpush2.bf16.msra.mxu0 0
        %1312 = vmatprep.subr.bf16.mxu0 0
        %1313 = vmatpush2.bf16.msra.mxu0 0
        %1314 = vmatprep.subr.bf16.mxu0 0
        %1315 = vmatpush2.bf16.msra.mxu0 0
        %1316 = vmatprep.subr.bf16.mxu0 0
        %1317 = vmatpush2.bf16.msra.mxu0 0
        %1318 = vmatprep.subr.bf16.mxu0 0
        %1319 = vmatpush2.bf16.msra.mxu0 0
        %1320 = vmatprep.subr.bf16.mxu0 0
        %1321 = vmatpush2.bf16.msra.mxu0 0
        %1322 = vmatprep.mubr.bf16.mxu0 0
        %1323 = vmatmul.mubr.bf16.gmra.mxu0 %v1288
        %v1324 = vpop.f32.mrf.mxu0
        %v1325 = vadd.f32 %v1276, %v1324
        %v1326 = vpop.f32.mrf.mxu0
        %v1327 = vpop.f32.mrf.mxu0
        %v1328 = vpop.f32.mrf.mxu0
        %1329 = vdwg.mxu0
        %1330 = vrot.lane.b32.xlu0 %v993, 96
        %v1331 = vpop.permute.xlu0 %1330
        %1332 = vrot.lane.b32.xlu0 %v994, 32
        %v1333 = vpop.permute.xlu0 %1332
        %v1335 = vsel %vm1007, %v1331, 0
        %v1338 = vsel %vm1007, %v1333, 0
        %1340 = vmatprep.subr.bf16.mxu0 0
        %1341 = vmatpush1.bf16.xpose.msra.mxu0 0
        %1342 = vmatprep.subr.bf16.mxu0 0
        %1343 = vmatpush1.bf16.xpose.msra.mxu0 0
        %1344 = vmatprep.subr.bf16.mxu0 0
        %1345 = vmatpush1.bf16.xpose.msra.mxu0 0
        %1346 = vmatprep.subr.bf16.mxu0 0
        %1347 = vmatpush1.bf16.xpose.msra.mxu0 0
        %1348 = vmatprep.subr.bf16.mxu0 0
        %1349 = vmatpush1.bf16.xpose.msra.mxu0 0
        %1350 = vmatprep.subr.bf16.mxu0 0
        %1351 = vmatpush1.bf16.xpose.msra.mxu0 0
        %1352 = vmatprep.subr.bf16.mxu0 0
        %1353 = vmatpush1.bf16.xpose.msra.mxu0 0
        %1354 = vmatprep.subr.bf16.mxu0 0
        %1355 = vmatpush1.bf16.xpose.msra.mxu0 %v1338
        %1356 = vmatprep.subr.bf16.mxu0 0
        %1357 = vmatpush2.bf16.xpose.msra.mxu0 0
        %1358 = vmatprep.subr.bf16.mxu0 0
        %1359 = vmatpush2.bf16.xpose.msra.mxu0 0
        %1360 = vmatprep.subr.bf16.mxu0 0
        %1361 = vmatpush2.bf16.xpose.msra.mxu0 0
        %1362 = vmatprep.subr.bf16.mxu0 0
        %1363 = vmatpush2.bf16.xpose.msra.mxu0 0
        %1364 = vmatprep.subr.bf16.mxu0 0
        %1365 = vmatpush2.bf16.xpose.msra.mxu0 0
        %1366 = vmatprep.subr.bf16.mxu0 0
        %1367 = vmatpush2.bf16.xpose.msra.mxu0 0
        %1368 = vmatprep.subr.bf16.mxu0 0
        %1369 = vmatpush2.bf16.xpose.msra.mxu0 0
        %1370 = vmatprep.subr.bf16.mxu0 0
        %1371 = vmatpush2.bf16.xpose.msra.mxu0 0
        %1372 = vmatprep.mubr.bf16.mxu0 0
        %1373 = vmatmul.mubr.bf16.gmra.mxu0 %v1335
        %v1374 = vpop.f32.mrf.mxu0
        %v1375 = vadd.f32 0.0, %v1374
        %v1376 = vpop.f32.mrf.mxu0
        %v1377 = vpop.f32.mrf.mxu0
        %v1378 = vpop.f32.mrf.mxu0
        %1379 = vdwg.mxu0
        %v1380 = vsel %vm1054, %v1375, -inf
        %1381 = vmax.xlane.f32.xlu0 %v1380
        %v1382 = vpop.xlane.xlu0 %1381
        %v1383 = vsub.f32 %v1375, %v1382
        %v1384 = vmul.f32 %v1383, 1.442695
        %v1385 = vpow.pop %v1384
        %v1386 = vsel %vm1054, %v1385, 0.0
        %1387 = vadd.xlane.f32.xlu0 %v1386
        %v1388 = vpop.xlane.xlu0 %1387
        %v1389 = vrcp.pop %v1388
        %v1390 = vmul.f32 %v1385, %v1389
        %v1391 = vpack.c.bf16 %v1390, %v1390
        %1392 = vrot.lane.b32.xlu0 %v995, 96
        %v1393 = vpop.permute.xlu0 %1392
        %v1395 = vsel %vm1067, %v1391, 0
        %v1398 = vand.u32 %v1393, %v1074
        %1400 = vmatprep.subr.bf16.mxu0 0
        %1401 = vmatpush1.bf16.msra.mxu0 0
        %1402 = vmatprep.subr.bf16.mxu0 0
        %1403 = vmatpush1.bf16.msra.mxu0 0
        %1404 = vmatprep.subr.bf16.mxu0 0
        %1405 = vmatpush1.bf16.msra.mxu0 0
        %1406 = vmatprep.subr.bf16.mxu0 0
        %1407 = vmatpush1.bf16.msra.mxu0 0
        %1408 = vmatprep.subr.bf16.mxu0 0
        %1409 = vmatpush1.bf16.msra.mxu0 0
        %1410 = vmatprep.subr.bf16.mxu0 0
        %1411 = vmatpush1.bf16.msra.mxu0 0
        %1412 = vmatprep.subr.bf16.mxu0 0
        %1413 = vmatpush1.bf16.msra.mxu0 0
        %1414 = vmatprep.subr.bf16.mxu0 0
        %1415 = vmatpush1.bf16.msra.mxu0 %v1398
        %1416 = vmatprep.subr.bf16.mxu0 0
        %1417 = vmatpush2.bf16.msra.mxu0 0
        %1418 = vmatprep.subr.bf16.mxu0 0
        %1419 = vmatpush2.bf16.msra.mxu0 0
        %1420 = vmatprep.subr.bf16.mxu0 0
        %1421 = vmatpush2.bf16.msra.mxu0 0
        %1422 = vmatprep.subr.bf16.mxu0 0
        %1423 = vmatpush2.bf16.msra.mxu0 0
        %1424 = vmatprep.subr.bf16.mxu0 0
        %1425 = vmatpush2.bf16.msra.mxu0 0
        %1426 = vmatprep.subr.bf16.mxu0 0
        %1427 = vmatpush2.bf16.msra.mxu0 0
        %1428 = vmatprep.subr.bf16.mxu0 0
        %1429 = vmatpush2.bf16.msra.mxu0 0
        %1430 = vmatprep.subr.bf16.mxu0 0
        %1431 = vmatpush2.bf16.msra.mxu0 0
        %1432 = vmatprep.mubr.bf16.mxu0 0
        %1433 = vmatmul.mubr.bf16.gmra.mxu0 %v1395
        %v1434 = vpop.f32.mrf.mxu0
        %v1435 = vadd.f32 0.0, %v1434
        %v1436 = vpop.f32.mrf.mxu0
        %v1437 = vpop.f32.mrf.mxu0
        %v1438 = vpop.f32.mrf.mxu0
        %1439 = vdwg.mxu0
        %v1440 = vpack.c.bf16 %v1435, %v1435
        %v1443 = vunpack.c.l.b16 %v1000
        %v1444 = vunpack.c.l.b16 %v1001
        %v1445 = vpack.c.b16 %v1444, %v1443
        %v1448 = vsel %vm1007, %v1440, 0
        %1450 = vmatprep.subr.bf16.mxu0 0
        %1451 = vmatpush1.bf16.msra.mxu0 0
        %1452 = vmatprep.subr.bf16.mxu0 0
        %1453 = vmatpush1.bf16.msra.mxu0 0
        %1454 = vmatprep.subr.bf16.mxu0 0
        %1455 = vmatpush1.bf16.msra.mxu0 0
        %1456 = vmatprep.subr.bf16.mxu0 0
        %1457 = vmatpush1.bf16.msra.mxu0 0
        %1458 = vmatprep.subr.bf16.mxu0 0
        %1459 = vmatpush1.bf16.msra.mxu0 0
        %1460 = vmatprep.subr.bf16.mxu0 0
        %1461 = vmatpush1.bf16.msra.mxu0 0
        %1462 = vmatprep.subr.bf16.mxu0 0
        %1463 = vmatpush1.bf16.msra.mxu0 0
        %1464 = vmatprep.subr.bf16.mxu0 0
        %1465 = vmatpush1.bf16.msra.mxu0 %v1445
        %1466 = vmatprep.subr.bf16.mxu0 0
        %1467 = vmatpush2.bf16.msra.mxu0 0
        %1468 = vmatprep.subr.bf16.mxu0 0
        %1469 = vmatpush2.bf16.msra.mxu0 0
        %1470 = vmatprep.subr.bf16.mxu0 0
        %1471 = vmatpush2.bf16.msra.mxu0 0
        %1472 = vmatprep.subr.bf16.mxu0 0
        %1473 = vmatpush2.bf16.msra.mxu0 0
        %1474 = vmatprep.subr.bf16.mxu0 0
        %1475 = vmatpush2.bf16.msra.mxu0 0
        %1476 = vmatprep.subr.bf16.mxu0 0
        %1477 = vmatpush2.bf16.msra.mxu0 0
        %1478 = vmatprep.subr.bf16.mxu0 0
        %1479 = vmatpush2.bf16.msra.mxu0 0
        %1480 = vmatprep.subr.bf16.mxu0 0
        %1481 = vmatpush2.bf16.msra.mxu0 0
        %1482 = vmatprep.mubr.bf16.mxu0 0
        %1483 = vmatmul.mubr.bf16.gmra.mxu0 %v1448
        %v1484 = vpop.f32.mrf.mxu0
        %v1485 = vadd.f32 0.0, %v1484
        %v1486 = vpop.f32.mrf.mxu0
        %v1487 = vpop.f32.mrf.mxu0
        %v1488 = vpop.f32.mrf.mxu0
        %1489 = vdwg.mxu0
        %v1490 = vadd.f32 %v1325, %v1485
        %1491 = vrot.lane.b32.xlu0 %v993, 80
        %v1492 = vpop.permute.xlu0 %1491
        %1493 = vrot.lane.b32.xlu0 %v994, 16
        %v1494 = vpop.permute.xlu0 %1493
        %v1496 = vsel %vm1007, %v1492, 0
        %v1499 = vsel %vm1007, %v1494, 0
        %1501 = vmatprep.subr.bf16.mxu0 0
        %1502 = vmatpush1.bf16.xpose.msra.mxu0 0
        %1503 = vmatprep.subr.bf16.mxu0 0
        %1504 = vmatpush1.bf16.xpose.msra.mxu0 0
        %1505 = vmatprep.subr.bf16.mxu0 0
        %1506 = vmatpush1.bf16.xpose.msra.mxu0 0
        %1507 = vmatprep.subr.bf16.mxu0 0
        %1508 = vmatpush1.bf16.xpose.msra.mxu0 0
        %1509 = vmatprep.subr.bf16.mxu0 0
        %1510 = vmatpush1.bf16.xpose.msra.mxu0 0
        %1511 = vmatprep.subr.bf16.mxu0 0
        %1512 = vmatpush1.bf16.xpose.msra.mxu0 0
        %1513 = vmatprep.subr.bf16.mxu0 0
        %1514 = vmatpush1.bf16.xpose.msra.mxu0 0
        %1515 = vmatprep.subr.bf16.mxu0 0
        %1516 = vmatpush1.bf16.xpose.msra.mxu0 %v1499
        %1517 = vmatprep.subr.bf16.mxu0 0
        %1518 = vmatpush2.bf16.xpose.msra.mxu0 0
        %1519 = vmatprep.subr.bf16.mxu0 0
        %1520 = vmatpush2.bf16.xpose.msra.mxu0 0
        %1521 = vmatprep.subr.bf16.mxu0 0
        %1522 = vmatpush2.bf16.xpose.msra.mxu0 0
        %1523 = vmatprep.subr.bf16.mxu0 0
        %1524 = vmatpush2.bf16.xpose.msra.mxu0 0
        %1525 = vmatprep.subr.bf16.mxu0 0
        %1526 = vmatpush2.bf16.xpose.msra.mxu0 0
        %1527 = vmatprep.subr.bf16.mxu0 0
        %1528 = vmatpush2.bf16.xpose.msra.mxu0 0
        %1529 = vmatprep.subr.bf16.mxu0 0
        %1530 = vmatpush2.bf16.xpose.msra.mxu0 0
        %1531 = vmatprep.subr.bf16.mxu0 0
        %1532 = vmatpush2.bf16.xpose.msra.mxu0 0
        %1533 = vmatprep.mubr.bf16.mxu0 0
        %1534 = vmatmul.mubr.bf16.gmra.mxu0 %v1496
        %v1535 = vpop.f32.mrf.mxu0
        %v1536 = vadd.f32 0.0, %v1535
        %v1537 = vpop.f32.mrf.mxu0
        %v1538 = vpop.f32.mrf.mxu0
        %v1539 = vpop.f32.mrf.mxu0
        %1540 = vdwg.mxu0
        %v1541 = vsel %vm1054, %v1536, -inf
        %1542 = vmax.xlane.f32.xlu0 %v1541
        %v1543 = vpop.xlane.xlu0 %1542
        %v1544 = vsub.f32 %v1536, %v1543
        %v1545 = vmul.f32 %v1544, 1.442695
        %v1546 = vpow.pop %v1545
        %v1547 = vsel %vm1054, %v1546, 0.0
        %1548 = vadd.xlane.f32.xlu0 %v1547
        %v1549 = vpop.xlane.xlu0 %1548
        %v1550 = vrcp.pop %v1549
        %v1551 = vmul.f32 %v1546, %v1550
        %v1552 = vpack.c.bf16 %v1551, %v1551
        %1553 = vrot.lane.b32.xlu0 %v995, 80
        %v1554 = vpop.permute.xlu0 %1553
        %v1556 = vsel %vm1067, %v1552, 0
        %v1559 = vand.u32 %v1554, %v1074
        %1561 = vmatprep.subr.bf16.mxu0 0
        %1562 = vmatpush1.bf16.msra.mxu0 0
        %1563 = vmatprep.subr.bf16.mxu0 0
        %1564 = vmatpush1.bf16.msra.mxu0 0
        %1565 = vmatprep.subr.bf16.mxu0 0
        %1566 = vmatpush1.bf16.msra.mxu0 0
        %1567 = vmatprep.subr.bf16.mxu0 0
        %1568 = vmatpush1.bf16.msra.mxu0 0
        %1569 = vmatprep.subr.bf16.mxu0 0
        %1570 = vmatpush1.bf16.msra.mxu0 0
        %1571 = vmatprep.subr.bf16.mxu0 0
        %1572 = vmatpush1.bf16.msra.mxu0 0
        %1573 = vmatprep.subr.bf16.mxu0 0
        %1574 = vmatpush1.bf16.msra.mxu0 0
        %1575 = vmatprep.subr.bf16.mxu0 0
        %1576 = vmatpush1.bf16.msra.mxu0 %v1559
        %1577 = vmatprep.subr.bf16.mxu0 0
        %1578 = vmatpush2.bf16.msra.mxu0 0
        %1579 = vmatprep.subr.bf16.mxu0 0
        %1580 = vmatpush2.bf16.msra.mxu0 0
        %1581 = vmatprep.subr.bf16.mxu0 0
        %1582 = vmatpush2.bf16.msra.mxu0 0
        %1583 = vmatprep.subr.bf16.mxu0 0
        %1584 = vmatpush2.bf16.msra.mxu0 0
        %1585 = vmatprep.subr.bf16.mxu0 0
        %1586 = vmatpush2.bf16.msra.mxu0 0
        %1587 = vmatprep.subr.bf16.mxu0 0
        %1588 = vmatpush2.bf16.msra.mxu0 0
        %1589 = vmatprep.subr.bf16.mxu0 0
        %1590 = vmatpush2.bf16.msra.mxu0 0
        %1591 = vmatprep.subr.bf16.mxu0 0
        %1592 = vmatpush2.bf16.msra.mxu0 0
        %1593 = vmatprep.mubr.bf16.mxu0 0
        %1594 = vmatmul.mubr.bf16.gmra.mxu0 %v1556
        %v1595 = vpop.f32.mrf.mxu0
        %v1596 = vadd.f32 0.0, %v1595
        %v1597 = vpop.f32.mrf.mxu0
        %v1598 = vpop.f32.mrf.mxu0
        %v1599 = vpop.f32.mrf.mxu0
        %1600 = vdwg.mxu0
        %v1601 = vpack.c.bf16 %v1596, %v1596
        %v1604 = vunpack.c.l.b16 %v1002
        %v1605 = vunpack.c.l.b16 %v1003
        %v1606 = vpack.c.b16 %v1605, %v1604
        %v1609 = vsel %vm1007, %v1601, 0
        %1611 = vmatprep.subr.bf16.mxu0 0
        %1612 = vmatpush1.bf16.msra.mxu0 0
        %1613 = vmatprep.subr.bf16.mxu0 0
        %1614 = vmatpush1.bf16.msra.mxu0 0
        %1615 = vmatprep.subr.bf16.mxu0 0
        %1616 = vmatpush1.bf16.msra.mxu0 0
        %1617 = vmatprep.subr.bf16.mxu0 0
        %1618 = vmatpush1.bf16.msra.mxu0 0
        %1619 = vmatprep.subr.bf16.mxu0 0
        %1620 = vmatpush1.bf16.msra.mxu0 0
        %1621 = vmatprep.subr.bf16.mxu0 0
        %1622 = vmatpush1.bf16.msra.mxu0 0
        %1623 = vmatprep.subr.bf16.mxu0 0
        %1624 = vmatpush1.bf16.msra.mxu0 0
        %1625 = vmatprep.subr.bf16.mxu0 0
        %1626 = vmatpush1.bf16.msra.mxu0 %v1606
        %1627 = vmatprep.subr.bf16.mxu0 0
        %1628 = vmatpush2.bf16.msra.mxu0 0
        %1629 = vmatprep.subr.bf16.mxu0 0
        %1630 = vmatpush2.bf16.msra.mxu0 0
        %1631 = vmatprep.subr.bf16.mxu0 0
        %1632 = vmatpush2.bf16.msra.mxu0 0
        %1633 = vmatprep.subr.bf16.mxu0 0
        %1634 = vmatpush2.bf16.msra.mxu0 0
        %1635 = vmatprep.subr.bf16.mxu0 0
        %1636 = vmatpush2.bf16.msra.mxu0 0
        %1637 = vmatprep.subr.bf16.mxu0 0
        %1638 = vmatpush2.bf16.msra.mxu0 0
        %1639 = vmatprep.subr.bf16.mxu0 0
        %1640 = vmatpush2.bf16.msra.mxu0 0
        %1641 = vmatprep.subr.bf16.mxu0 0
        %1642 = vmatpush2.bf16.msra.mxu0 0
        %1643 = vmatprep.mubr.bf16.mxu0 0
        %1644 = vmatmul.mubr.bf16.gmra.mxu0 %v1609
        %v1645 = vpop.f32.mrf.mxu0
        %v1646 = vadd.f32 0.0, %v1645
        %v1647 = vpop.f32.mrf.mxu0
        %v1648 = vpop.f32.mrf.mxu0
        %v1649 = vpop.f32.mrf.mxu0
        %1650 = vdwg.mxu0
        %v1651 = vadd.f32 %v1490, %v1646
        %v1652 = vadd.f32 %v857, %v1651
        %v1653 = vld [vmem:[%s10] sm:$0x1]
        %v1655 = vlaneseq
        %v1656 = vshrl.u32 %v1655, 7
        %v1657 = vsub.s32 0, %v1656
        %v1658 = vrot.slane %v1653, %v1657
        %v1660 = vadd.f32 %v1652, %v1658
        %v1661 = vld [vmem:[%s11] sm:$0x1]
        %v1662 = vld [vmem:[%s12] sm:$0x1]
        %v1663 = vsel %vm829, %v1660, 0.0
        %1664 = vadd.xlane.f32.xlu0 %v1663
        %v1665 = vpop.xlane.xlu0 %1664
        %v1666 = vmul.f32 %v1665, %v833
        %v1667 = vsub.f32 %v1660, %v1666
        %v1668 = vmul.f32 %v1667, %v1667
        %v1669 = vsel %vm829, %v1668, 0.0
        %1670 = vadd.xlane.f32.xlu0 %v1669
        %v1671 = vpop.xlane.xlu0 %1670
        %v1672 = vmul.f32 %v1671, %v833
        %v1673 = vadd.f32 %v1672, 1e-05
        %v1674 = vrsqrt.pop %v1673
        %v1675 = vmul.f32 %v1667, %v1674
        %v1677 = vlaneseq
        %v1678 = vshrl.u32 %v1677, 7
        %v1679 = vsub.s32 0, %v1678
        %v1680 = vrot.slane %v1661, %v1679
        %v1682 = vmul.f32 %v1675, %v1680
        %v1684 = vlaneseq
        %v1685 = vshrl.u32 %v1684, 7
        %v1686 = vsub.s32 0, %v1685
        %v1687 = vrot.slane %v1662, %v1686
        %v1689 = vadd.f32 %v1682, %v1687
        %v1690 = vld [vmem:[%s13] sm:$0xff]
        %v1691 = vld [vmem:[%s13 + $0x8] sm:$0xff]
        %v1692 = vld [vmem:[%s13 + $0x10] sm:$0xff]
        %v1693 = vld [vmem:[%s13 + $0x18] sm:$0xff]
        %v1694 = vld [vmem:[%s13 + $0x20] sm:$0xff]
        %v1695 = vld [vmem:[%s13 + $0x28] sm:$0xff]
        %v1696 = vld [vmem:[%s13 + $0x30] sm:$0xff]
        %v1697 = vld [vmem:[%s13 + $0x38] sm:$0xff]
        %v1698 = vld [vmem:[%s14] sm:$0x3]
        %v1699 = vpack.c.bf16 %v1689, %v1689
        %v1701 = vlaneseq
        %v1702 = vshrl.u32 %v1701, 7
        %v1703 = vsub.s32 0, %v1702
        %v1704 = vrot.slane %v1698, %v1703
        %v1705 = vlaneseq
        %v1706 = vshrl.u32 %v1705, 7
        %v1707 = vsub.s32 1, %v1706
        %v1708 = vrot.slane %v1698, %v1707
        %v1719 = vunpack.c.l.b16 %v1690
        %v1720 = vunpack.c.h.b16 %v1690
        %v1721 = vunpack.c.l.b16 %v1691
        %v1722 = vunpack.c.h.b16 %v1691
        %v1723 = vunpack.c.l.b16 %v1692
        %v1724 = vunpack.c.h.b16 %v1692
        %v1725 = vunpack.c.l.b16 %v1693
        %v1726 = vunpack.c.h.b16 %v1693
        %v1727 = vunpack.c.l.b16 %v1694
        %v1728 = vunpack.c.h.b16 %v1694
        %v1729 = vunpack.c.l.b16 %v1695
        %v1730 = vunpack.c.h.b16 %v1695
        %v1731 = vunpack.c.l.b16 %v1696
        %v1732 = vunpack.c.h.b16 %v1696
        %v1733 = vunpack.c.l.b16 %v1697
        %v1734 = vunpack.c.h.b16 %v1697
        %v1735 = vpack.c.b16 %v1721, %v1719
        %v1736 = vpack.c.b16 %v1722, %v1720
        %v1737 = vpack.c.b16 %v1725, %v1723
        %v1738 = vpack.c.b16 %v1726, %v1724
        %v1739 = vpack.c.b16 %v1729, %v1727
        %v1740 = vpack.c.b16 %v1730, %v1728
        %v1741 = vpack.c.b16 %v1733, %v1731
        %v1742 = vpack.c.b16 %v1734, %v1732
        %v1752 = vsel %vm783, %v1699, 0
        %1754 = vmatprep.subr.bf16.mxu0 0
        %1755 = vmatpush1.bf16.msra.mxu0 0
        %1756 = vmatprep.subr.bf16.mxu0 0
        %1757 = vmatpush1.bf16.msra.mxu0 0
        %1758 = vmatprep.subr.bf16.mxu0 0
        %1759 = vmatpush1.bf16.msra.mxu0 0
        %1760 = vmatprep.subr.bf16.mxu0 0
        %1761 = vmatpush1.bf16.msra.mxu0 0
        %1762 = vmatprep.subr.bf16.mxu0 %v1742
        %1763 = vmatpush1.bf16.msra.mxu0 %v1741
        %1764 = vmatprep.subr.bf16.mxu0 %v1740
        %1765 = vmatpush1.bf16.msra.mxu0 %v1739
        %1766 = vmatprep.subr.bf16.mxu0 %v1738
        %1767 = vmatpush1.bf16.msra.mxu0 %v1737
        %1768 = vmatprep.subr.bf16.mxu0 %v1736
        %1769 = vmatpush1.bf16.msra.mxu0 %v1735
        %1770 = vmatprep.subr.bf16.mxu0 0
        %1771 = vmatpush2.bf16.msra.mxu0 0
        %1772 = vmatprep.subr.bf16.mxu0 0
        %1773 = vmatpush2.bf16.msra.mxu0 0
        %1774 = vmatprep.subr.bf16.mxu0 0
        %1775 = vmatpush2.bf16.msra.mxu0 0
        %1776 = vmatprep.subr.bf16.mxu0 0
        %1777 = vmatpush2.bf16.msra.mxu0 0
        %1778 = vmatprep.subr.bf16.mxu0 0
        %1779 = vmatpush2.bf16.msra.mxu0 0
        %1780 = vmatprep.subr.bf16.mxu0 0
        %1781 = vmatpush2.bf16.msra.mxu0 0
        %1782 = vmatprep.subr.bf16.mxu0 0
        %1783 = vmatpush2.bf16.msra.mxu0 0
        %1784 = vmatprep.subr.bf16.mxu0 0
        %1785 = vmatpush2.bf16.msra.mxu0 0
        %1786 = vmatprep.mubr.bf16.mxu0 0
        %1787 = vmatmul.mubr.bf16.gmra.mxu0 %v1752
        %v1788 = vpop.f32.mrf.mxu0
        %v1789 = vadd.f32 %v1704, %v1788
        %v1790 = vpop.f32.mrf.mxu0
        %v1791 = vadd.f32 %v1708, %v1790
        %v1792 = vpop.f32.mrf.mxu0
        %v1793 = vpop.f32.mrf.mxu0
        %1794 = vdwg.mxu0
        %v1795 = vmul.f32 %v1789, 1.702
        %v1796 = vmul.f32 %v1791, 1.702
        %v1797 = vxor.u32 %v1795, 2147483648
        %v1798 = vxor.u32 %v1796, 2147483648
        %v1799 = vmul.f32 %v1797, 1.442695
        %v1800 = vpow.pop %v1799
        %v1801 = vmul.f32 %v1798, 1.442695
        %v1802 = vpow.pop %v1801
        %v1803 = vadd.f32 %v1800, 1.0
        %v1804 = vadd.f32 %v1802, 1.0
        %v1805 = vrcp.pop %v1803
        %v1806 = vmul.f32 1.0, %v1805
        %v1807 = vrcp.pop %v1804
        %v1808 = vmul.f32 1.0, %v1807
        %v1809 = vmul.f32 %v1789, %v1806
        %v1810 = vmul.f32 %v1791, %v1808
        %v1811 = vld [vmem:[%s15] sm:$0xf]
        %v1812 = vld [vmem:[%s15 + $0x4] sm:$0xf]
        %v1813 = vld [vmem:[%s15 + $0x8] sm:$0xf]
        %v1814 = vld [vmem:[%s15 + $0xc] sm:$0xf]
        %v1815 = vld [vmem:[%s15 + $0x10] sm:$0xf]
        %v1816 = vld [vmem:[%s15 + $0x14] sm:$0xf]
        %v1817 = vld [vmem:[%s15 + $0x18] sm:$0xf]
        %v1818 = vld [vmem:[%s15 + $0x1c] sm:$0xf]
        %v1819 = vld [vmem:[%s15 + $0x20] sm:$0xf]
        %v1820 = vld [vmem:[%s15 + $0x24] sm:$0xf]
        %v1821 = vld [vmem:[%s15 + $0x28] sm:$0xf]
        %v1822 = vld [vmem:[%s15 + $0x2c] sm:$0xf]
        %v1823 = vld [vmem:[%s15 + $0x30] sm:$0xf]
        %v1824 = vld [vmem:[%s15 + $0x34] sm:$0xf]
        %v1825 = vld [vmem:[%s15 + $0x38] sm:$0xf]
        %v1826 = vld [vmem:[%s15 + $0x3c] sm:$0xf]
        %v1827 = vld [vmem:[%s15 + $0x40] sm:$0xf]
        %v1828 = vld [vmem:[%s15 + $0x44] sm:$0xf]
        %v1829 = vld [vmem:[%s15 + $0x48] sm:$0xf]
        %v1830 = vld [vmem:[%s15 + $0x4c] sm:$0xf]
        %v1831 = vld [vmem:[%s15 + $0x50] sm:$0xf]
        %v1832 = vld [vmem:[%s15 + $0x54] sm:$0xf]
        %v1833 = vld [vmem:[%s15 + $0x58] sm:$0xf]
        %v1834 = vld [vmem:[%s15 + $0x5c] sm:$0xf]
        %v1835 = vld [vmem:[%s15 + $0x60] sm:$0xf]
        %v1836 = vld [vmem:[%s15 + $0x64] sm:$0xf]
        %v1837 = vld [vmem:[%s15 + $0x68] sm:$0xf]
        %v1838 = vld [vmem:[%s15 + $0x6c] sm:$0xf]
        %v1839 = vld [vmem:[%s15 + $0x70] sm:$0xf]
        %v1840 = vld [vmem:[%s15 + $0x74] sm:$0xf]
        %v1841 = vld [vmem:[%s15 + $0x78] sm:$0xf]
        %v1842 = vld [vmem:[%s15 + $0x7c] sm:$0xf]
        %v1843 = vld [vmem:[%s16] sm:$0x1]
        %v1844 = vpack.c.bf16 %v1809, %v1809
        %v1845 = vpack.c.bf16 %v1810, %v1810
        %v1847 = vlaneseq
        %v1848 = vshrl.u32 %v1847, 7
        %v1849 = vsub.s32 0, %v1848
        %v1850 = vrot.slane %v1843, %v1849
        %v1884 = vunpack.c.l.b16 %v1811
        %v1885 = vunpack.c.l.b16 %v1812
        %v1886 = vunpack.c.l.b16 %v1813
        %v1887 = vunpack.c.l.b16 %v1814
        %v1888 = vunpack.c.l.b16 %v1815
        %v1889 = vunpack.c.l.b16 %v1816
        %v1890 = vunpack.c.l.b16 %v1817
        %v1891 = vunpack.c.l.b16 %v1818
        %v1892 = vunpack.c.l.b16 %v1819
        %v1893 = vunpack.c.l.b16 %v1820
        %v1894 = vunpack.c.l.b16 %v1821
        %v1895 = vunpack.c.l.b16 %v1822
        %v1896 = vunpack.c.l.b16 %v1823
        %v1897 = vunpack.c.l.b16 %v1824
        %v1898 = vunpack.c.l.b16 %v1825
        %v1899 = vunpack.c.l.b16 %v1826
        %v1900 = vunpack.c.l.b16 %v1827
        %v1901 = vunpack.c.l.b16 %v1828
        %v1902 = vunpack.c.l.b16 %v1829
        %v1903 = vunpack.c.l.b16 %v1830
        %v1904 = vunpack.c.l.b16 %v1831
        %v1905 = vunpack.c.l.b16 %v1832
        %v1906 = vunpack.c.l.b16 %v1833
        %v1907 = vunpack.c.l.b16 %v1834
        %v1908 = vunpack.c.l.b16 %v1835
        %v1909 = vunpack.c.l.b16 %v1836
        %v1910 = vunpack.c.l.b16 %v1837
        %v1911 = vunpack.c.l.b16 %v1838
        %v1912 = vunpack.c.l.b16 %v1839
        %v1913 = vunpack.c.l.b16 %v1840
        %v1914 = vunpack.c.l.b16 %v1841
        %v1915 = vunpack.c.l.b16 %v1842
        %v1916 = vpack.c.b16 %v1885, %v1884
        %v1917 = vpack.c.b16 %v1887, %v1886
        %v1918 = vpack.c.b16 %v1889, %v1888
        %v1919 = vpack.c.b16 %v1891, %v1890
        %v1920 = vpack.c.b16 %v1893, %v1892
        %v1921 = vpack.c.b16 %v1895, %v1894
        %v1922 = vpack.c.b16 %v1897, %v1896
        %v1923 = vpack.c.b16 %v1899, %v1898
        %v1924 = vpack.c.b16 %v1901, %v1900
        %v1925 = vpack.c.b16 %v1903, %v1902
        %v1926 = vpack.c.b16 %v1905, %v1904
        %v1927 = vpack.c.b16 %v1907, %v1906
        %v1928 = vpack.c.b16 %v1909, %v1908
        %v1929 = vpack.c.b16 %v1911, %v1910
        %v1930 = vpack.c.b16 %v1913, %v1912
        %v1931 = vpack.c.b16 %v1915, %v1914
        %1948 = vmatprep.subr.bf16.mxu0 0
        %1949 = vmatpush1.bf16.msra.mxu0 %v1923
        %1950 = vmatprep.subr.bf16.mxu0 0
        %1951 = vmatpush1.bf16.msra.mxu0 %v1922
        %1952 = vmatprep.subr.bf16.mxu0 0
        %1953 = vmatpush1.bf16.msra.mxu0 %v1921
        %1954 = vmatprep.subr.bf16.mxu0 0
        %1955 = vmatpush1.bf16.msra.mxu0 %v1920
        %1956 = vmatprep.subr.bf16.mxu0 0
        %1957 = vmatpush1.bf16.msra.mxu0 %v1919
        %1958 = vmatprep.subr.bf16.mxu0 0
        %1959 = vmatpush1.bf16.msra.mxu0 %v1918
        %1960 = vmatprep.subr.bf16.mxu0 0
        %1961 = vmatpush1.bf16.msra.mxu0 %v1917
        %1962 = vmatprep.subr.bf16.mxu0 0
        %1963 = vmatpush1.bf16.msra.mxu0 %v1916
        %1964 = vmatprep.subr.bf16.mxu0 0
        %1965 = vmatpush2.bf16.msra.mxu0 %v1931
        %1966 = vmatprep.subr.bf16.mxu0 0
        %1967 = vmatpush2.bf16.msra.mxu0 %v1930
        %1968 = vmatprep.subr.bf16.mxu0 0
        %1969 = vmatpush2.bf16.msra.mxu0 %v1929
        %1970 = vmatprep.subr.bf16.mxu0 0
        %1971 = vmatpush2.bf16.msra.mxu0 %v1928
        %1972 = vmatprep.subr.bf16.mxu0 0
        %1973 = vmatpush2.bf16.msra.mxu0 %v1927
        %1974 = vmatprep.subr.bf16.mxu0 0
        %1975 = vmatpush2.bf16.msra.mxu0 %v1926
        %1976 = vmatprep.subr.bf16.mxu0 0
        %1977 = vmatpush2.bf16.msra.mxu0 %v1925
        %1978 = vmatprep.subr.bf16.mxu0 0
        %1979 = vmatpush2.bf16.msra.mxu0 %v1924
        %1980 = vmatprep.mubr.bf16.mxu0 %v1845
        %1981 = vmatmul.mubr.bf16.gmra.mxu0 %v1844
        %v1982 = vpop.f32.mrf.mxu0
        %v1983 = vadd.f32 %v1850, %v1982
        %v1984 = vpop.f32.mrf.mxu0
        %v1985 = vpop.f32.mrf.mxu0
        %v1986 = vpop.f32.mrf.mxu0
        %1987 = vdwg.mxu0
        %v1988 = vadd.f32 %v1660, %v1983
        %s1989 = scalar_lea.vmem %s5, 1
        %v1990 = vld [vmem:[%s1989] sm:$0x1]
        %s1991 = scalar_lea.vmem %s6, 1
        %v1992 = vld [vmem:[%s1991] sm:$0x1]
        %v1993 = vsel %vm829, %v1988, 0.0
        %1994 = vadd.xlane.f32.xlu0 %v1993
        %v1995 = vpop.xlane.xlu0 %1994
        %v1996 = vmul.f32 %v1995, %v833
        %v1997 = vsub.f32 %v1988, %v1996
        %v1998 = vmul.f32 %v1997, %v1997
        %v1999 = vsel %vm829, %v1998, 0.0
        %2000 = vadd.xlane.f32.xlu0 %v1999
        %v2001 = vpop.xlane.xlu0 %2000
        %v2002 = vmul.f32 %v2001, %v833
        %v2003 = vadd.f32 %v2002, 1e-05
        %v2004 = vrsqrt.pop %v2003
        %v2005 = vmul.f32 %v1997, %v2004
        %v2007 = vlaneseq
        %v2008 = vshrl.u32 %v2007, 7
        %v2009 = vsub.s32 0, %v2008
        %v2010 = vrot.slane %v1990, %v2009
        %v2012 = vmul.f32 %v2005, %v2010
        %v2014 = vlaneseq
        %v2015 = vshrl.u32 %v2014, 7
        %v2016 = vsub.s32 0, %v2015
        %v2017 = vrot.slane %v1992, %v2016
        %v2019 = vadd.f32 %v2012, %v2017
        %s2020 = scalar_lea.vmem %s7, 64
        %v2021 = vld [vmem:[%s2020] sm:$0xff]
        %v2022 = vld [vmem:[%s2020 + $0x8] sm:$0xff]
        %v2023 = vld [vmem:[%s2020 + $0x10] sm:$0xff]
        %v2024 = vld [vmem:[%s2020 + $0x18] sm:$0xff]
        %v2025 = vld [vmem:[%s2020 + $0x20] sm:$0xff]
        %v2026 = vld [vmem:[%s2020 + $0x28] sm:$0xff]
        %v2027 = vld [vmem:[%s2020 + $0x30] sm:$0xff]
        %v2028 = vld [vmem:[%s2020 + $0x38] sm:$0xff]
        %s2029 = scalar_lea.vmem %s8, 2
        %v2030 = vld [vmem:[%s2029] sm:$0x3]
        %v2031 = vpack.c.bf16 %v2019, %v2019
        %v2033 = vlaneseq
        %v2034 = vshrl.u32 %v2033, 7
        %v2035 = vsub.s32 0, %v2034
        %v2036 = vrot.slane %v2030, %v2035
        %v2037 = vlaneseq
        %v2038 = vshrl.u32 %v2037, 7
        %v2039 = vsub.s32 1, %v2038
        %v2040 = vrot.slane %v2030, %v2039
        %v2051 = vunpack.c.l.b16 %v2021
        %v2052 = vunpack.c.h.b16 %v2021
        %v2053 = vunpack.c.l.b16 %v2022
        %v2054 = vunpack.c.h.b16 %v2022
        %v2055 = vunpack.c.l.b16 %v2023
        %v2056 = vunpack.c.h.b16 %v2023
        %v2057 = vunpack.c.l.b16 %v2024
        %v2058 = vunpack.c.h.b16 %v2024
        %v2059 = vunpack.c.l.b16 %v2025
        %v2060 = vunpack.c.h.b16 %v2025
        %v2061 = vunpack.c.l.b16 %v2026
        %v2062 = vunpack.c.h.b16 %v2026
        %v2063 = vunpack.c.l.b16 %v2027
        %v2064 = vunpack.c.h.b16 %v2027
        %v2065 = vunpack.c.l.b16 %v2028
        %v2066 = vunpack.c.h.b16 %v2028
        %v2067 = vpack.c.b16 %v2053, %v2051
        %v2068 = vpack.c.b16 %v2054, %v2052
        %v2069 = vpack.c.b16 %v2057, %v2055
        %v2070 = vpack.c.b16 %v2058, %v2056
        %v2071 = vpack.c.b16 %v2061, %v2059
        %v2072 = vpack.c.b16 %v2062, %v2060
        %v2073 = vpack.c.b16 %v2065, %v2063
        %v2074 = vpack.c.b16 %v2066, %v2064
        %v2084 = vsel %vm783, %v2031, 0
        %2086 = vmatprep.subr.bf16.mxu0 0
        %2087 = vmatpush1.bf16.msra.mxu0 0
        %2088 = vmatprep.subr.bf16.mxu0 0
        %2089 = vmatpush1.bf16.msra.mxu0 0
        %2090 = vmatprep.subr.bf16.mxu0 0
        %2091 = vmatpush1.bf16.msra.mxu0 0
        %2092 = vmatprep.subr.bf16.mxu0 0
        %2093 = vmatpush1.bf16.msra.mxu0 0
        %2094 = vmatprep.subr.bf16.mxu0 %v2074
        %2095 = vmatpush1.bf16.msra.mxu0 %v2073
        %2096 = vmatprep.subr.bf16.mxu0 %v2072
        %2097 = vmatpush1.bf16.msra.mxu0 %v2071
        %2098 = vmatprep.subr.bf16.mxu0 %v2070
        %2099 = vmatpush1.bf16.msra.mxu0 %v2069
        %2100 = vmatprep.subr.bf16.mxu0 %v2068
        %2101 = vmatpush1.bf16.msra.mxu0 %v2067
        %2102 = vmatprep.subr.bf16.mxu0 0
        %2103 = vmatpush2.bf16.msra.mxu0 0
        %2104 = vmatprep.subr.bf16.mxu0 0
        %2105 = vmatpush2.bf16.msra.mxu0 0
        %2106 = vmatprep.subr.bf16.mxu0 0
        %2107 = vmatpush2.bf16.msra.mxu0 0
        %2108 = vmatprep.subr.bf16.mxu0 0
        %2109 = vmatpush2.bf16.msra.mxu0 0
        %2110 = vmatprep.subr.bf16.mxu0 0
        %2111 = vmatpush2.bf16.msra.mxu0 0
        %2112 = vmatprep.subr.bf16.mxu0 0
        %2113 = vmatpush2.bf16.msra.mxu0 0
        %2114 = vmatprep.subr.bf16.mxu0 0
        %2115 = vmatpush2.bf16.msra.mxu0 0
        %2116 = vmatprep.subr.bf16.mxu0 0
        %2117 = vmatpush2.bf16.msra.mxu0 0
        %2118 = vmatprep.mubr.bf16.mxu0 0
        %2119 = vmatmul.mubr.bf16.gmra.mxu0 %v2084
        %v2120 = vpop.f32.mrf.mxu0
        %v2121 = vadd.f32 %v2036, %v2120
        %v2122 = vpop.f32.mrf.mxu0
        %v2123 = vadd.f32 %v2040, %v2122
        %v2124 = vpop.f32.mrf.mxu0
        %v2125 = vpop.f32.mrf.mxu0
        %2126 = vdwg.mxu0
        %v2127 = vmul.f32 %v2121, 0.25
        %v2128 = vpack.c.bf16 %v2127, %v2127
        %v2129 = vpack.c.bf16 %v2121, %v2121
        %v2130 = vpack.c.bf16 %v2123, %v2123
        %s2131 = scalar_lea.vmem %s9, 32
        %v2132 = vld [vmem:[%s2131] sm:$0xf]
        %v2133 = vld [vmem:[%s2131 + $0x4] sm:$0xf]
        %v2134 = vld [vmem:[%s2131 + $0x8] sm:$0xf]
        %v2135 = vld [vmem:[%s2131 + $0xc] sm:$0xf]
        %v2136 = vld [vmem:[%s2131 + $0x10] sm:$0xf]
        %v2137 = vld [vmem:[%s2131 + $0x14] sm:$0xf]
        %v2138 = vld [vmem:[%s2131 + $0x18] sm:$0xf]
        %v2139 = vld [vmem:[%s2131 + $0x1c] sm:$0xf]
        %2141 = vrot.lane.b32.xlu0 %v2129, 64
        %v2142 = vpop.permute.xlu0 %2141
        %v2144 = vsel %vm1007, %v2128, 0
        %v2147 = vsel %vm1007, %v2142, 0
        %2149 = vmatprep.subr.bf16.mxu0 0
        %2150 = vmatpush1.bf16.xpose.msra.mxu0 0
        %2151 = vmatprep.subr.bf16.mxu0 0
        %2152 = vmatpush1.bf16.xpose.msra.mxu0 0
        %2153 = vmatprep.subr.bf16.mxu0 0
        %2154 = vmatpush1.bf16.xpose.msra.mxu0 0
        %2155 = vmatprep.subr.bf16.mxu0 0
        %2156 = vmatpush1.bf16.xpose.msra.mxu0 0
        %2157 = vmatprep.subr.bf16.mxu0 0
        %2158 = vmatpush1.bf16.xpose.msra.mxu0 0
        %2159 = vmatprep.subr.bf16.mxu0 0
        %2160 = vmatpush1.bf16.xpose.msra.mxu0 0
        %2161 = vmatprep.subr.bf16.mxu0 0
        %2162 = vmatpush1.bf16.xpose.msra.mxu0 0
        %2163 = vmatprep.subr.bf16.mxu0 0
        %2164 = vmatpush1.bf16.xpose.msra.mxu0 %v2147
        %2165 = vmatprep.subr.bf16.mxu0 0
        %2166 = vmatpush2.bf16.xpose.msra.mxu0 0
        %2167 = vmatprep.subr.bf16.mxu0 0
        %2168 = vmatpush2.bf16.xpose.msra.mxu0 0
        %2169 = vmatprep.subr.bf16.mxu0 0
        %2170 = vmatpush2.bf16.xpose.msra.mxu0 0
        %2171 = vmatprep.subr.bf16.mxu0 0
        %2172 = vmatpush2.bf16.xpose.msra.mxu0 0
        %2173 = vmatprep.subr.bf16.mxu0 0
        %2174 = vmatpush2.bf16.xpose.msra.mxu0 0
        %2175 = vmatprep.subr.bf16.mxu0 0
        %2176 = vmatpush2.bf16.xpose.msra.mxu0 0
        %2177 = vmatprep.subr.bf16.mxu0 0
        %2178 = vmatpush2.bf16.xpose.msra.mxu0 0
        %2179 = vmatprep.subr.bf16.mxu0 0
        %2180 = vmatpush2.bf16.xpose.msra.mxu0 0
        %2181 = vmatprep.mubr.bf16.mxu0 0
        %2182 = vmatmul.mubr.bf16.gmra.mxu0 %v2144
        %v2183 = vpop.f32.mrf.mxu0
        %v2184 = vadd.f32 0.0, %v2183
        %v2185 = vpop.f32.mrf.mxu0
        %v2186 = vpop.f32.mrf.mxu0
        %v2187 = vpop.f32.mrf.mxu0
        %2188 = vdwg.mxu0
        %v2189 = vsel %vm1054, %v2184, -inf
        %2190 = vmax.xlane.f32.xlu0 %v2189
        %v2191 = vpop.xlane.xlu0 %2190
        %v2192 = vsub.f32 %v2184, %v2191
        %v2193 = vmul.f32 %v2192, 1.442695
        %v2194 = vpow.pop %v2193
        %v2195 = vsel %vm1054, %v2194, 0.0
        %2196 = vadd.xlane.f32.xlu0 %v2195
        %v2197 = vpop.xlane.xlu0 %2196
        %v2198 = vrcp.pop %v2197
        %v2199 = vmul.f32 %v2194, %v2198
        %v2200 = vpack.c.bf16 %v2199, %v2199
        %v2202 = vsel %vm1067, %v2200, 0
        %v2205 = vand.u32 %v2130, %v1074
        %2207 = vmatprep.subr.bf16.mxu0 0
        %2208 = vmatpush1.bf16.msra.mxu0 0
        %2209 = vmatprep.subr.bf16.mxu0 0
        %2210 = vmatpush1.bf16.msra.mxu0 0
        %2211 = vmatprep.subr.bf16.mxu0 0
        %2212 = vmatpush1.bf16.msra.mxu0 0
        %2213 = vmatprep.subr.bf16.mxu0 0
        %2214 = vmatpush1.bf16.msra.mxu0 0
        %2215 = vmatprep.subr.bf16.mxu0 0
        %2216 = vmatpush1.bf16.msra.mxu0 0
        %2217 = vmatprep.subr.bf16.mxu0 0
        %2218 = vmatpush1.bf16.msra.mxu0 0
        %2219 = vmatprep.subr.bf16.mxu0 0
        %2220 = vmatpush1.bf16.msra.mxu0 0
        %2221 = vmatprep.subr.bf16.mxu0 0
        %2222 = vmatpush1.bf16.msra.mxu0 %v2205
        %2223 = vmatprep.subr.bf16.mxu0 0
        %2224 = vmatpush2.bf16.msra.mxu0 0
        %2225 = vmatprep.subr.bf16.mxu0 0
        %2226 = vmatpush2.bf16.msra.mxu0 0
        %2227 = vmatprep.subr.bf16.mxu0 0
        %2228 = vmatpush2.bf16.msra.mxu0 0
        %2229 = vmatprep.subr.bf16.mxu0 0
        %2230 = vmatpush2.bf16.msra.mxu0 0
        %2231 = vmatprep.subr.bf16.mxu0 0
        %2232 = vmatpush2.bf16.msra.mxu0 0
        %2233 = vmatprep.subr.bf16.mxu0 0
        %2234 = vmatpush2.bf16.msra.mxu0 0
        %2235 = vmatprep.subr.bf16.mxu0 0
        %2236 = vmatpush2.bf16.msra.mxu0 0
        %2237 = vmatprep.subr.bf16.mxu0 0
        %2238 = vmatpush2.bf16.msra.mxu0 0
        %2239 = vmatprep.mubr.bf16.mxu0 0
        %2240 = vmatmul.mubr.bf16.gmra.mxu0 %v2202
        %v2241 = vpop.f32.mrf.mxu0
        %v2242 = vadd.f32 0.0, %v2241
        %v2243 = vpop.f32.mrf.mxu0
        %v2244 = vpop.f32.mrf.mxu0
        %v2245 = vpop.f32.mrf.mxu0
        %2246 = vdwg.mxu0
        %v2247 = vpack.c.bf16 %v2242, %v2242
        %2249 = vrot.lane.b32.xlu0 %v2128, 112
        %v2250 = vpop.permute.xlu0 %2249
        %2251 = vrot.lane.b32.xlu0 %v2129, 48
        %v2252 = vpop.permute.xlu0 %2251
        %v2254 = vsel %vm1007, %v2250, 0
        %v2257 = vsel %vm1007, %v2252, 0
        %2259 = vmatprep.subr.bf16.mxu0 0
        %2260 = vmatpush1.bf16.xpose.msra.mxu0 0
        %2261 = vmatprep.subr.bf16.mxu0 0
        %2262 = vmatpush1.bf16.xpose.msra.mxu0 0
        %2263 = vmatprep.subr.bf16.mxu0 0
        %2264 = vmatpush1.bf16.xpose.msra.mxu0 0
        %2265 = vmatprep.subr.bf16.mxu0 0
        %2266 = vmatpush1.bf16.xpose.msra.mxu0 0
        %2267 = vmatprep.subr.bf16.mxu0 0
        %2268 = vmatpush1.bf16.xpose.msra.mxu0 0
        %2269 = vmatprep.subr.bf16.mxu0 0
        %2270 = vmatpush1.bf16.xpose.msra.mxu0 0
        %2271 = vmatprep.subr.bf16.mxu0 0
        %2272 = vmatpush1.bf16.xpose.msra.mxu0 0
        %2273 = vmatprep.subr.bf16.mxu0 0
        %2274 = vmatpush1.bf16.xpose.msra.mxu0 %v2257
        %2275 = vmatprep.subr.bf16.mxu0 0
        %2276 = vmatpush2.bf16.xpose.msra.mxu0 0
        %2277 = vmatprep.subr.bf16.mxu0 0
        %2278 = vmatpush2.bf16.xpose.msra.mxu0 0
        %2279 = vmatprep.subr.bf16.mxu0 0
        %2280 = vmatpush2.bf16.xpose.msra.mxu0 0
        %2281 = vmatprep.subr.bf16.mxu0 0
        %2282 = vmatpush2.bf16.xpose.msra.mxu0 0
        %2283 = vmatprep.subr.bf16.mxu0 0
        %2284 = vmatpush2.bf16.xpose.msra.mxu0 0
        %2285 = vmatprep.subr.bf16.mxu0 0
        %2286 = vmatpush2.bf16.xpose.msra.mxu0 0
        %2287 = vmatprep.subr.bf16.mxu0 0
        %2288 = vmatpush2.bf16.xpose.msra.mxu0 0
        %2289 = vmatprep.subr.bf16.mxu0 0
        %2290 = vmatpush2.bf16.xpose.msra.mxu0 0
        %2291 = vmatprep.mubr.bf16.mxu0 0
        %2292 = vmatmul.mubr.bf16.gmra.mxu0 %v2254
        %v2293 = vpop.f32.mrf.mxu0
        %v2294 = vadd.f32 0.0, %v2293
        %v2295 = vpop.f32.mrf.mxu0
        %v2296 = vpop.f32.mrf.mxu0
        %v2297 = vpop.f32.mrf.mxu0
        %2298 = vdwg.mxu0
        %v2299 = vsel %vm1054, %v2294, -inf
        %2300 = vmax.xlane.f32.xlu0 %v2299
        %v2301 = vpop.xlane.xlu0 %2300
        %v2302 = vsub.f32 %v2294, %v2301
        %v2303 = vmul.f32 %v2302, 1.442695
        %v2304 = vpow.pop %v2303
        %v2305 = vsel %vm1054, %v2304, 0.0
        %2306 = vadd.xlane.f32.xlu0 %v2305
        %v2307 = vpop.xlane.xlu0 %2306
        %v2308 = vrcp.pop %v2307
        %v2309 = vmul.f32 %v2304, %v2308
        %v2310 = vpack.c.bf16 %v2309, %v2309
        %2312 = vrot.lane.b32.xlu0 %v2130, 112
        %v2313 = vpop.permute.xlu0 %2312
        %v2315 = vsel %vm1067, %v2310, 0
        %v2318 = vand.u32 %v2313, %v1074
        %2320 = vmatprep.subr.bf16.mxu0 0
        %2321 = vmatpush1.bf16.msra.mxu0 0
        %2322 = vmatprep.subr.bf16.mxu0 0
        %2323 = vmatpush1.bf16.msra.mxu0 0
        %2324 = vmatprep.subr.bf16.mxu0 0
        %2325 = vmatpush1.bf16.msra.mxu0 0
        %2326 = vmatprep.subr.bf16.mxu0 0
        %2327 = vmatpush1.bf16.msra.mxu0 0
        %2328 = vmatprep.subr.bf16.mxu0 0
        %2329 = vmatpush1.bf16.msra.mxu0 0
        %2330 = vmatprep.subr.bf16.mxu0 0
        %2331 = vmatpush1.bf16.msra.mxu0 0
        %2332 = vmatprep.subr.bf16.mxu0 0
        %2333 = vmatpush1.bf16.msra.mxu0 0
        %2334 = vmatprep.subr.bf16.mxu0 0
        %2335 = vmatpush1.bf16.msra.mxu0 %v2318
        %2336 = vmatprep.subr.bf16.mxu0 0
        %2337 = vmatpush2.bf16.msra.mxu0 0
        %2338 = vmatprep.subr.bf16.mxu0 0
        %2339 = vmatpush2.bf16.msra.mxu0 0
        %2340 = vmatprep.subr.bf16.mxu0 0
        %2341 = vmatpush2.bf16.msra.mxu0 0
        %2342 = vmatprep.subr.bf16.mxu0 0
        %2343 = vmatpush2.bf16.msra.mxu0 0
        %2344 = vmatprep.subr.bf16.mxu0 0
        %2345 = vmatpush2.bf16.msra.mxu0 0
        %2346 = vmatprep.subr.bf16.mxu0 0
        %2347 = vmatpush2.bf16.msra.mxu0 0
        %2348 = vmatprep.subr.bf16.mxu0 0
        %2349 = vmatpush2.bf16.msra.mxu0 0
        %2350 = vmatprep.subr.bf16.mxu0 0
        %2351 = vmatpush2.bf16.msra.mxu0 0
        %2352 = vmatprep.mubr.bf16.mxu0 0
        %2353 = vmatmul.mubr.bf16.gmra.mxu0 %v2315
        %v2354 = vpop.f32.mrf.mxu0
        %v2355 = vadd.f32 0.0, %v2354
        %v2356 = vpop.f32.mrf.mxu0
        %v2357 = vpop.f32.mrf.mxu0
        %v2358 = vpop.f32.mrf.mxu0
        %2359 = vdwg.mxu0
        %v2360 = vpack.c.bf16 %v2355, %v2355
        %v2363 = vunpack.c.l.b16 %v2134
        %v2364 = vunpack.c.l.b16 %v2135
        %v2365 = vpack.c.b16 %v2364, %v2363
        %v2368 = vsel %vm1007, %v2360, 0
        %2370 = vmatprep.subr.bf16.mxu0 0
        %2371 = vmatpush1.bf16.msra.mxu0 0
        %2372 = vmatprep.subr.bf16.mxu0 0
        %2373 = vmatpush1.bf16.msra.mxu0 0
        %2374 = vmatprep.subr.bf16.mxu0 0
        %2375 = vmatpush1.bf16.msra.mxu0 0
        %2376 = vmatprep.subr.bf16.mxu0 0
        %2377 = vmatpush1.bf16.msra.mxu0 0
        %2378 = vmatprep.subr.bf16.mxu0 0
        %2379 = vmatpush1.bf16.msra.mxu0 0
        %2380 = vmatprep.subr.bf16.mxu0 0
        %2381 = vmatpush1.bf16.msra.mxu0 0
        %2382 = vmatprep.subr.bf16.mxu0 0
        %2383 = vmatpush1.bf16.msra.mxu0 0
        %2384 = vmatprep.subr.bf16.mxu0 0
        %2385 = vmatpush1.bf16.msra.mxu0 %v2365
        %2386 = vmatprep.subr.bf16.mxu0 0
        %2387 = vmatpush2.bf16.msra.mxu0 0
        %2388 = vmatprep.subr.bf16.mxu0 0
        %2389 = vmatpush2.bf16.msra.mxu0 0
        %2390 = vmatprep.subr.bf16.mxu0 0
        %2391 = vmatpush2.bf16.msra.mxu0 0
        %2392 = vmatprep.subr.bf16.mxu0 0
        %2393 = vmatpush2.bf16.msra.mxu0 0
        %2394 = vmatprep.subr.bf16.mxu0 0
        %2395 = vmatpush2.bf16.msra.mxu0 0
        %2396 = vmatprep.subr.bf16.mxu0 0
        %2397 = vmatpush2.bf16.msra.mxu0 0
        %2398 = vmatprep.subr.bf16.mxu0 0
        %2399 = vmatpush2.bf16.msra.mxu0 0
        %2400 = vmatprep.subr.bf16.mxu0 0
        %2401 = vmatpush2.bf16.msra.mxu0 0
        %2402 = vmatprep.mubr.bf16.mxu0 0
        %2403 = vmatmul.mubr.bf16.gmra.mxu0 %v2368
        %v2404 = vpop.f32.mrf.mxu0
        %v2405 = vadd.f32 0.0, %v2404
        %v2406 = vpop.f32.mrf.mxu0
        %v2407 = vpop.f32.mrf.mxu0
        %v2408 = vpop.f32.mrf.mxu0
        %2409 = vdwg.mxu0
        %v2412 = vunpack.c.l.b16 %v2132
        %v2413 = vunpack.c.l.b16 %v2133
        %v2414 = vpack.c.b16 %v2413, %v2412
        %v2417 = vsel %vm1007, %v2247, 0
        %2419 = vmatprep.subr.bf16.mxu0 0
        %2420 = vmatpush1.bf16.msra.mxu0 0
        %2421 = vmatprep.subr.bf16.mxu0 0
        %2422 = vmatpush1.bf16.msra.mxu0 0
        %2423 = vmatprep.subr.bf16.mxu0 0
        %2424 = vmatpush1.bf16.msra.mxu0 0
        %2425 = vmatprep.subr.bf16.mxu0 0
        %2426 = vmatpush1.bf16.msra.mxu0 0
        %2427 = vmatprep.subr.bf16.mxu0 0
        %2428 = vmatpush1.bf16.msra.mxu0 0
        %2429 = vmatprep.subr.bf16.mxu0 0
        %2430 = vmatpush1.bf16.msra.mxu0 0
        %2431 = vmatprep.subr.bf16.mxu0 0
        %2432 = vmatpush1.bf16.msra.mxu0 0
        %2433 = vmatprep.subr.bf16.mxu0 0
        %2434 = vmatpush1.bf16.msra.mxu0 %v2414
        %2435 = vmatprep.subr.bf16.mxu0 0
        %2436 = vmatpush2.bf16.msra.mxu0 0
        %2437 = vmatprep.subr.bf16.mxu0 0
        %2438 = vmatpush2.bf16.msra.mxu0 0
        %2439 = vmatprep.subr.bf16.mxu0 0
        %2440 = vmatpush2.bf16.msra.mxu0 0
        %2441 = vmatprep.subr.bf16.mxu0 0
        %2442 = vmatpush2.bf16.msra.mxu0 0
        %2443 = vmatprep.subr.bf16.mxu0 0
        %2444 = vmatpush2.bf16.msra.mxu0 0
        %2445 = vmatprep.subr.bf16.mxu0 0
        %2446 = vmatpush2.bf16.msra.mxu0 0
        %2447 = vmatprep.subr.bf16.mxu0 0
        %2448 = vmatpush2.bf16.msra.mxu0 0
        %2449 = vmatprep.subr.bf16.mxu0 0
        %2450 = vmatpush2.bf16.msra.mxu0 0
        %2451 = vmatprep.mubr.bf16.mxu0 0
        %2452 = vmatmul.mubr.bf16.gmra.mxu0 %v2417
        %v2453 = vpop.f32.mrf.mxu0
        %v2454 = vadd.f32 %v2405, %v2453
        %v2455 = vpop.f32.mrf.mxu0
        %v2456 = vpop.f32.mrf.mxu0
        %v2457 = vpop.f32.mrf.mxu0
        %2458 = vdwg.mxu0
        %2459 = vrot.lane.b32.xlu0 %v2128, 96
        %v2460 = vpop.permute.xlu0 %2459
        %2461 = vrot.lane.b32.xlu0 %v2129, 32
        %v2462 = vpop.permute.xlu0 %2461
        %v2464 = vsel %vm1007, %v2460, 0
        %v2467 = vsel %vm1007, %v2462, 0
        %2469 = vmatprep.subr.bf16.mxu0 0
        %2470 = vmatpush1.bf16.xpose.msra.mxu0 0
        %2471 = vmatprep.subr.bf16.mxu0 0
        %2472 = vmatpush1.bf16.xpose.msra.mxu0 0
        %2473 = vmatprep.subr.bf16.mxu0 0
        %2474 = vmatpush1.bf16.xpose.msra.mxu0 0
        %2475 = vmatprep.subr.bf16.mxu0 0
        %2476 = vmatpush1.bf16.xpose.msra.mxu0 0
        %2477 = vmatprep.subr.bf16.mxu0 0
        %2478 = vmatpush1.bf16.xpose.msra.mxu0 0
        %2479 = vmatprep.subr.bf16.mxu0 0
        %2480 = vmatpush1.bf16.xpose.msra.mxu0 0
        %2481 = vmatprep.subr.bf16.mxu0 0
        %2482 = vmatpush1.bf16.xpose.msra.mxu0 0
        %2483 = vmatprep.subr.bf16.mxu0 0
        %2484 = vmatpush1.bf16.xpose.msra.mxu0 %v2467
        %2485 = vmatprep.subr.bf16.mxu0 0
        %2486 = vmatpush2.bf16.xpose.msra.mxu0 0
        %2487 = vmatprep.subr.bf16.mxu0 0
        %2488 = vmatpush2.bf16.xpose.msra.mxu0 0
        %2489 = vmatprep.subr.bf16.mxu0 0
        %2490 = vmatpush2.bf16.xpose.msra.mxu0 0
        %2491 = vmatprep.subr.bf16.mxu0 0
        %2492 = vmatpush2.bf16.xpose.msra.mxu0 0
        %2493 = vmatprep.subr.bf16.mxu0 0
        %2494 = vmatpush2.bf16.xpose.msra.mxu0 0
        %2495 = vmatprep.subr.bf16.mxu0 0
        %2496 = vmatpush2.bf16.xpose.msra.mxu0 0
        %2497 = vmatprep.subr.bf16.mxu0 0
        %2498 = vmatpush2.bf16.xpose.msra.mxu0 0
        %2499 = vmatprep.subr.bf16.mxu0 0
        %2500 = vmatpush2.bf16.xpose.msra.mxu0 0
        %2501 = vmatprep.mubr.bf16.mxu0 0
        %2502 = vmatmul.mubr.bf16.gmra.mxu0 %v2464
        %v2503 = vpop.f32.mrf.mxu0
        %v2504 = vadd.f32 0.0, %v2503
        %v2505 = vpop.f32.mrf.mxu0
        %v2506 = vpop.f32.mrf.mxu0
        %v2507 = vpop.f32.mrf.mxu0
        %2508 = vdwg.mxu0
        %v2509 = vsel %vm1054, %v2504, -inf
        %2510 = vmax.xlane.f32.xlu0 %v2509
        %v2511 = vpop.xlane.xlu0 %2510
        %v2512 = vsub.f32 %v2504, %v2511
        %v2513 = vmul.f32 %v2512, 1.442695
        %v2514 = vpow.pop %v2513
        %v2515 = vsel %vm1054, %v2514, 0.0
        %2516 = vadd.xlane.f32.xlu0 %v2515
        %v2517 = vpop.xlane.xlu0 %2516
        %v2518 = vrcp.pop %v2517
        %v2519 = vmul.f32 %v2514, %v2518
        %v2520 = vpack.c.bf16 %v2519, %v2519
        %2521 = vrot.lane.b32.xlu0 %v2130, 96
        %v2522 = vpop.permute.xlu0 %2521
        %v2524 = vsel %vm1067, %v2520, 0
        %v2527 = vand.u32 %v2522, %v1074
        %2529 = vmatprep.subr.bf16.mxu0 0
        %2530 = vmatpush1.bf16.msra.mxu0 0
        %2531 = vmatprep.subr.bf16.mxu0 0
        %2532 = vmatpush1.bf16.msra.mxu0 0
        %2533 = vmatprep.subr.bf16.mxu0 0
        %2534 = vmatpush1.bf16.msra.mxu0 0
        %2535 = vmatprep.subr.bf16.mxu0 0
        %2536 = vmatpush1.bf16.msra.mxu0 0
        %2537 = vmatprep.subr.bf16.mxu0 0
        %2538 = vmatpush1.bf16.msra.mxu0 0
        %2539 = vmatprep.subr.bf16.mxu0 0
        %2540 = vmatpush1.bf16.msra.mxu0 0
        %2541 = vmatprep.subr.bf16.mxu0 0
        %2542 = vmatpush1.bf16.msra.mxu0 0
        %2543 = vmatprep.subr.bf16.mxu0 0
        %2544 = vmatpush1.bf16.msra.mxu0 %v2527
        %2545 = vmatprep.subr.bf16.mxu0 0
        %2546 = vmatpush2.bf16.msra.mxu0 0
        %2547 = vmatprep.subr.bf16.mxu0 0
        %2548 = vmatpush2.bf16.msra.mxu0 0
        %2549 = vmatprep.subr.bf16.mxu0 0
        %2550 = vmatpush2.bf16.msra.mxu0 0
        %2551 = vmatprep.subr.bf16.mxu0 0
        %2552 = vmatpush2.bf16.msra.mxu0 0
        %2553 = vmatprep.subr.bf16.mxu0 0
        %2554 = vmatpush2.bf16.msra.mxu0 0
        %2555 = vmatprep.subr.bf16.mxu0 0
        %2556 = vmatpush2.bf16.msra.mxu0 0
        %2557 = vmatprep.subr.bf16.mxu0 0
        %2558 = vmatpush2.bf16.msra.mxu0 0
        %2559 = vmatprep.subr.bf16.mxu0 0
        %2560 = vmatpush2.bf16.msra.mxu0 0
        %2561 = vmatprep.mubr.bf16.mxu0 0
        %2562 = vmatmul.mubr.bf16.gmra.mxu0 %v2524
        %v2563 = vpop.f32.mrf.mxu0
        %v2564 = vadd.f32 0.0, %v2563
        %v2565 = vpop.f32.mrf.mxu0
        %v2566 = vpop.f32.mrf.mxu0
        %v2567 = vpop.f32.mrf.mxu0
        %2568 = vdwg.mxu0
        %v2569 = vpack.c.bf16 %v2564, %v2564
        %v2572 = vunpack.c.l.b16 %v2136
        %v2573 = vunpack.c.l.b16 %v2137
        %v2574 = vpack.c.b16 %v2573, %v2572
        %v2577 = vsel %vm1007, %v2569, 0
        %2579 = vmatprep.subr.bf16.mxu0 0
        %2580 = vmatpush1.bf16.msra.mxu0 0
        %2581 = vmatprep.subr.bf16.mxu0 0
        %2582 = vmatpush1.bf16.msra.mxu0 0
        %2583 = vmatprep.subr.bf16.mxu0 0
        %2584 = vmatpush1.bf16.msra.mxu0 0
        %2585 = vmatprep.subr.bf16.mxu0 0
        %2586 = vmatpush1.bf16.msra.mxu0 0
        %2587 = vmatprep.subr.bf16.mxu0 0
        %2588 = vmatpush1.bf16.msra.mxu0 0
        %2589 = vmatprep.subr.bf16.mxu0 0
        %2590 = vmatpush1.bf16.msra.mxu0 0
        %2591 = vmatprep.subr.bf16.mxu0 0
        %2592 = vmatpush1.bf16.msra.mxu0 0
        %2593 = vmatprep.subr.bf16.mxu0 0
        %2594 = vmatpush1.bf16.msra.mxu0 %v2574
        %2595 = vmatprep.subr.bf16.mxu0 0
        %2596 = vmatpush2.bf16.msra.mxu0 0
        %2597 = vmatprep.subr.bf16.mxu0 0
        %2598 = vmatpush2.bf16.msra.mxu0 0
        %2599 = vmatprep.subr.bf16.mxu0 0
        %2600 = vmatpush2.bf16.msra.mxu0 0
        %2601 = vmatprep.subr.bf16.mxu0 0
        %2602 = vmatpush2.bf16.msra.mxu0 0
        %2603 = vmatprep.subr.bf16.mxu0 0
        %2604 = vmatpush2.bf16.msra.mxu0 0
        %2605 = vmatprep.subr.bf16.mxu0 0
        %2606 = vmatpush2.bf16.msra.mxu0 0
        %2607 = vmatprep.subr.bf16.mxu0 0
        %2608 = vmatpush2.bf16.msra.mxu0 0
        %2609 = vmatprep.subr.bf16.mxu0 0
        %2610 = vmatpush2.bf16.msra.mxu0 0
        %2611 = vmatprep.mubr.bf16.mxu0 0
        %2612 = vmatmul.mubr.bf16.gmra.mxu0 %v2577
        %v2613 = vpop.f32.mrf.mxu0
        %v2614 = vadd.f32 0.0, %v2613
        %v2615 = vpop.f32.mrf.mxu0
        %v2616 = vpop.f32.mrf.mxu0
        %v2617 = vpop.f32.mrf.mxu0
        %2618 = vdwg.mxu0
        %v2619 = vadd.f32 %v2454, %v2614
        %2620 = vrot.lane.b32.xlu0 %v2128, 80
        %v2621 = vpop.permute.xlu0 %2620
        %2622 = vrot.lane.b32.xlu0 %v2129, 16
        %v2623 = vpop.permute.xlu0 %2622
        %v2625 = vsel %vm1007, %v2621, 0
        %v2628 = vsel %vm1007, %v2623, 0
        %2630 = vmatprep.subr.bf16.mxu0 0
        %2631 = vmatpush1.bf16.xpose.msra.mxu0 0
        %2632 = vmatprep.subr.bf16.mxu0 0
        %2633 = vmatpush1.bf16.xpose.msra.mxu0 0
        %2634 = vmatprep.subr.bf16.mxu0 0
        %2635 = vmatpush1.bf16.xpose.msra.mxu0 0
        %2636 = vmatprep.subr.bf16.mxu0 0
        %2637 = vmatpush1.bf16.xpose.msra.mxu0 0
        %2638 = vmatprep.subr.bf16.mxu0 0
        %2639 = vmatpush1.bf16.xpose.msra.mxu0 0
        %2640 = vmatprep.subr.bf16.mxu0 0
        %2641 = vmatpush1.bf16.xpose.msra.mxu0 0
        %2642 = vmatprep.subr.bf16.mxu0 0
        %2643 = vmatpush1.bf16.xpose.msra.mxu0 0
        %2644 = vmatprep.subr.bf16.mxu0 0
        %2645 = vmatpush1.bf16.xpose.msra.mxu0 %v2628
        %2646 = vmatprep.subr.bf16.mxu0 0
        %2647 = vmatpush2.bf16.xpose.msra.mxu0 0
        %2648 = vmatprep.subr.bf16.mxu0 0
        %2649 = vmatpush2.bf16.xpose.msra.mxu0 0
        %2650 = vmatprep.subr.bf16.mxu0 0
        %2651 = vmatpush2.bf16.xpose.msra.mxu0 0
        %2652 = vmatprep.subr.bf16.mxu0 0
        %2653 = vmatpush2.bf16.xpose.msra.mxu0 0
        %2654 = vmatprep.subr.bf16.mxu0 0
        %2655 = vmatpush2.bf16.xpose.msra.mxu0 0
        %2656 = vmatprep.subr.bf16.mxu0 0
        %2657 = vmatpush2.bf16.xpose.msra.mxu0 0
        %2658 = vmatprep.subr.bf16.mxu0 0
        %2659 = vmatpush2.bf16.xpose.msra.mxu0 0
        %2660 = vmatprep.subr.bf16.mxu0 0
        %2661 = vmatpush2.bf16.xpose.msra.mxu0 0
        %2662 = vmatprep.mubr.bf16.mxu0 0
        %2663 = vmatmul.mubr.bf16.gmra.mxu0 %v2625
        %v2664 = vpop.f32.mrf.mxu0
        %v2665 = vadd.f32 0.0, %v2664
        %v2666 = vpop.f32.mrf.mxu0
        %v2667 = vpop.f32.mrf.mxu0
        %v2668 = vpop.f32.mrf.mxu0
        %2669 = vdwg.mxu0
        %v2670 = vsel %vm1054, %v2665, -inf
        %2671 = vmax.xlane.f32.xlu0 %v2670
        %v2672 = vpop.xlane.xlu0 %2671
        %v2673 = vsub.f32 %v2665, %v2672
        %v2674 = vmul.f32 %v2673, 1.442695
        %v2675 = vpow.pop %v2674
        %v2676 = vsel %vm1054, %v2675, 0.0
        %2677 = vadd.xlane.f32.xlu0 %v2676
        %v2678 = vpop.xlane.xlu0 %2677
        %v2679 = vrcp.pop %v2678
        %v2680 = vmul.f32 %v2675, %v2679
        %v2681 = vpack.c.bf16 %v2680, %v2680
        %2682 = vrot.lane.b32.xlu0 %v2130, 80
        %v2683 = vpop.permute.xlu0 %2682
        %v2685 = vsel %vm1067, %v2681, 0
        %v2688 = vand.u32 %v2683, %v1074
        %2690 = vmatprep.subr.bf16.mxu0 0
        %2691 = vmatpush1.bf16.msra.mxu0 0
        %2692 = vmatprep.subr.bf16.mxu0 0
        %2693 = vmatpush1.bf16.msra.mxu0 0
        %2694 = vmatprep.subr.bf16.mxu0 0
        %2695 = vmatpush1.bf16.msra.mxu0 0
        %2696 = vmatprep.subr.bf16.mxu0 0
        %2697 = vmatpush1.bf16.msra.mxu0 0
        %2698 = vmatprep.subr.bf16.mxu0 0
        %2699 = vmatpush1.bf16.msra.mxu0 0
        %2700 = vmatprep.subr.bf16.mxu0 0
        %2701 = vmatpush1.bf16.msra.mxu0 0
        %2702 = vmatprep.subr.bf16.mxu0 0
        %2703 = vmatpush1.bf16.msra.mxu0 0
        %2704 = vmatprep.subr.bf16.mxu0 0
        %2705 = vmatpush1.bf16.msra.mxu0 %v2688
        %2706 = vmatprep.subr.bf16.mxu0 0
        %2707 = vmatpush2.bf16.msra.mxu0 0
        %2708 = vmatprep.subr.bf16.mxu0 0
        %2709 = vmatpush2.bf16.msra.mxu0 0
        %2710 = vmatprep.subr.bf16.mxu0 0
        %2711 = vmatpush2.bf16.msra.mxu0 0
        %2712 = vmatprep.subr.bf16.mxu0 0
        %2713 = vmatpush2.bf16.msra.mxu0 0
        %2714 = vmatprep.subr.bf16.mxu0 0
        %2715 = vmatpush2.bf16.msra.mxu0 0
        %2716 = vmatprep.subr.bf16.mxu0 0
        %2717 = vmatpush2.bf16.msra.mxu0 0
        %2718 = vmatprep.subr.bf16.mxu0 0
        %2719 = vmatpush2.bf16.msra.mxu0 0
        %2720 = vmatprep.subr.bf16.mxu0 0
        %2721 = vmatpush2.bf16.msra.mxu0 0
        %2722 = vmatprep.mubr.bf16.mxu0 0
        %2723 = vmatmul.mubr.bf16.gmra.mxu0 %v2685
        %v2724 = vpop.f32.mrf.mxu0
        %v2725 = vadd.f32 0.0, %v2724
        %v2726 = vpop.f32.mrf.mxu0
        %v2727 = vpop.f32.mrf.mxu0
        %v2728 = vpop.f32.mrf.mxu0
        %2729 = vdwg.mxu0
        %v2730 = vpack.c.bf16 %v2725, %v2725
        %v2733 = vunpack.c.l.b16 %v2138
        %v2734 = vunpack.c.l.b16 %v2139
        %v2735 = vpack.c.b16 %v2734, %v2733
        %v2738 = vsel %vm1007, %v2730, 0
        %2740 = vmatprep.subr.bf16.mxu0 0
        %2741 = vmatpush1.bf16.msra.mxu0 0
        %2742 = vmatprep.subr.bf16.mxu0 0
        %2743 = vmatpush1.bf16.msra.mxu0 0
        %2744 = vmatprep.subr.bf16.mxu0 0
        %2745 = vmatpush1.bf16.msra.mxu0 0
        %2746 = vmatprep.subr.bf16.mxu0 0
        %2747 = vmatpush1.bf16.msra.mxu0 0
        %2748 = vmatprep.subr.bf16.mxu0 0
        %2749 = vmatpush1.bf16.msra.mxu0 0
        %2750 = vmatprep.subr.bf16.mxu0 0
        %2751 = vmatpush1.bf16.msra.mxu0 0
        %2752 = vmatprep.subr.bf16.mxu0 0
        %2753 = vmatpush1.bf16.msra.mxu0 0
        %2754 = vmatprep.subr.bf16.mxu0 0
        %2755 = vmatpush1.bf16.msra.mxu0 %v2735
        %2756 = vmatprep.subr.bf16.mxu0 0
        %2757 = vmatpush2.bf16.msra.mxu0 0
        %2758 = vmatprep.subr.bf16.mxu0 0
        %2759 = vmatpush2.bf16.msra.mxu0 0
        %2760 = vmatprep.subr.bf16.mxu0 0
        %2761 = vmatpush2.bf16.msra.mxu0 0
        %2762 = vmatprep.subr.bf16.mxu0 0
        %2763 = vmatpush2.bf16.msra.mxu0 0
        %2764 = vmatprep.subr.bf16.mxu0 0
        %2765 = vmatpush2.bf16.msra.mxu0 0
        %2766 = vmatprep.subr.bf16.mxu0 0
        %2767 = vmatpush2.bf16.msra.mxu0 0
        %2768 = vmatprep.subr.bf16.mxu0 0
        %2769 = vmatpush2.bf16.msra.mxu0 0
        %2770 = vmatprep.subr.bf16.mxu0 0
        %2771 = vmatpush2.bf16.msra.mxu0 0
        %2772 = vmatprep.mubr.bf16.mxu0 0
        %2773 = vmatmul.mubr.bf16.gmra.mxu0 %v2738
        %v2774 = vpop.f32.mrf.mxu0
        %v2775 = vadd.f32 0.0, %v2774
        %v2776 = vpop.f32.mrf.mxu0
        %v2777 = vpop.f32.mrf.mxu0
        %v2778 = vpop.f32.mrf.mxu0
        %2779 = vdwg.mxu0
        %v2780 = vadd.f32 %v2619, %v2775
        %v2781 = vadd.f32 %v1988, %v2780
        %s2782 = scalar_lea.vmem %s10, 1
        %v2783 = vld [vmem:[%s2782] sm:$0x1]
        %v2785 = vlaneseq
        %v2786 = vshrl.u32 %v2785, 7
        %v2787 = vsub.s32 0, %v2786
        %v2788 = vrot.slane %v2783, %v2787
        %v2790 = vadd.f32 %v2781, %v2788
        %s2791 = scalar_lea.vmem %s11, 1
        %v2792 = vld [vmem:[%s2791] sm:$0x1]
        %s2793 = scalar_lea.vmem %s12, 1
        %v2794 = vld [vmem:[%s2793] sm:$0x1]
        %v2795 = vsel %vm829, %v2790, 0.0
        %2796 = vadd.xlane.f32.xlu0 %v2795
        %v2797 = vpop.xlane.xlu0 %2796
        %v2798 = vmul.f32 %v2797, %v833
        %v2799 = vsub.f32 %v2790, %v2798
        %v2800 = vmul.f32 %v2799, %v2799
        %v2801 = vsel %vm829, %v2800, 0.0
        %2802 = vadd.xlane.f32.xlu0 %v2801
        %v2803 = vpop.xlane.xlu0 %2802
        %v2804 = vmul.f32 %v2803, %v833
        %v2805 = vadd.f32 %v2804, 1e-05
        %v2806 = vrsqrt.pop %v2805
        %v2807 = vmul.f32 %v2799, %v2806
        %v2809 = vlaneseq
        %v2810 = vshrl.u32 %v2809, 7
        %v2811 = vsub.s32 0, %v2810
        %v2812 = vrot.slane %v2792, %v2811
        %v2814 = vmul.f32 %v2807, %v2812
        %v2816 = vlaneseq
        %v2817 = vshrl.u32 %v2816, 7
        %v2818 = vsub.s32 0, %v2817
        %v2819 = vrot.slane %v2794, %v2818
        %v2821 = vadd.f32 %v2814, %v2819
        %s2822 = scalar_lea.vmem %s13, 64
        %v2823 = vld [vmem:[%s2822] sm:$0xff]
        %v2824 = vld [vmem:[%s2822 + $0x8] sm:$0xff]
        %v2825 = vld [vmem:[%s2822 + $0x10] sm:$0xff]
        %v2826 = vld [vmem:[%s2822 + $0x18] sm:$0xff]
        %v2827 = vld [vmem:[%s2822 + $0x20] sm:$0xff]
        %v2828 = vld [vmem:[%s2822 + $0x28] sm:$0xff]
        %v2829 = vld [vmem:[%s2822 + $0x30] sm:$0xff]
        %v2830 = vld [vmem:[%s2822 + $0x38] sm:$0xff]
        %s2831 = scalar_lea.vmem %s14, 2
        %v2832 = vld [vmem:[%s2831] sm:$0x3]
        %v2833 = vpack.c.bf16 %v2821, %v2821
        %v2835 = vlaneseq
        %v2836 = vshrl.u32 %v2835, 7
        %v2837 = vsub.s32 0, %v2836
        %v2838 = vrot.slane %v2832, %v2837
        %v2839 = vlaneseq
        %v2840 = vshrl.u32 %v2839, 7
        %v2841 = vsub.s32 1, %v2840
        %v2842 = vrot.slane %v2832, %v2841
        %v2853 = vunpack.c.l.b16 %v2823
        %v2854 = vunpack.c.h.b16 %v2823
        %v2855 = vunpack.c.l.b16 %v2824
        %v2856 = vunpack.c.h.b16 %v2824
        %v2857 = vunpack.c.l.b16 %v2825
        %v2858 = vunpack.c.h.b16 %v2825
        %v2859 = vunpack.c.l.b16 %v2826
        %v2860 = vunpack.c.h.b16 %v2826
        %v2861 = vunpack.c.l.b16 %v2827
        %v2862 = vunpack.c.h.b16 %v2827
        %v2863 = vunpack.c.l.b16 %v2828
        %v2864 = vunpack.c.h.b16 %v2828
        %v2865 = vunpack.c.l.b16 %v2829
        %v2866 = vunpack.c.h.b16 %v2829
        %v2867 = vunpack.c.l.b16 %v2830
        %v2868 = vunpack.c.h.b16 %v2830
        %v2869 = vpack.c.b16 %v2855, %v2853
        %v2870 = vpack.c.b16 %v2856, %v2854
        %v2871 = vpack.c.b16 %v2859, %v2857
        %v2872 = vpack.c.b16 %v2860, %v2858
        %v2873 = vpack.c.b16 %v2863, %v2861
        %v2874 = vpack.c.b16 %v2864, %v2862
        %v2875 = vpack.c.b16 %v2867, %v2865
        %v2876 = vpack.c.b16 %v2868, %v2866
        %v2886 = vsel %vm783, %v2833, 0
        %2888 = vmatprep.subr.bf16.mxu0 0
        %2889 = vmatpush1.bf16.msra.mxu0 0
        %2890 = vmatprep.subr.bf16.mxu0 0
        %2891 = vmatpush1.bf16.msra.mxu0 0
        %2892 = vmatprep.subr.bf16.mxu0 0
        %2893 = vmatpush1.bf16.msra.mxu0 0
        %2894 = vmatprep.subr.bf16.mxu0 0
        %2895 = vmatpush1.bf16.msra.mxu0 0
        %2896 = vmatprep.subr.bf16.mxu0 %v2876
        %2897 = vmatpush1.bf16.msra.mxu0 %v2875
        %2898 = vmatprep.subr.bf16.mxu0 %v2874
        %2899 = vmatpush1.bf16.msra.mxu0 %v2873
        %2900 = vmatprep.subr.bf16.mxu0 %v2872
        %2901 = vmatpush1.bf16.msra.mxu0 %v2871
        %2902 = vmatprep.subr.bf16.mxu0 %v2870
        %2903 = vmatpush1.bf16.msra.mxu0 %v2869
        %2904 = vmatprep.subr.bf16.mxu0 0
        %2905 = vmatpush2.bf16.msra.mxu0 0
        %2906 = vmatprep.subr.bf16.mxu0 0
        %2907 = vmatpush2.bf16.msra.mxu0 0
        %2908 = vmatprep.subr.bf16.mxu0 0
        %2909 = vmatpush2.bf16.msra.mxu0 0
        %2910 = vmatprep.subr.bf16.mxu0 0
        %2911 = vmatpush2.bf16.msra.mxu0 0
        %2912 = vmatprep.subr.bf16.mxu0 0
        %2913 = vmatpush2.bf16.msra.mxu0 0
        %2914 = vmatprep.subr.bf16.mxu0 0
        %2915 = vmatpush2.bf16.msra.mxu0 0
        %2916 = vmatprep.subr.bf16.mxu0 0
        %2917 = vmatpush2.bf16.msra.mxu0 0
        %2918 = vmatprep.subr.bf16.mxu0 0
        %2919 = vmatpush2.bf16.msra.mxu0 0
        %2920 = vmatprep.mubr.bf16.mxu0 0
        %2921 = vmatmul.mubr.bf16.gmra.mxu0 %v2886
        %v2922 = vpop.f32.mrf.mxu0
        %v2923 = vadd.f32 %v2838, %v2922
        %v2924 = vpop.f32.mrf.mxu0
        %v2925 = vadd.f32 %v2842, %v2924
        %v2926 = vpop.f32.mrf.mxu0
        %v2927 = vpop.f32.mrf.mxu0
        %2928 = vdwg.mxu0
        %v2929 = vmul.f32 %v2923, 1.702
        %v2930 = vmul.f32 %v2925, 1.702
        %v2931 = vxor.u32 %v2929, 2147483648
        %v2932 = vxor.u32 %v2930, 2147483648
        %v2933 = vmul.f32 %v2931, 1.442695
        %v2934 = vpow.pop %v2933
        %v2935 = vmul.f32 %v2932, 1.442695
        %v2936 = vpow.pop %v2935
        %v2937 = vadd.f32 %v2934, 1.0
        %v2938 = vadd.f32 %v2936, 1.0
        %v2939 = vrcp.pop %v2937
        %v2940 = vmul.f32 1.0, %v2939
        %v2941 = vrcp.pop %v2938
        %v2942 = vmul.f32 1.0, %v2941
        %v2943 = vmul.f32 %v2923, %v2940
        %v2944 = vmul.f32 %v2925, %v2942
        %s2945 = scalar_lea.vmem %s15, 128
        %v2946 = vld [vmem:[%s2945] sm:$0xf]
        %v2947 = vld [vmem:[%s2945 + $0x4] sm:$0xf]
        %v2948 = vld [vmem:[%s2945 + $0x8] sm:$0xf]
        %v2949 = vld [vmem:[%s2945 + $0xc] sm:$0xf]
        %v2950 = vld [vmem:[%s2945 + $0x10] sm:$0xf]
        %v2951 = vld [vmem:[%s2945 + $0x14] sm:$0xf]
        %v2952 = vld [vmem:[%s2945 + $0x18] sm:$0xf]
        %v2953 = vld [vmem:[%s2945 + $0x1c] sm:$0xf]
        %v2954 = vld [vmem:[%s2945 + $0x20] sm:$0xf]
        %v2955 = vld [vmem:[%s2945 + $0x24] sm:$0xf]
        %v2956 = vld [vmem:[%s2945 + $0x28] sm:$0xf]
        %v2957 = vld [vmem:[%s2945 + $0x2c] sm:$0xf]
        %v2958 = vld [vmem:[%s2945 + $0x30] sm:$0xf]
        %v2959 = vld [vmem:[%s2945 + $0x34] sm:$0xf]
        %v2960 = vld [vmem:[%s2945 + $0x38] sm:$0xf]
        %v2961 = vld [vmem:[%s2945 + $0x3c] sm:$0xf]
        %v2962 = vld [vmem:[%s2945 + $0x40] sm:$0xf]
        %v2963 = vld [vmem:[%s2945 + $0x44] sm:$0xf]
        %v2964 = vld [vmem:[%s2945 + $0x48] sm:$0xf]
        %v2965 = vld [vmem:[%s2945 + $0x4c] sm:$0xf]
        %v2966 = vld [vmem:[%s2945 + $0x50] sm:$0xf]
        %v2967 = vld [vmem:[%s2945 + $0x54] sm:$0xf]
        %v2968 = vld [vmem:[%s2945 + $0x58] sm:$0xf]
        %v2969 = vld [vmem:[%s2945 + $0x5c] sm:$0xf]
        %v2970 = vld [vmem:[%s2945 + $0x60] sm:$0xf]
        %v2971 = vld [vmem:[%s2945 + $0x64] sm:$0xf]
        %v2972 = vld [vmem:[%s2945 + $0x68] sm:$0xf]
        %v2973 = vld [vmem:[%s2945 + $0x6c] sm:$0xf]
        %v2974 = vld [vmem:[%s2945 + $0x70] sm:$0xf]
        %v2975 = vld [vmem:[%s2945 + $0x74] sm:$0xf]
        %v2976 = vld [vmem:[%s2945 + $0x78] sm:$0xf]
        %v2977 = vld [vmem:[%s2945 + $0x7c] sm:$0xf]
        %s2978 = scalar_lea.vmem %s16, 1
        %v2979 = vld [vmem:[%s2978] sm:$0x1]
        %v2980 = vpack.c.bf16 %v2943, %v2943
        %v2981 = vpack.c.bf16 %v2944, %v2944
        %v2983 = vlaneseq
        %v2984 = vshrl.u32 %v2983, 7
        %v2985 = vsub.s32 0, %v2984
        %v2986 = vrot.slane %v2979, %v2985
        %v3020 = vunpack.c.l.b16 %v2946
        %v3021 = vunpack.c.l.b16 %v2947
        %v3022 = vunpack.c.l.b16 %v2948
        %v3023 = vunpack.c.l.b16 %v2949
        %v3024 = vunpack.c.l.b16 %v2950
        %v3025 = vunpack.c.l.b16 %v2951
        %v3026 = vunpack.c.l.b16 %v2952
        %v3027 = vunpack.c.l.b16 %v2953
        %v3028 = vunpack.c.l.b16 %v2954
        %v3029 = vunpack.c.l.b16 %v2955
        %v3030 = vunpack.c.l.b16 %v2956
        %v3031 = vunpack.c.l.b16 %v2957
        %v3032 = vunpack.c.l.b16 %v2958
        %v3033 = vunpack.c.l.b16 %v2959
        %v3034 = vunpack.c.l.b16 %v2960
        %v3035 = vunpack.c.l.b16 %v2961
        %v3036 = vunpack.c.l.b16 %v2962
        %v3037 = vunpack.c.l.b16 %v2963
        %v3038 = vunpack.c.l.b16 %v2964
        %v3039 = vunpack.c.l.b16 %v2965
        %v3040 = vunpack.c.l.b16 %v2966
        %v3041 = vunpack.c.l.b16 %v2967
        %v3042 = vunpack.c.l.b16 %v2968
        %v3043 = vunpack.c.l.b16 %v2969
        %v3044 = vunpack.c.l.b16 %v2970
        %v3045 = vunpack.c.l.b16 %v2971
        %v3046 = vunpack.c.l.b16 %v2972
        %v3047 = vunpack.c.l.b16 %v2973
        %v3048 = vunpack.c.l.b16 %v2974
        %v3049 = vunpack.c.l.b16 %v2975
        %v3050 = vunpack.c.l.b16 %v2976
        %v3051 = vunpack.c.l.b16 %v2977
        %v3052 = vpack.c.b16 %v3021, %v3020
        %v3053 = vpack.c.b16 %v3023, %v3022
        %v3054 = vpack.c.b16 %v3025, %v3024
        %v3055 = vpack.c.b16 %v3027, %v3026
        %v3056 = vpack.c.b16 %v3029, %v3028
        %v3057 = vpack.c.b16 %v3031, %v3030
        %v3058 = vpack.c.b16 %v3033, %v3032
        %v3059 = vpack.c.b16 %v3035, %v3034
        %v3060 = vpack.c.b16 %v3037, %v3036
        %v3061 = vpack.c.b16 %v3039, %v3038
        %v3062 = vpack.c.b16 %v3041, %v3040
        %v3063 = vpack.c.b16 %v3043, %v3042
        %v3064 = vpack.c.b16 %v3045, %v3044
        %v3065 = vpack.c.b16 %v3047, %v3046
        %v3066 = vpack.c.b16 %v3049, %v3048
        %v3067 = vpack.c.b16 %v3051, %v3050
        %3084 = vmatprep.subr.bf16.mxu0 0
        %3085 = vmatpush1.bf16.msra.mxu0 %v3059
        %3086 = vmatprep.subr.bf16.mxu0 0
        %3087 = vmatpush1.bf16.msra.mxu0 %v3058
        %3088 = vmatprep.subr.bf16.mxu0 0
        %3089 = vmatpush1.bf16.msra.mxu0 %v3057
        %3090 = vmatprep.subr.bf16.mxu0 0
        %3091 = vmatpush1.bf16.msra.mxu0 %v3056
        %3092 = vmatprep.subr.bf16.mxu0 0
        %3093 = vmatpush1.bf16.msra.mxu0 %v3055
        %3094 = vmatprep.subr.bf16.mxu0 0
        %3095 = vmatpush1.bf16.msra.mxu0 %v3054
        %3096 = vmatprep.subr.bf16.mxu0 0
        %3097 = vmatpush1.bf16.msra.mxu0 %v3053
        %3098 = vmatprep.subr.bf16.mxu0 0
        %3099 = vmatpush1.bf16.msra.mxu0 %v3052
        %3100 = vmatprep.subr.bf16.mxu0 0
        %3101 = vmatpush2.bf16.msra.mxu0 %v3067
        %3102 = vmatprep.subr.bf16.mxu0 0
        %3103 = vmatpush2.bf16.msra.mxu0 %v3066
        %3104 = vmatprep.subr.bf16.mxu0 0
        %3105 = vmatpush2.bf16.msra.mxu0 %v3065
        %3106 = vmatprep.subr.bf16.mxu0 0
        %3107 = vmatpush2.bf16.msra.mxu0 %v3064
        %3108 = vmatprep.subr.bf16.mxu0 0
        %3109 = vmatpush2.bf16.msra.mxu0 %v3063
        %3110 = vmatprep.subr.bf16.mxu0 0
        %3111 = vmatpush2.bf16.msra.mxu0 %v3062
        %3112 = vmatprep.subr.bf16.mxu0 0
        %3113 = vmatpush2.bf16.msra.mxu0 %v3061
        %3114 = vmatprep.subr.bf16.mxu0 0
        %3115 = vmatpush2.bf16.msra.mxu0 %v3060
        %3116 = vmatprep.mubr.bf16.mxu0 %v2981
        %3117 = vmatmul.mubr.bf16.gmra.mxu0 %v2980
        %v3118 = vpop.f32.mrf.mxu0
        %v3119 = vadd.f32 %v2986, %v3118
        %v3120 = vpop.f32.mrf.mxu0
        %v3121 = vpop.f32.mrf.mxu0
        %v3122 = vpop.f32.mrf.mxu0
        %3123 = vdwg.mxu0
        %v3124 = vadd.f32 %v2790, %v3119
        %v3125 = vld [vmem:[%s17] sm:$0x1]
        %v3126 = vld [vmem:[%s18] sm:$0x1]
        %vm3127 = vcmask 516096
        %v3128 = vsel %vm3127, %v3124, 0.0
        %3129 = vadd.xlane.f32.xlu0 %v3128
        %v3130 = vpop.xlane.xlu0 %3129
        %v3131 = vmul.f32 %v3130, %v833
        %v3132 = vsub.f32 %v3124, %v3131
        %v3133 = vmul.f32 %v3132, %v3132
        %v3134 = vsel %vm3127, %v3133, 0.0
        %3135 = vadd.xlane.f32.xlu0 %v3134
        %v3136 = vpop.xlane.xlu0 %3135
        %v3137 = vmul.f32 %v3136, %v833
        %v3138 = vadd.f32 %v3137, 1e-05
        %v3139 = vrsqrt.pop %v3138
        %v3140 = vmul.f32 %v3132, %v3139
        %v3141 = vmul.f32 %v3140, %v3125
        %v3142 = vadd.f32 %v3141, %v3126
        %v3143 = vld [vmem:[%s19] sm:$0xff]
        %v3144 = vld [vmem:[%s19 + $0x8] sm:$0xff]
        %v3145 = vld [vmem:[%s19 + $0x10] sm:$0xff]
        %v3146 = vld [vmem:[%s19 + $0x18] sm:$0xff]
        %v3147 = vld [vmem:[%s19 + $0x20] sm:$0xff]
        %v3148 = vld [vmem:[%s19 + $0x28] sm:$0xff]
        %v3149 = vld [vmem:[%s19 + $0x30] sm:$0xff]
        %v3150 = vld [vmem:[%s19 + $0x38] sm:$0xff]
        %v3151 = vld [vmem:[%s19 + $0x40] sm:$0xff]
        %v3152 = vld [vmem:[%s19 + $0x48] sm:$0xff]
        %v3153 = vld [vmem:[%s19 + $0x50] sm:$0xff]
        %v3154 = vld [vmem:[%s19 + $0x58] sm:$0xff]
        %v3155 = vld [vmem:[%s19 + $0x60] sm:$0xff]
        %v3156 = vld [vmem:[%s19 + $0x68] sm:$0xff]
        %v3157 = vld [vmem:[%s19 + $0x70] sm:$0xff]
        %v3158 = vld [vmem:[%s19 + $0x78] sm:$0xff]
        %v3159 = vpack.c.bf16 %v3142, %v3142
        %v3176 = vunpack.c.l.b16 %v3143
        %v3177 = vunpack.c.h.b16 %v3143
        %v3178 = vunpack.c.l.b16 %v3144
        %v3179 = vunpack.c.h.b16 %v3144
        %v3180 = vunpack.c.l.b16 %v3145
        %v3181 = vunpack.c.h.b16 %v3145
        %v3182 = vunpack.c.l.b16 %v3146
        %v3183 = vunpack.c.h.b16 %v3146
        %v3184 = vunpack.c.l.b16 %v3147
        %v3185 = vunpack.c.h.b16 %v3147
        %v3186 = vunpack.c.l.b16 %v3148
        %v3187 = vunpack.c.h.b16 %v3148
        %v3188 = vunpack.c.l.b16 %v3149
        %v3189 = vunpack.c.h.b16 %v3149
        %v3190 = vunpack.c.l.b16 %v3150
        %v3191 = vunpack.c.h.b16 %v3150
        %v3192 = vunpack.c.l.b16 %v3151
        %v3193 = vunpack.c.h.b16 %v3151
        %v3194 = vunpack.c.l.b16 %v3152
        %v3195 = vunpack.c.h.b16 %v3152
        %v3196 = vunpack.c.l.b16 %v3153
        %v3197 = vunpack.c.h.b16 %v3153
        %v3198 = vunpack.c.l.b16 %v3154
        %v3199 = vunpack.c.h.b16 %v3154
        %v3200 = vunpack.c.l.b16 %v3155
        %v3201 = vunpack.c.h.b16 %v3155
        %v3202 = vunpack.c.l.b16 %v3156
        %v3203 = vunpack.c.h.b16 %v3156
        %v3204 = vunpack.c.l.b16 %v3157
        %v3205 = vunpack.c.h.b16 %v3157
        %v3206 = vunpack.c.l.b16 %v3158
        %v3207 = vunpack.c.h.b16 %v3158
        %v3208 = vpack.c.b16 %v3180, %v3176
        %v3209 = vpack.c.b16 %v3181, %v3177
        %v3210 = vpack.c.b16 %v3182, %v3178
        %v3211 = vpack.c.b16 %v3183, %v3179
        %v3212 = vpack.c.b16 %v3188, %v3184
        %v3213 = vpack.c.b16 %v3189, %v3185
        %v3214 = vpack.c.b16 %v3190, %v3186
        %v3215 = vpack.c.b16 %v3191, %v3187
        %v3216 = vpack.c.b16 %v3196, %v3192
        %v3217 = vpack.c.b16 %v3197, %v3193
        %v3218 = vpack.c.b16 %v3198, %v3194
        %v3219 = vpack.c.b16 %v3199, %v3195
        %v3220 = vpack.c.b16 %v3204, %v3200
        %v3221 = vpack.c.b16 %v3205, %v3201
        %v3222 = vpack.c.b16 %v3206, %v3202
        %v3223 = vpack.c.b16 %v3207, %v3203
        %v3241 = vsel %vm783, %v3159, 0
        %3243 = vmatprep.subr.bf16.mxu0 0
        %3244 = vmatpush1.bf16.msra.mxu0 0
        %3245 = vmatprep.subr.bf16.mxu0 0
        %3246 = vmatpush1.bf16.msra.mxu0 0
        %3247 = vmatprep.subr.bf16.mxu0 0
        %3248 = vmatpush1.bf16.msra.mxu0 0
        %3249 = vmatprep.subr.bf16.mxu0 0
        %3250 = vmatpush1.bf16.msra.mxu0 0
        %3251 = vmatprep.subr.bf16.mxu0 %v3221
        %3252 = vmatpush1.bf16.msra.mxu0 %v3220
        %3253 = vmatprep.subr.bf16.mxu0 %v3217
        %3254 = vmatpush1.bf16.msra.mxu0 %v3216
        %3255 = vmatprep.subr.bf16.mxu0 %v3213
        %3256 = vmatpush1.bf16.msra.mxu0 %v3212
        %3257 = vmatprep.subr.bf16.mxu0 %v3209
        %3258 = vmatpush1.bf16.msra.mxu0 %v3208
        %3259 = vmatprep.subr.bf16.mxu0 0
        %3260 = vmatpush2.bf16.msra.mxu0 0
        %3261 = vmatprep.subr.bf16.mxu0 0
        %3262 = vmatpush2.bf16.msra.mxu0 0
        %3263 = vmatprep.subr.bf16.mxu0 0
        %3264 = vmatpush2.bf16.msra.mxu0 0
        %3265 = vmatprep.subr.bf16.mxu0 0
        %3266 = vmatpush2.bf16.msra.mxu0 0
        %3267 = vmatprep.subr.bf16.mxu0 0
        %3268 = vmatpush2.bf16.msra.mxu0 0
        %3269 = vmatprep.subr.bf16.mxu0 0
        %3270 = vmatpush2.bf16.msra.mxu0 0
        %3271 = vmatprep.subr.bf16.mxu0 0
        %3272 = vmatpush2.bf16.msra.mxu0 0
        %3273 = vmatprep.subr.bf16.mxu0 0
        %3274 = vmatpush2.bf16.msra.mxu0 0
        %3275 = vmatprep.mubr.bf16.mxu0 0
        %3276 = vmatmul.mubr.bf16.gmra.mxu0 %v3241
        %v3277 = vpop.f32.mrf.mxu0
        %v3278 = vadd.f32 0.0, %v3277
        %v3279 = vpop.f32.mrf.mxu0
        %v3280 = vadd.f32 0.0, %v3279
        %v3281 = vpop.f32.mrf.mxu0
        %v3282 = vpop.f32.mrf.mxu0
        %3283 = vdwg.mxu0
        %3284 = vmatprep.subr.bf16.mxu0 0
        %3285 = vmatpush1.bf16.msra.mxu0 0
        %3286 = vmatprep.subr.bf16.mxu0 0
        %3287 = vmatpush1.bf16.msra.mxu0 0
        %3288 = vmatprep.subr.bf16.mxu0 0
        %3289 = vmatpush1.bf16.msra.mxu0 0
        %3290 = vmatprep.subr.bf16.mxu0 0
        %3291 = vmatpush1.bf16.msra.mxu0 0
        %3292 = vmatprep.subr.bf16.mxu0 %v3223
        %3293 = vmatpush1.bf16.msra.mxu0 %v3222
        %3294 = vmatprep.subr.bf16.mxu0 %v3219
        %3295 = vmatpush1.bf16.msra.mxu0 %v3218
        %3296 = vmatprep.subr.bf16.mxu0 %v3215
        %3297 = vmatpush1.bf16.msra.mxu0 %v3214
        %3298 = vmatprep.subr.bf16.mxu0 %v3211
        %3299 = vmatpush1.bf16.msra.mxu0 %v3210
        %3300 = vmatprep.subr.bf16.mxu0 0
        %3301 = vmatpush2.bf16.msra.mxu0 0
        %3302 = vmatprep.subr.bf16.mxu0 0
        %3303 = vmatpush2.bf16.msra.mxu0 0
        %3304 = vmatprep.subr.bf16.mxu0 0
        %3305 = vmatpush2.bf16.msra.mxu0 0
        %3306 = vmatprep.subr.bf16.mxu0 0
        %3307 = vmatpush2.bf16.msra.mxu0 0
        %3308 = vmatprep.subr.bf16.mxu0 0
        %3309 = vmatpush2.bf16.msra.mxu0 0
        %3310 = vmatprep.subr.bf16.mxu0 0
        %3311 = vmatpush2.bf16.msra.mxu0 0
        %3312 = vmatprep.subr.bf16.mxu0 0
        %3313 = vmatpush2.bf16.msra.mxu0 0
        %3314 = vmatprep.subr.bf16.mxu0 0
        %3315 = vmatpush2.bf16.msra.mxu0 0
        %3316 = vmatprep.mubr.bf16.mxu0 0
        %3317 = vmatmul.mubr.bf16.gmra.mxu0 %v3241
        %v3318 = vpop.f32.mrf.mxu0
        %v3319 = vadd.f32 0.0, %v3318
        %v3320 = vpop.f32.mrf.mxu0
        %v3321 = vadd.f32 0.0, %v3320
        %v3322 = vpop.f32.mrf.mxu0
        %v3323 = vpop.f32.mrf.mxu0
        %3324 = vdwg.mxu0
        %v3325 = vld [vmem:[%s20] sm:$0xf]
        %v3326 = vld [vmem:[%s20 + $0x4] sm:$0xf]
        %v3327 = vld [vmem:[%s20 + $0x8] sm:$0xf]
        %v3328 = vld [vmem:[%s20 + $0xc] sm:$0xf]
        %v3329 = vld [vmem:[%s20 + $0x10] sm:$0xf]
        %v3330 = vld [vmem:[%s20 + $0x14] sm:$0xf]
        %v3331 = vld [vmem:[%s20 + $0x18] sm:$0xf]
        %v3332 = vld [vmem:[%s20 + $0x1c] sm:$0xf]
        %v3333 = vld [vmem:[%s20 + $0x20] sm:$0xf]
        %v3334 = vld [vmem:[%s20 + $0x24] sm:$0xf]
        %v3335 = vld [vmem:[%s20 + $0x28] sm:$0xf]
        %v3336 = vld [vmem:[%s20 + $0x2c] sm:$0xf]
        %v3337 = vld [vmem:[%s20 + $0x30] sm:$0xf]
        %v3338 = vld [vmem:[%s20 + $0x34] sm:$0xf]
        %v3339 = vld [vmem:[%s20 + $0x38] sm:$0xf]
        %v3340 = vld [vmem:[%s20 + $0x3c] sm:$0xf]
        %v3341 = vld [vmem:[%s20 + $0x40] sm:$0xf]
        %v3342 = vld [vmem:[%s20 + $0x44] sm:$0xf]
        %v3343 = vld [vmem:[%s20 + $0x48] sm:$0xf]
        %v3344 = vld [vmem:[%s20 + $0x4c] sm:$0xf]
        %v3345 = vld [vmem:[%s20 + $0x50] sm:$0xf]
        %v3346 = vld [vmem:[%s20 + $0x54] sm:$0xf]
        %v3347 = vld [vmem:[%s20 + $0x58] sm:$0xf]
        %v3348 = vld [vmem:[%s20 + $0x5c] sm:$0xf]
        %v3349 = vld [vmem:[%s20 + $0x60] sm:$0xf]
        %v3350 = vld [vmem:[%s20 + $0x64] sm:$0xf]
        %v3351 = vld [vmem:[%s20 + $0x68] sm:$0xf]
        %v3352 = vld [vmem:[%s20 + $0x6c] sm:$0xf]
        %v3353 = vld [vmem:[%s20 + $0x70] sm:$0xf]
        %v3354 = vld [vmem:[%s20 + $0x74] sm:$0xf]
        %v3355 = vld [vmem:[%s20 + $0x78] sm:$0xf]
        %v3356 = vld [vmem:[%s20 + $0x7c] sm:$0xf]
        %v3357 = vld [vmem:[%s20 + $0x80] sm:$0xf]
        %v3358 = vld [vmem:[%s20 + $0x84] sm:$0xf]
        %v3359 = vld [vmem:[%s20 + $0x88] sm:$0xf]
        %v3360 = vld [vmem:[%s20 + $0x8c] sm:$0xf]
        %v3361 = vld [vmem:[%s20 + $0x90] sm:$0xf]
        %v3362 = vld [vmem:[%s20 + $0x94] sm:$0xf]
        %v3363 = vld [vmem:[%s20 + $0x98] sm:$0xf]
        %v3364 = vld [vmem:[%s20 + $0x9c] sm:$0xf]
        %v3365 = vld [vmem:[%s20 + $0xa0] sm:$0xf]
        %v3366 = vld [vmem:[%s20 + $0xa4] sm:$0xf]
        %v3367 = vld [vmem:[%s20 + $0xa8] sm:$0xf]
        %v3368 = vld [vmem:[%s20 + $0xac] sm:$0xf]
        %v3369 = vld [vmem:[%s20 + $0xb0] sm:$0xf]
        %v3370 = vld [vmem:[%s20 + $0xb4] sm:$0xf]
        %v3371 = vld [vmem:[%s20 + $0xb8] sm:$0xf]
        %v3372 = vld [vmem:[%s20 + $0xbc] sm:$0xf]
        %v3373 = vld [vmem:[%s20 + $0xc0] sm:$0xf]
        %v3374 = vld [vmem:[%s20 + $0xc4] sm:$0xf]
        %v3375 = vld [vmem:[%s20 + $0xc8] sm:$0xf]
        %v3376 = vld [vmem:[%s20 + $0xcc] sm:$0xf]
        %v3377 = vld [vmem:[%s20 + $0xd0] sm:$0xf]
        %v3378 = vld [vmem:[%s20 + $0xd4] sm:$0xf]
        %v3379 = vld [vmem:[%s20 + $0xd8] sm:$0xf]
        %v3380 = vld [vmem:[%s20 + $0xdc] sm:$0xf]
        %v3381 = vld [vmem:[%s20 + $0xe0] sm:$0xf]
        %v3382 = vld [vmem:[%s20 + $0xe4] sm:$0xf]
        %v3383 = vld [vmem:[%s20 + $0xe8] sm:$0xf]
        %v3384 = vld [vmem:[%s20 + $0xec] sm:$0xf]
        %v3385 = vld [vmem:[%s20 + $0xf0] sm:$0xf]
        %v3386 = vld [vmem:[%s20 + $0xf4] sm:$0xf]
        %v3387 = vld [vmem:[%s20 + $0xf8] sm:$0xf]
        %v3388 = vld [vmem:[%s20 + $0xfc] sm:$0xf]
        %v3389 = vld [vmem:[%s21] sm:$0x1]
        %v3390 = vpack.c.bf16 %v3278, %v3278
        %v3391 = vpack.c.bf16 %v3280, %v3280
        %v3392 = vpack.c.bf16 %v3319, %v3319
        %v3393 = vpack.c.bf16 %v3321, %v3321
        %v3458 = vunpack.c.l.b16 %v3325
        %v3459 = vunpack.c.l.b16 %v3326
        %v3460 = vunpack.c.l.b16 %v3327
        %v3461 = vunpack.c.l.b16 %v3328
        %v3462 = vunpack.c.l.b16 %v3329
        %v3463 = vunpack.c.l.b16 %v3330
        %v3464 = vunpack.c.l.b16 %v3331
        %v3465 = vunpack.c.l.b16 %v3332
        %v3466 = vunpack.c.l.b16 %v3333
        %v3467 = vunpack.c.l.b16 %v3334
        %v3468 = vunpack.c.l.b16 %v3335
        %v3469 = vunpack.c.l.b16 %v3336
        %v3470 = vunpack.c.l.b16 %v3337
        %v3471 = vunpack.c.l.b16 %v3338
        %v3472 = vunpack.c.l.b16 %v3339
        %v3473 = vunpack.c.l.b16 %v3340
        %v3474 = vunpack.c.l.b16 %v3341
        %v3475 = vunpack.c.l.b16 %v3342
        %v3476 = vunpack.c.l.b16 %v3343
        %v3477 = vunpack.c.l.b16 %v3344
        %v3478 = vunpack.c.l.b16 %v3345
        %v3479 = vunpack.c.l.b16 %v3346
        %v3480 = vunpack.c.l.b16 %v3347
        %v3481 = vunpack.c.l.b16 %v3348
        %v3482 = vunpack.c.l.b16 %v3349
        %v3483 = vunpack.c.l.b16 %v3350
        %v3484 = vunpack.c.l.b16 %v3351
        %v3485 = vunpack.c.l.b16 %v3352
        %v3486 = vunpack.c.l.b16 %v3353
        %v3487 = vunpack.c.l.b16 %v3354
        %v3488 = vunpack.c.l.b16 %v3355
        %v3489 = vunpack.c.l.b16 %v3356
        %v3490 = vunpack.c.l.b16 %v3357
        %v3491 = vunpack.c.l.b16 %v3358
        %v3492 = vunpack.c.l.b16 %v3359
        %v3493 = vunpack.c.l.b16 %v3360
        %v3494 = vunpack.c.l.b16 %v3361
        %v3495 = vunpack.c.l.b16 %v3362
        %v3496 = vunpack.c.l.b16 %v3363
        %v3497 = vunpack.c.l.b16 %v3364
        %v3498 = vunpack.c.l.b16 %v3365
        %v3499 = vunpack.c.l.b16 %v3366
        %v3500 = vunpack.c.l.b16 %v3367
        %v3501 = vunpack.c.l.b16 %v3368
        %v3502 = vunpack.c.l.b16 %v3369
        %v3503 = vunpack.c.l.b16 %v3370
        %v3504 = vunpack.c.l.b16 %v3371
        %v3505 = vunpack.c.l.b16 %v3372
        %v3506 = vunpack.c.l.b16 %v3373
        %v3507 = vunpack.c.l.b16 %v3374
        %v3508 = vunpack.c.l.b16 %v3375
        %v3509 = vunpack.c.l.b16 %v3376
        %v3510 = vunpack.c.l.b16 %v3377
        %v3511 = vunpack.c.l.b16 %v3378
        %v3512 = vunpack.c.l.b16 %v3379
        %v3513 = vunpack.c.l.b16 %v3380
        %v3514 = vunpack.c.l.b16 %v3381
        %v3515 = vunpack.c.l.b16 %v3382
        %v3516 = vunpack.c.l.b16 %v3383
        %v3517 = vunpack.c.l.b16 %v3384
        %v3518 = vunpack.c.l.b16 %v3385
        %v3519 = vunpack.c.l.b16 %v3386
        %v3520 = vunpack.c.l.b16 %v3387
        %v3521 = vunpack.c.l.b16 %v3388
        %v3522 = vpack.c.b16 %v3459, %v3458
        %v3523 = vpack.c.b16 %v3461, %v3460
        %v3524 = vpack.c.b16 %v3463, %v3462
        %v3525 = vpack.c.b16 %v3465, %v3464
        %v3526 = vpack.c.b16 %v3467, %v3466
        %v3527 = vpack.c.b16 %v3469, %v3468
        %v3528 = vpack.c.b16 %v3471, %v3470
        %v3529 = vpack.c.b16 %v3473, %v3472
        %v3530 = vpack.c.b16 %v3475, %v3474
        %v3531 = vpack.c.b16 %v3477, %v3476
        %v3532 = vpack.c.b16 %v3479, %v3478
        %v3533 = vpack.c.b16 %v3481, %v3480
        %v3534 = vpack.c.b16 %v3483, %v3482
        %v3535 = vpack.c.b16 %v3485, %v3484
        %v3536 = vpack.c.b16 %v3487, %v3486
        %v3537 = vpack.c.b16 %v3489, %v3488
        %v3538 = vpack.c.b16 %v3491, %v3490
        %v3539 = vpack.c.b16 %v3493, %v3492
        %v3540 = vpack.c.b16 %v3495, %v3494
        %v3541 = vpack.c.b16 %v3497, %v3496
        %v3542 = vpack.c.b16 %v3499, %v3498
        %v3543 = vpack.c.b16 %v3501, %v3500
        %v3544 = vpack.c.b16 %v3503, %v3502
        %v3545 = vpack.c.b16 %v3505, %v3504
        %v3546 = vpack.c.b16 %v3507, %v3506
        %v3547 = vpack.c.b16 %v3509, %v3508
        %v3548 = vpack.c.b16 %v3511, %v3510
        %v3549 = vpack.c.b16 %v3513, %v3512
        %v3550 = vpack.c.b16 %v3515, %v3514
        %v3551 = vpack.c.b16 %v3517, %v3516
        %v3552 = vpack.c.b16 %v3519, %v3518
        %v3553 = vpack.c.b16 %v3521, %v3520
        %3586 = vmatprep.subr.bf16.mxu0 0
        %3587 = vmatpush1.bf16.msra.mxu0 %v3529
        %3588 = vmatprep.subr.bf16.mxu0 0
        %3589 = vmatpush1.bf16.msra.mxu0 %v3528
        %3590 = vmatprep.subr.bf16.mxu0 0
        %3591 = vmatpush1.bf16.msra.mxu0 %v3527
        %3592 = vmatprep.subr.bf16.mxu0 0
        %3593 = vmatpush1.bf16.msra.mxu0 %v3526
        %3594 = vmatprep.subr.bf16.mxu0 0
        %3595 = vmatpush1.bf16.msra.mxu0 %v3525
        %3596 = vmatprep.subr.bf16.mxu0 0
        %3597 = vmatpush1.bf16.msra.mxu0 %v3524
        %3598 = vmatprep.subr.bf16.mxu0 0
        %3599 = vmatpush1.bf16.msra.mxu0 %v3523
        %3600 = vmatprep.subr.bf16.mxu0 0
        %3601 = vmatpush1.bf16.msra.mxu0 %v3522
        %3602 = vmatprep.subr.bf16.mxu0 0
        %3603 = vmatpush2.bf16.msra.mxu0 %v3537
        %3604 = vmatprep.subr.bf16.mxu0 0
        %3605 = vmatpush2.bf16.msra.mxu0 %v3536
        %3606 = vmatprep.subr.bf16.mxu0 0
        %3607 = vmatpush2.bf16.msra.mxu0 %v3535
        %3608 = vmatprep.subr.bf16.mxu0 0
        %3609 = vmatpush2.bf16.msra.mxu0 %v3534
        %3610 = vmatprep.subr.bf16.mxu0 0
        %3611 = vmatpush2.bf16.msra.mxu0 %v3533
        %3612 = vmatprep.subr.bf16.mxu0 0
        %3613 = vmatpush2.bf16.msra.mxu0 %v3532
        %3614 = vmatprep.subr.bf16.mxu0 0
        %3615 = vmatpush2.bf16.msra.mxu0 %v3531
        %3616 = vmatprep.subr.bf16.mxu0 0
        %3617 = vmatpush2.bf16.msra.mxu0 %v3530
        %3618 = vmatprep.mubr.bf16.mxu0 %v3391
        %3619 = vmatmul.mubr.bf16.gmra.mxu0 %v3390
        %v3620 = vpop.f32.mrf.mxu0
        %v3621 = vadd.f32 %v3389, %v3620
        %v3622 = vpop.f32.mrf.mxu0
        %v3623 = vpop.f32.mrf.mxu0
        %v3624 = vpop.f32.mrf.mxu0
        %3625 = vdwg.mxu0
        %3626 = vmatprep.subr.bf16.mxu0 0
        %3627 = vmatpush1.bf16.msra.mxu0 %v3545
        %3628 = vmatprep.subr.bf16.mxu0 0
        %3629 = vmatpush1.bf16.msra.mxu0 %v3544
        %3630 = vmatprep.subr.bf16.mxu0 0
        %3631 = vmatpush1.bf16.msra.mxu0 %v3543
        %3632 = vmatprep.subr.bf16.mxu0 0
        %3633 = vmatpush1.bf16.msra.mxu0 %v3542
        %3634 = vmatprep.subr.bf16.mxu0 0
        %3635 = vmatpush1.bf16.msra.mxu0 %v3541
        %3636 = vmatprep.subr.bf16.mxu0 0
        %3637 = vmatpush1.bf16.msra.mxu0 %v3540
        %3638 = vmatprep.subr.bf16.mxu0 0
        %3639 = vmatpush1.bf16.msra.mxu0 %v3539
        %3640 = vmatprep.subr.bf16.mxu0 0
        %3641 = vmatpush1.bf16.msra.mxu0 %v3538
        %3642 = vmatprep.subr.bf16.mxu0 0
        %3643 = vmatpush2.bf16.msra.mxu0 %v3553
        %3644 = vmatprep.subr.bf16.mxu0 0
        %3645 = vmatpush2.bf16.msra.mxu0 %v3552
        %3646 = vmatprep.subr.bf16.mxu0 0
        %3647 = vmatpush2.bf16.msra.mxu0 %v3551
        %3648 = vmatprep.subr.bf16.mxu0 0
        %3649 = vmatpush2.bf16.msra.mxu0 %v3550
        %3650 = vmatprep.subr.bf16.mxu0 0
        %3651 = vmatpush2.bf16.msra.mxu0 %v3549
        %3652 = vmatprep.subr.bf16.mxu0 0
        %3653 = vmatpush2.bf16.msra.mxu0 %v3548
        %3654 = vmatprep.subr.bf16.mxu0 0
        %3655 = vmatpush2.bf16.msra.mxu0 %v3547
        %3656 = vmatprep.subr.bf16.mxu0 0
        %3657 = vmatpush2.bf16.msra.mxu0 %v3546
        %3658 = vmatprep.mubr.bf16.mxu0 %v3393
        %3659 = vmatmul.mubr.bf16.gmra.mxu0 %v3392
        %v3660 = vpop.f32.mrf.mxu0
        %v3661 = vadd.f32 %v3621, %v3660
        %v3662 = vpop.f32.mrf.mxu0
        %v3663 = vpop.f32.mrf.mxu0
        %v3664 = vpop.f32.mrf.mxu0
        %3665 = vdwg.mxu0
        %vm3666 = vcmask 73728
        %3667 = vst.msk [vmem:[%s675] sm:$0x1] %vm3666, %v3661
        %s3668 = sand.u32 %s511, 1
        %s3669 = scalar_lea.sflag [#allocation3], %s3668
        %s3670 = sand.u32 %s511, 1
        %s3671 = scalar_lea.vmem [#allocation2], %s3670
        // Predicated region
        $region109: #{clip_adapter_forward.1} parent=107 // pred_check
          %p3672 = pneg %p521
        $region110: #{clip_adapter_forward.1} parent=107 // pred_check_branch
          %3674 = sbr.rel (%p3672) target = $region112
        $region111: #{clip_adapter_forward.1} parent=107 // pred_region
          %s3676 = ssub.s32 16, 16
          %3677 = vsyncadd %s3669, %s3676
          %s3678 = smul.addr %s36, 16
          %s3679 = scalar_lea.hbm %s22, %s3678
          %s3681 = sshll.u32 %s3671, 4
          %s3682 = int_to_ptr.vmem [resolvable:$true] %s3681
          %3684 = dma.vmem_to_hbm [thread:$0]  %s3682, 16, %s3679, %s3669
        $region112: #{clip_adapter_forward.1} parent=107 // pred_fallthru
          _
      $region108: #{clip_adapter_forward.1} parent=5 // pred_fallthru
        _
      %p3685 = scmp.le.s32.totalorder 2, %s31
      // Predicated region
      $region113: #{clip_adapter_forward.1} parent=5 // pred_check
        %p3686 = pneg %p3685
      $region114: #{clip_adapter_forward.1} parent=5 // pred_check_branch
        %3688 = sbr.rel (%p3686) target = $region116
      $region115: #{clip_adapter_forward.1} parent=5 // pred_region
        %s3689 = ssub.s32 %s31, 2
        // Predicated region
        $region117: #{clip_adapter_forward.1} parent=115 // pred_check
          %p3690 = pneg %p527
        $region118: #{clip_adapter_forward.1} parent=115 // pred_check_branch
          %3692 = sbr.rel (%p3690) target = $region120
        $region119: #{clip_adapter_forward.1} parent=115 // pred_region
          %s3693 = sand.u32 %s512, 1
          %s3694 = scalar_lea.sflag [#allocation3], %s3693
          %s3695 = sand.u32 %s512, 1
          %s3696 = scalar_lea.vmem [#allocation2], %s3695
          %3697 = dma.done %s3694, 16
        $region120: #{clip_adapter_forward.1} parent=115 // pred_fallthru
          _
      $region116: #{clip_adapter_forward.1} parent=5 // pred_fallthru
        _
    $region6: #{clip_adapter_forward.1} parent=1 // loop_footer
      %s35 = sadd.s32 1, %s31
    $region7: #{clip_adapter_forward.1} parent=1 // loop_footer_branch
      %30 = sbr.rel target = $region3
    $region8: #{clip_adapter_forward.1} parent=1 // loop_exit
      _
    %3698 = vsyncpa [#allocation3], 1
    %s3699 = scalar_lea.sflag [#allocation3], 1
    %3700 = vsyncpa %s3699, 1

</llo_original>
